<compile_context>
chip_gen: v7x
topology: tpu7x:2x2x1
jax: 0.10.0
libtpu: 0.0.40
codegen_flags: <defaults>
</compile_context>

<pallas_src>
import functools

import jax
import jax.numpy as jnp
from jax.experimental import pallas as pl
from jax.experimental.pallas import tpu as pltpu


def _gelu_tanh(x):
    # TODO(synk): PyTorch nn.GELU defaults to the exact erf form; the tanh
    # approximation (max abs diff ~1e-3) is used here for a Mosaic-safe lowering.
    c = 0.7978845608028654  # sqrt(2/pi)
    return 0.5 * x * (1.0 + jnp.tanh(c * (x + 0.044715 * (x * x * x))))


def _resblock_kernel(x_ref, w1_ref, b1_ref, w2_ref, b2_ref, w3_ref, b3_ref,
                     mask_ref, o_ref, act_ref, *, C, Np, Wp, margin):
    # x_ref   : (C, Next)  one padded+margined image, channels x flat spatial
    # w*_ref  : (9, C, C)  conv taps, w[t][co, ci] with t = ky*3 + kx
    # b*_ref  : (C, 1)     conv bias (per output channel)
    # mask_ref: (1, Np)    1.0 at interior pixels of the padded grid, 0.0 on the ring
    # o_ref   : (C, Np)    output on the padded grid (ring zeroed)
    # act_ref : (C, Next)  VMEM scratch: re-padded activation between convs
    mask = mask_ref[...]

    def conv3x3(src_ref, w_ref):
        # 3x3 "same" conv = 9 shifted contiguous windows x (C, C) tap matmuls (MXU).
        acc = jnp.zeros((C, Np), jnp.float32)
        for ky in range(3):
            for kx in range(3):
                off = margin + (ky - 1) * Wp + (kx - 1)
                win = src_ref[:, off:off + Np]                       # (C, Np)
                acc = acc + jnp.dot(w_ref[ky * 3 + kx], win,
                                    preferred_element_type=jnp.float32)
        return acc

    # conv1 -> bias -> GELU; zero the halo so the result can feed the next conv.
    h = _gelu_tanh(conv3x3(x_ref, w1_ref) + b1_ref[...]) * mask
    act_ref[...] = jnp.zeros_like(act_ref)
    act_ref[:, margin:margin + Np] = h

    # trans_layer: conv -> bias (no activation).
    h = (conv3x3(act_ref, w2_ref) + b2_ref[...]) * mask
    act_ref[:, margin:margin + Np] = h

    # conv2: conv -> bias, with the residual add fused into the final store.
    h = conv3x3(act_ref, w3_ref) + b3_ref[...]
    o_ref[...] = (h + x_ref[:, margin:margin + Np]) * mask


def resblock_conv_forward(x, w1, b1, w2, b2, w3, b3):
    """ResBlock_Conv forward pass.

    x : (B, C, H, W) float32, NCHW (PyTorch layout)
    w*: (C, C, 3, 3) float32, PyTorch Conv2d weight layout (out, in, kh, kw)
    b*: (C,) float32
    """
    B, C, H, W = x.shape
    Cp = ((C + 7) // 8) * 8            # pad channels to the 8-sublane granule
    Hp, Wp = H + 2, W + 2
    Np = Hp * Wp                       # flattened padded spatial size (lane dim)
    margin = Wp + 1                    # makes every 3x3 tap a contiguous lane slice
    Next = Np + 2 * margin

    f32 = jnp.float32

    # (B, C, H, W) -> pad channels + spatial ring -> flatten spatial -> add margin.
    xp = jnp.pad(x.astype(f32), ((0, 0), (0, Cp - C), (1, 1), (1, 1)))
    x_ext = jnp.pad(xp.reshape(B, Cp, Np), ((0, 0), (0, 0), (margin, margin)))

    # Interior mask over the flattened padded grid.
    mask = jnp.pad(jnp.ones((H, W), f32), ((1, 1), (1, 1))).reshape(1, Np)

    def prep_w(w):  # (Co, Ci, 3, 3) -> (9, Cp, Cp), tap index t = ky*3 + kx
        wt = jnp.transpose(w.astype(f32), (2, 3, 0, 1)).reshape(9, C, C)
        return jnp.pad(wt, ((0, 0), (0, Cp - C), (0, Cp - C)))

    def prep_b(b):  # (C,) -> (Cp, 1)
        return jnp.pad(b.astype(f32), (0, Cp - C)).reshape(Cp, 1)

    w1e, w2e, w3e = prep_w(w1), prep_w(w2), prep_w(w3)
    b1e, b2e, b3e = prep_b(b1), prep_b(b2), prep_b(b3)

    kernel = functools.partial(_resblock_kernel, C=Cp, Np=Np, Wp=Wp, margin=margin)

    cost = pl.CostEstimate(
        flops=3 * B * 2 * 9 * Cp * Cp * Np,     # three 3x3 convs
        transcendentals=B * Cp * Np,            # tanh inside GELU
        bytes_accessed=4 * (x_ext.size + B * Cp * Np + 3 * 9 * Cp * Cp + 3 * Cp + Np),
    )

    out_flat = pl.pallas_call(
        kernel,
        out_shape=jax.ShapeDtypeStruct((B, Cp, Np), f32),
        grid_spec=pltpu.PrefetchScalarGridSpec(
            num_scalar_prefetch=0,
            grid=(B,),
            in_specs=[
                pl.BlockSpec((None, Cp, Next), lambda b: (b, 0, 0)),  # one image
                pl.BlockSpec((9, Cp, Cp), lambda b: (0, 0, 0)),       # conv1 W (resident)
                pl.BlockSpec((Cp, 1), lambda b: (0, 0)),              # conv1 b
                pl.BlockSpec((9, Cp, Cp), lambda b: (0, 0, 0)),       # trans_layer W
                pl.BlockSpec((Cp, 1), lambda b: (0, 0)),              # trans_layer b
                pl.BlockSpec((9, Cp, Cp), lambda b: (0, 0, 0)),       # conv2 W
                pl.BlockSpec((Cp, 1), lambda b: (0, 0)),              # conv2 b
                pl.BlockSpec((1, Np), lambda b: (0, 0)),              # interior mask
            ],
            out_specs=pl.BlockSpec((None, Cp, Np), lambda b: (b, 0, 0)),
            scratch_shapes=[pltpu.VMEM((Cp, Next), f32)],
        ),
        compiler_params=pltpu.CompilerParams(
            dimension_semantics=("parallel",)),
        cost_estimate=cost,
    )(x_ext, w1e, b1e, w2e, b2e, w3e, b3e, mask)

    # Drop channel padding and the spatial ring: (B, Cp, Np) -> (B, C, H, W).
    return out_flat.reshape(B, Cp, Hp, Wp)[:, :C, 1:1 + H, 1:1 + W]


if __name__ == "__main__":
    B, C, H, W = 2, 4, 16, 16
    key = jax.random.PRNGKey(0)
    kx, k1, k2, k3, k4, k5, k6 = jax.random.split(key, 7)

    x = jax.random.normal(kx, (B, C, H, W), dtype=jnp.float32)
    w1 = jax.random.normal(k1, (C, C, 3, 3), jnp.float32) * 0.1
    b1 = jax.random.normal(k2, (C,), jnp.float32) * 0.1
    w2 = jax.random.normal(k3, (C, C, 3, 3), jnp.float32) * 0.1
    b2 = jax.random.normal(k4, (C,), jnp.float32) * 0.1
    w3 = jax.random.normal(k5, (C, C, 3, 3), jnp.float32) * 0.1
    b3 = jax.random.normal(k6, (C,), jnp.float32) * 0.1

    y = jax.block_until_ready(resblock_conv_forward(x, w1, b1, w2, b2, w3, b3))

    # Pure-JAX reference (lax conv with the same NCHW / OIHW layouts as Conv2d).
    def conv(a, w, b):
        out = jax.lax.conv_general_dilated(
            a, w, window_strides=(1, 1), padding=((1, 1), (1, 1)),
            dimension_numbers=("NCHW", "OIHW", "NCHW"))
        return out + b[None, :, None, None]

    h = _gelu_tanh(conv(x, w1, b1))   # conv1 (BasicConv relu=True -> GELU)
    h = conv(h, w2, b2)               # trans_layer (no activation)
    h = conv(h, w3, b3)               # conv2 (no activation)
    y_ref = h + x                     # residual

    assert y.shape == (B, C, H, W)
    # Tolerance covers MXU default-precision accumulation differences between the
    # kernel's 9-tap matmuls and XLA's conv primitive.
    assert jnp.allclose(y, y_ref, atol=5e-3, rtol=5e-3), "mismatch vs reference"
    print("KERNEL_OK")
</pallas_src>

<mosaic_0001>
module attributes {stable_mosaic.version = 11 : i64} {
  func.func @_resblock_kernel(%arg0: i32, %arg1: memref<1x8x362xf32, #tpu.memory_space<vmem>>, %arg2: memref<9x8x8xf32, #tpu.memory_space<vmem>>, %arg3: memref<8x1xf32, #tpu.memory_space<vmem>>, %arg4: memref<9x8x8xf32, #tpu.memory_space<vmem>>, %arg5: memref<8x1xf32, #tpu.memory_space<vmem>>, %arg6: memref<9x8x8xf32, #tpu.memory_space<vmem>>, %arg7: memref<8x1xf32, #tpu.memory_space<vmem>>, %arg8: memref<1x324xf32, #tpu.memory_space<vmem>>, %arg9: memref<1x8x324xf32, #tpu.memory_space<vmem>>, %arg10: memref<8x362xf32, #tpu.memory_space<vmem>>) attributes {dimension_semantics = [#tpu.dimension_semantics<parallel>], iteration_bounds = array<i64: 2>, scalar_prefetch = 0 : i64, scratch_operands = 1 : i64, tpu.core_type = #tpu.core_type<tc>, window_params = [{transform_indices = @transform_0, window_bounds = array<i64: 1, 8, 362>}, {pipeline_mode = #tpu.pipeline_mode<synchronous>, transform_indices = @transform_1, window_bounds = array<i64: 9, 8, 8>}, {pipeline_mode = #tpu.pipeline_mode<synchronous>, transform_indices = @transform_2, window_bounds = array<i64: 8, 1>}, {pipeline_mode = #tpu.pipeline_mode<synchronous>, transform_indices = @transform_3, window_bounds = array<i64: 9, 8, 8>}, {pipeline_mode = #tpu.pipeline_mode<synchronous>, transform_indices = @transform_4, window_bounds = array<i64: 8, 1>}, {pipeline_mode = #tpu.pipeline_mode<synchronous>, transform_indices = @transform_5, window_bounds = array<i64: 9, 8, 8>}, {pipeline_mode = #tpu.pipeline_mode<synchronous>, transform_indices = @transform_6, window_bounds = array<i64: 8, 1>}, {pipeline_mode = #tpu.pipeline_mode<synchronous>, transform_indices = @transform_7, window_bounds = array<i64: 1, 324>}, {transform_indices = @transform_8, window_bounds = array<i64: 1, 8, 324>}]} {
    %c0 = arith.constant 0 : index
    %c0_0 = arith.constant 0 : index
    %0 = vector.load %arg8[%c0, %c0_0] : memref<1x324xf32, #tpu.memory_space<vmem>>, vector<1x324xf32>
    %cst = arith.constant 0.000000e+00 : f32
    %1 = vector.broadcast %cst : f32 to vector<8x324xf32>
    %c0_1 = arith.constant 0 : index
    %c0_2 = arith.constant 0 : index
    %c0_3 = arith.constant 0 : index
    %2 = vector.load %arg1[%c0_1, %c0_2, %c0_3] : memref<1x8x362xf32, #tpu.memory_space<vmem>>, vector<1x8x324xf32>
    %3 = vector.shape_cast %2 : vector<1x8x324xf32> to vector<8x324xf32>
    %c0_4 = arith.constant 0 : index
    %c0_5 = arith.constant 0 : index
    %c0_6 = arith.constant 0 : index
    %4 = vector.load %arg2[%c0_4, %c0_5, %c0_6] : memref<9x8x8xf32, #tpu.memory_space<vmem>>, vector<1x8x8xf32>
    %5 = vector.shape_cast %4 : vector<1x8x8xf32> to vector<8x8xf32>
    %cst_7 = arith.constant dense<0.000000e+00> : vector<8x324xf32>
    %6 = tpu.matmul %5, %3, %cst_7 {dimension_numbers = #tpu.dot_dimension_numbers<[1], [0], [0], [1], [0, 0, 1, 1], [], []>} : vector<8x8xf32>, vector<8x324xf32>, vector<8x324xf32> -> vector<8x324xf32>
    %7 = arith.addf %1, %6 : vector<8x324xf32>
    %c0_8 = arith.constant 0 : index
    %c0_9 = arith.constant 0 : index
    %c1 = arith.constant 1 : index
    %8 = vector.load %arg1[%c0_8, %c0_9, %c1] : memref<1x8x362xf32, #tpu.memory_space<vmem>>, vector<1x8x324xf32>
    %9 = vector.shape_cast %8 : vector<1x8x324xf32> to vector<8x324xf32>
    %c1_10 = arith.constant 1 : index
    %c0_11 = arith.constant 0 : index
    %c0_12 = arith.constant 0 : index
    %10 = vector.load %arg2[%c1_10, %c0_11, %c0_12] : memref<9x8x8xf32, #tpu.memory_space<vmem>>, vector<1x8x8xf32>
    %11 = vector.shape_cast %10 : vector<1x8x8xf32> to vector<8x8xf32>
    %cst_13 = arith.constant dense<0.000000e+00> : vector<8x324xf32>
    %12 = tpu.matmul %11, %9, %cst_13 {dimension_numbers = #tpu.dot_dimension_numbers<[1], [0], [0], [1], [0, 0, 1, 1], [], []>} : vector<8x8xf32>, vector<8x324xf32>, vector<8x324xf32> -> vector<8x324xf32>
    %13 = arith.addf %7, %12 : vector<8x324xf32>
    %c0_14 = arith.constant 0 : index
    %c0_15 = arith.constant 0 : index
    %c2 = arith.constant 2 : index
    %14 = vector.load %arg1[%c0_14, %c0_15, %c2] : memref<1x8x362xf32, #tpu.memory_space<vmem>>, vector<1x8x324xf32>
    %15 = vector.shape_cast %14 : vector<1x8x324xf32> to vector<8x324xf32>
    %c2_16 = arith.constant 2 : index
    %c0_17 = arith.constant 0 : index
    %c0_18 = arith.constant 0 : index
    %16 = vector.load %arg2[%c2_16, %c0_17, %c0_18] : memref<9x8x8xf32, #tpu.memory_space<vmem>>, vector<1x8x8xf32>
    %17 = vector.shape_cast %16 : vector<1x8x8xf32> to vector<8x8xf32>
    %cst_19 = arith.constant dense<0.000000e+00> : vector<8x324xf32>
    %18 = tpu.matmul %17, %15, %cst_19 {dimension_numbers = #tpu.dot_dimension_numbers<[1], [0], [0], [1], [0, 0, 1, 1], [], []>} : vector<8x8xf32>, vector<8x324xf32>, vector<8x324xf32> -> vector<8x324xf32>
    %19 = arith.addf %13, %18 : vector<8x324xf32>
    %c0_20 = arith.constant 0 : index
    %c0_21 = arith.constant 0 : index
    %c18 = arith.constant 18 : index
    %20 = vector.load %arg1[%c0_20, %c0_21, %c18] : memref<1x8x362xf32, #tpu.memory_space<vmem>>, vector<1x8x324xf32>
    %21 = vector.shape_cast %20 : vector<1x8x324xf32> to vector<8x324xf32>
    %c3 = arith.constant 3 : index
    %c0_22 = arith.constant 0 : index
    %c0_23 = arith.constant 0 : index
    %22 = vector.load %arg2[%c3, %c0_22, %c0_23] : memref<9x8x8xf32, #tpu.memory_space<vmem>>, vector<1x8x8xf32>
    %23 = vector.shape_cast %22 : vector<1x8x8xf32> to vector<8x8xf32>
    %cst_24 = arith.constant dense<0.000000e+00> : vector<8x324xf32>
    %24 = tpu.matmul %23, %21, %cst_24 {dimension_numbers = #tpu.dot_dimension_numbers<[1], [0], [0], [1], [0, 0, 1, 1], [], []>} : vector<8x8xf32>, vector<8x324xf32>, vector<8x324xf32> -> vector<8x324xf32>
    %25 = arith.addf %19, %24 : vector<8x324xf32>
    %c0_25 = arith.constant 0 : index
    %c0_26 = arith.constant 0 : index
    %c19 = arith.constant 19 : index
    %26 = vector.load %arg1[%c0_25, %c0_26, %c19] : memref<1x8x362xf32, #tpu.memory_space<vmem>>, vector<1x8x324xf32>
    %27 = vector.shape_cast %26 : vector<1x8x324xf32> to vector<8x324xf32>
    %c4 = arith.constant 4 : index
    %c0_27 = arith.constant 0 : index
    %c0_28 = arith.constant 0 : index
    %28 = vector.load %arg2[%c4, %c0_27, %c0_28] : memref<9x8x8xf32, #tpu.memory_space<vmem>>, vector<1x8x8xf32>
    %29 = vector.shape_cast %28 : vector<1x8x8xf32> to vector<8x8xf32>
    %cst_29 = arith.constant dense<0.000000e+00> : vector<8x324xf32>
    %30 = tpu.matmul %29, %27, %cst_29 {dimension_numbers = #tpu.dot_dimension_numbers<[1], [0], [0], [1], [0, 0, 1, 1], [], []>} : vector<8x8xf32>, vector<8x324xf32>, vector<8x324xf32> -> vector<8x324xf32>
    %31 = arith.addf %25, %30 : vector<8x324xf32>
    %c0_30 = arith.constant 0 : index
    %c0_31 = arith.constant 0 : index
    %c20 = arith.constant 20 : index
    %32 = vector.load %arg1[%c0_30, %c0_31, %c20] : memref<1x8x362xf32, #tpu.memory_space<vmem>>, vector<1x8x324xf32>
    %33 = vector.shape_cast %32 : vector<1x8x324xf32> to vector<8x324xf32>
    %c5 = arith.constant 5 : index
    %c0_32 = arith.constant 0 : index
    %c0_33 = arith.constant 0 : index
    %34 = vector.load %arg2[%c5, %c0_32, %c0_33] : memref<9x8x8xf32, #tpu.memory_space<vmem>>, vector<1x8x8xf32>
    %35 = vector.shape_cast %34 : vector<1x8x8xf32> to vector<8x8xf32>
    %cst_34 = arith.constant dense<0.000000e+00> : vector<8x324xf32>
    %36 = tpu.matmul %35, %33, %cst_34 {dimension_numbers = #tpu.dot_dimension_numbers<[1], [0], [0], [1], [0, 0, 1, 1], [], []>} : vector<8x8xf32>, vector<8x324xf32>, vector<8x324xf32> -> vector<8x324xf32>
    %37 = arith.addf %31, %36 : vector<8x324xf32>
    %c0_35 = arith.constant 0 : index
    %c0_36 = arith.constant 0 : index
    %c36 = arith.constant 36 : index
    %38 = vector.load %arg1[%c0_35, %c0_36, %c36] : memref<1x8x362xf32, #tpu.memory_space<vmem>>, vector<1x8x324xf32>
    %39 = vector.shape_cast %38 : vector<1x8x324xf32> to vector<8x324xf32>
    %c6 = arith.constant 6 : index
    %c0_37 = arith.constant 0 : index
    %c0_38 = arith.constant 0 : index
    %40 = vector.load %arg2[%c6, %c0_37, %c0_38] : memref<9x8x8xf32, #tpu.memory_space<vmem>>, vector<1x8x8xf32>
    %41 = vector.shape_cast %40 : vector<1x8x8xf32> to vector<8x8xf32>
    %cst_39 = arith.constant dense<0.000000e+00> : vector<8x324xf32>
    %42 = tpu.matmul %41, %39, %cst_39 {dimension_numbers = #tpu.dot_dimension_numbers<[1], [0], [0], [1], [0, 0, 1, 1], [], []>} : vector<8x8xf32>, vector<8x324xf32>, vector<8x324xf32> -> vector<8x324xf32>
    %43 = arith.addf %37, %42 : vector<8x324xf32>
    %c0_40 = arith.constant 0 : index
    %c0_41 = arith.constant 0 : index
    %c37 = arith.constant 37 : index
    %44 = vector.load %arg1[%c0_40, %c0_41, %c37] : memref<1x8x362xf32, #tpu.memory_space<vmem>>, vector<1x8x324xf32>
    %45 = vector.shape_cast %44 : vector<1x8x324xf32> to vector<8x324xf32>
    %c7 = arith.constant 7 : index
    %c0_42 = arith.constant 0 : index
    %c0_43 = arith.constant 0 : index
    %46 = vector.load %arg2[%c7, %c0_42, %c0_43] : memref<9x8x8xf32, #tpu.memory_space<vmem>>, vector<1x8x8xf32>
    %47 = vector.shape_cast %46 : vector<1x8x8xf32> to vector<8x8xf32>
    %cst_44 = arith.constant dense<0.000000e+00> : vector<8x324xf32>
    %48 = tpu.matmul %47, %45, %cst_44 {dimension_numbers = #tpu.dot_dimension_numbers<[1], [0], [0], [1], [0, 0, 1, 1], [], []>} : vector<8x8xf32>, vector<8x324xf32>, vector<8x324xf32> -> vector<8x324xf32>
    %49 = arith.addf %43, %48 : vector<8x324xf32>
    %c0_45 = arith.constant 0 : index
    %c0_46 = arith.constant 0 : index
    %c38 = arith.constant 38 : index
    %50 = vector.load %arg1[%c0_45, %c0_46, %c38] : memref<1x8x362xf32, #tpu.memory_space<vmem>>, vector<1x8x324xf32>
    %51 = vector.shape_cast %50 : vector<1x8x324xf32> to vector<8x324xf32>
    %c8 = arith.constant 8 : index
    %c0_47 = arith.constant 0 : index
    %c0_48 = arith.constant 0 : index
    %52 = vector.load %arg2[%c8, %c0_47, %c0_48] : memref<9x8x8xf32, #tpu.memory_space<vmem>>, vector<1x8x8xf32>
    %53 = vector.shape_cast %52 : vector<1x8x8xf32> to vector<8x8xf32>
    %cst_49 = arith.constant dense<0.000000e+00> : vector<8x324xf32>
    %54 = tpu.matmul %53, %51, %cst_49 {dimension_numbers = #tpu.dot_dimension_numbers<[1], [0], [0], [1], [0, 0, 1, 1], [], []>} : vector<8x8xf32>, vector<8x324xf32>, vector<8x324xf32> -> vector<8x324xf32>
    %55 = arith.addf %49, %54 : vector<8x324xf32>
    %c0_50 = arith.constant 0 : index
    %c0_51 = arith.constant 0 : index
    %56 = vector.load %arg3[%c0_50, %c0_51] : memref<8x1xf32, #tpu.memory_space<vmem>>, vector<8x1xf32>
    %57 = vector.broadcast %56 : vector<8x1xf32> to vector<8x324xf32>
    %58 = arith.addf %55, %57 : vector<8x324xf32>
    %cst_52 = arith.constant 5.000000e-01 : f32
    %59 = vector.broadcast %cst_52 : f32 to vector<8x324xf32>
    %60 = arith.mulf %59, %58 : vector<8x324xf32>
    %61 = arith.mulf %58, %58 : vector<8x324xf32>
    %62 = arith.mulf %61, %58 : vector<8x324xf32>
    %cst_53 = arith.constant 4.471500e-02 : f32
    %63 = vector.broadcast %cst_53 : f32 to vector<8x324xf32>
    %64 = arith.mulf %63, %62 : vector<8x324xf32>
    %65 = arith.addf %58, %64 : vector<8x324xf32>
    %cst_54 = arith.constant 0.797884583 : f32
    %66 = vector.broadcast %cst_54 : f32 to vector<8x324xf32>
    %67 = arith.mulf %66, %65 : vector<8x324xf32>
    %68 = math.tanh %67 : vector<8x324xf32>
    %cst_55 = arith.constant 1.000000e+00 : f32
    %69 = vector.broadcast %cst_55 : f32 to vector<8x324xf32>
    %70 = arith.addf %69, %68 : vector<8x324xf32>
    %71 = arith.mulf %60, %70 : vector<8x324xf32>
    %72 = vector.broadcast %0 : vector<1x324xf32> to vector<8x324xf32>
    %73 = arith.mulf %71, %72 : vector<8x324xf32>
    %cst_56 = arith.constant 0.000000e+00 : f32
    %74 = vector.broadcast %cst_56 : f32 to vector<8x362xf32>
    %c0_57 = arith.constant 0 : index
    %c0_58 = arith.constant 0 : index
    %75 = vector.load %arg10[%c0_57, %c0_58] : memref<8x362xf32, #tpu.memory_space<vmem>>, vector<8x362xf32>
    tpu.vector_store %arg10[%c0_57, %c0_58], %74 {strides = array<i32>} : memref<8x362xf32, #tpu.memory_space<vmem>>, vector<8x362xf32>,
    %c0_59 = arith.constant 0 : index
    %c19_60 = arith.constant 19 : index
    %76 = vector.load %arg10[%c0_59, %c19_60] : memref<8x362xf32, #tpu.memory_space<vmem>>, vector<8x324xf32>
    tpu.vector_store %arg10[%c0_59, %c19_60], %73 {strides = array<i32>} : memref<8x362xf32, #tpu.memory_space<vmem>>, vector<8x324xf32>,
    %cst_61 = arith.constant 0.000000e+00 : f32
    %77 = vector.broadcast %cst_61 : f32 to vector<8x324xf32>
    %c0_62 = arith.constant 0 : index
    %c0_63 = arith.constant 0 : index
    %78 = vector.load %arg10[%c0_62, %c0_63] : memref<8x362xf32, #tpu.memory_space<vmem>>, vector<8x324xf32>
    %c0_64 = arith.constant 0 : index
    %c0_65 = arith.constant 0 : index
    %c0_66 = arith.constant 0 : index
    %79 = vector.load %arg4[%c0_64, %c0_65, %c0_66] : memref<9x8x8xf32, #tpu.memory_space<vmem>>, vector<1x8x8xf32>
    %80 = vector.shape_cast %79 : vector<1x8x8xf32> to vector<8x8xf32>
    %cst_67 = arith.constant dense<0.000000e+00> : vector<8x324xf32>
    %81 = tpu.matmul %80, %78, %cst_67 {dimension_numbers = #tpu.dot_dimension_numbers<[1], [0], [0], [1], [0, 0, 1, 1], [], []>} : vector<8x8xf32>, vector<8x324xf32>, vector<8x324xf32> -> vector<8x324xf32>
    %82 = arith.addf %77, %81 : vector<8x324xf32>
    %c0_68 = arith.constant 0 : index
    %c1_69 = arith.constant 1 : index
    %83 = vector.load %arg10[%c0_68, %c1_69] : memref<8x362xf32, #tpu.memory_space<vmem>>, vector<8x324xf32>
    %c1_70 = arith.constant 1 : index
    %c0_71 = arith.constant 0 : index
    %c0_72 = arith.constant 0 : index
    %84 = vector.load %arg4[%c1_70, %c0_71, %c0_72] : memref<9x8x8xf32, #tpu.memory_space<vmem>>, vector<1x8x8xf32>
    %85 = vector.shape_cast %84 : vector<1x8x8xf32> to vector<8x8xf32>
    %cst_73 = arith.constant dense<0.000000e+00> : vector<8x324xf32>
    %86 = tpu.matmul %85, %83, %cst_73 {dimension_numbers = #tpu.dot_dimension_numbers<[1], [0], [0], [1], [0, 0, 1, 1], [], []>} : vector<8x8xf32>, vector<8x324xf32>, vector<8x324xf32> -> vector<8x324xf32>
    %87 = arith.addf %82, %86 : vector<8x324xf32>
    %c0_74 = arith.constant 0 : index
    %c2_75 = arith.constant 2 : index
    %88 = vector.load %arg10[%c0_74, %c2_75] : memref<8x362xf32, #tpu.memory_space<vmem>>, vector<8x324xf32>
    %c2_76 = arith.constant 2 : index
    %c0_77 = arith.constant 0 : index
    %c0_78 = arith.constant 0 : index
    %89 = vector.load %arg4[%c2_76, %c0_77, %c0_78] : memref<9x8x8xf32, #tpu.memory_space<vmem>>, vector<1x8x8xf32>
    %90 = vector.shape_cast %89 : vector<1x8x8xf32> to vector<8x8xf32>
    %cst_79 = arith.constant dense<0.000000e+00> : vector<8x324xf32>
    %91 = tpu.matmul %90, %88, %cst_79 {dimension_numbers = #tpu.dot_dimension_numbers<[1], [0], [0], [1], [0, 0, 1, 1], [], []>} : vector<8x8xf32>, vector<8x324xf32>, vector<8x324xf32> -> vector<8x324xf32>
    %92 = arith.addf %87, %91 : vector<8x324xf32>
    %c0_80 = arith.constant 0 : index
    %c18_81 = arith.constant 18 : index
    %93 = vector.load %arg10[%c0_80, %c18_81] : memref<8x362xf32, #tpu.memory_space<vmem>>, vector<8x324xf32>
    %c3_82 = arith.constant 3 : index
    %c0_83 = arith.constant 0 : index
    %c0_84 = arith.constant 0 : index
    %94 = vector.load %arg4[%c3_82, %c0_83, %c0_84] : memref<9x8x8xf32, #tpu.memory_space<vmem>>, vector<1x8x8xf32>
    %95 = vector.shape_cast %94 : vector<1x8x8xf32> to vector<8x8xf32>
    %cst_85 = arith.constant dense<0.000000e+00> : vector<8x324xf32>
    %96 = tpu.matmul %95, %93, %cst_85 {dimension_numbers = #tpu.dot_dimension_numbers<[1], [0], [0], [1], [0, 0, 1, 1], [], []>} : vector<8x8xf32>, vector<8x324xf32>, vector<8x324xf32> -> vector<8x324xf32>
    %97 = arith.addf %92, %96 : vector<8x324xf32>
    %c0_86 = arith.constant 0 : index
    %c19_87 = arith.constant 19 : index
    %98 = vector.load %arg10[%c0_86, %c19_87] : memref<8x362xf32, #tpu.memory_space<vmem>>, vector<8x324xf32>
    %c4_88 = arith.constant 4 : index
    %c0_89 = arith.constant 0 : index
    %c0_90 = arith.constant 0 : index
    %99 = vector.load %arg4[%c4_88, %c0_89, %c0_90] : memref<9x8x8xf32, #tpu.memory_space<vmem>>, vector<1x8x8xf32>
    %100 = vector.shape_cast %99 : vector<1x8x8xf32> to vector<8x8xf32>
    %cst_91 = arith.constant dense<0.000000e+00> : vector<8x324xf32>
    %101 = tpu.matmul %100, %98, %cst_91 {dimension_numbers = #tpu.dot_dimension_numbers<[1], [0], [0], [1], [0, 0, 1, 1], [], []>} : vector<8x8xf32>, vector<8x324xf32>, vector<8x324xf32> -> vector<8x324xf32>
    %102 = arith.addf %97, %101 : vector<8x324xf32>
    %c0_92 = arith.constant 0 : index
    %c20_93 = arith.constant 20 : index
    %103 = vector.load %arg10[%c0_92, %c20_93] : memref<8x362xf32, #tpu.memory_space<vmem>>, vector<8x324xf32>
    %c5_94 = arith.constant 5 : index
    %c0_95 = arith.constant 0 : index
    %c0_96 = arith.constant 0 : index
    %104 = vector.load %arg4[%c5_94, %c0_95, %c0_96] : memref<9x8x8xf32, #tpu.memory_space<vmem>>, vector<1x8x8xf32>
    %105 = vector.shape_cast %104 : vector<1x8x8xf32> to vector<8x8xf32>
    %cst_97 = arith.constant dense<0.000000e+00> : vector<8x324xf32>
    %106 = tpu.matmul %105, %103, %cst_97 {dimension_numbers = #tpu.dot_dimension_numbers<[1], [0], [0], [1], [0, 0, 1, 1], [], []>} : vector<8x8xf32>, vector<8x324xf32>, vector<8x324xf32> -> vector<8x324xf32>
    %107 = arith.addf %102, %106 : vector<8x324xf32>
    %c0_98 = arith.constant 0 : index
    %c36_99 = arith.constant 36 : index
    %108 = vector.load %arg10[%c0_98, %c36_99] : memref<8x362xf32, #tpu.memory_space<vmem>>, vector<8x324xf32>
    %c6_100 = arith.constant 6 : index
    %c0_101 = arith.constant 0 : index
    %c0_102 = arith.constant 0 : index
    %109 = vector.load %arg4[%c6_100, %c0_101, %c0_102] : memref<9x8x8xf32, #tpu.memory_space<vmem>>, vector<1x8x8xf32>
    %110 = vector.shape_cast %109 : vector<1x8x8xf32> to vector<8x8xf32>
    %cst_103 = arith.constant dense<0.000000e+00> : vector<8x324xf32>
    %111 = tpu.matmul %110, %108, %cst_103 {dimension_numbers = #tpu.dot_dimension_numbers<[1], [0], [0], [1], [0, 0, 1, 1], [], []>} : vector<8x8xf32>, vector<8x324xf32>, vector<8x324xf32> -> vector<8x324xf32>
    %112 = arith.addf %107, %111 : vector<8x324xf32>
    %c0_104 = arith.constant 0 : index
    %c37_105 = arith.constant 37 : index
    %113 = vector.load %arg10[%c0_104, %c37_105] : memref<8x362xf32, #tpu.memory_space<vmem>>, vector<8x324xf32>
    %c7_106 = arith.constant 7 : index
    %c0_107 = arith.constant 0 : index
    %c0_108 = arith.constant 0 : index
    %114 = vector.load %arg4[%c7_106, %c0_107, %c0_108] : memref<9x8x8xf32, #tpu.memory_space<vmem>>, vector<1x8x8xf32>
    %115 = vector.shape_cast %114 : vector<1x8x8xf32> to vector<8x8xf32>
    %cst_109 = arith.constant dense<0.000000e+00> : vector<8x324xf32>
    %116 = tpu.matmul %115, %113, %cst_109 {dimension_numbers = #tpu.dot_dimension_numbers<[1], [0], [0], [1], [0, 0, 1, 1], [], []>} : vector<8x8xf32>, vector<8x324xf32>, vector<8x324xf32> -> vector<8x324xf32>
    %117 = arith.addf %112, %116 : vector<8x324xf32>
    %c0_110 = arith.constant 0 : index
    %c38_111 = arith.constant 38 : index
    %118 = vector.load %arg10[%c0_110, %c38_111] : memref<8x362xf32, #tpu.memory_space<vmem>>, vector<8x324xf32>
    %c8_112 = arith.constant 8 : index
    %c0_113 = arith.constant 0 : index
    %c0_114 = arith.constant 0 : index
    %119 = vector.load %arg4[%c8_112, %c0_113, %c0_114] : memref<9x8x8xf32, #tpu.memory_space<vmem>>, vector<1x8x8xf32>
    %120 = vector.shape_cast %119 : vector<1x8x8xf32> to vector<8x8xf32>
    %cst_115 = arith.constant dense<0.000000e+00> : vector<8x324xf32>
    %121 = tpu.matmul %120, %118, %cst_115 {dimension_numbers = #tpu.dot_dimension_numbers<[1], [0], [0], [1], [0, 0, 1, 1], [], []>} : vector<8x8xf32>, vector<8x324xf32>, vector<8x324xf32> -> vector<8x324xf32>
    %122 = arith.addf %117, %121 : vector<8x324xf32>
    %c0_116 = arith.constant 0 : index
    %c0_117 = arith.constant 0 : index
    %123 = vector.load %arg5[%c0_116, %c0_117] : memref<8x1xf32, #tpu.memory_space<vmem>>, vector<8x1xf32>
    %124 = vector.broadcast %123 : vector<8x1xf32> to vector<8x324xf32>
    %125 = arith.addf %122, %124 : vector<8x324xf32>
    %126 = vector.broadcast %0 : vector<1x324xf32> to vector<8x324xf32>
    %127 = arith.mulf %125, %126 : vector<8x324xf32>
    %c0_118 = arith.constant 0 : index
    %c19_119 = arith.constant 19 : index
    %128 = vector.load %arg10[%c0_118, %c19_119] : memref<8x362xf32, #tpu.memory_space<vmem>>, vector<8x324xf32>
    tpu.vector_store %arg10[%c0_118, %c19_119], %127 {strides = array<i32>} : memref<8x362xf32, #tpu.memory_space<vmem>>, vector<8x324xf32>,
    %cst_120 = arith.constant 0.000000e+00 : f32
    %129 = vector.broadcast %cst_120 : f32 to vector<8x324xf32>
    %c0_121 = arith.constant 0 : index
    %c0_122 = arith.constant 0 : index
    %130 = vector.load %arg10[%c0_121, %c0_122] : memref<8x362xf32, #tpu.memory_space<vmem>>, vector<8x324xf32>
    %c0_123 = arith.constant 0 : index
    %c0_124 = arith.constant 0 : index
    %c0_125 = arith.constant 0 : index
    %131 = vector.load %arg6[%c0_123, %c0_124, %c0_125] : memref<9x8x8xf32, #tpu.memory_space<vmem>>, vector<1x8x8xf32>
    %132 = vector.shape_cast %131 : vector<1x8x8xf32> to vector<8x8xf32>
    %cst_126 = arith.constant dense<0.000000e+00> : vector<8x324xf32>
    %133 = tpu.matmul %132, %130, %cst_126 {dimension_numbers = #tpu.dot_dimension_numbers<[1], [0], [0], [1], [0, 0, 1, 1], [], []>} : vector<8x8xf32>, vector<8x324xf32>, vector<8x324xf32> -> vector<8x324xf32>
    %134 = arith.addf %129, %133 : vector<8x324xf32>
    %c0_127 = arith.constant 0 : index
    %c1_128 = arith.constant 1 : index
    %135 = vector.load %arg10[%c0_127, %c1_128] : memref<8x362xf32, #tpu.memory_space<vmem>>, vector<8x324xf32>
    %c1_129 = arith.constant 1 : index
    %c0_130 = arith.constant 0 : index
    %c0_131 = arith.constant 0 : index
    %136 = vector.load %arg6[%c1_129, %c0_130, %c0_131] : memref<9x8x8xf32, #tpu.memory_space<vmem>>, vector<1x8x8xf32>
    %137 = vector.shape_cast %136 : vector<1x8x8xf32> to vector<8x8xf32>
    %cst_132 = arith.constant dense<0.000000e+00> : vector<8x324xf32>
    %138 = tpu.matmul %137, %135, %cst_132 {dimension_numbers = #tpu.dot_dimension_numbers<[1], [0], [0], [1], [0, 0, 1, 1], [], []>} : vector<8x8xf32>, vector<8x324xf32>, vector<8x324xf32> -> vector<8x324xf32>
    %139 = arith.addf %134, %138 : vector<8x324xf32>
    %c0_133 = arith.constant 0 : index
    %c2_134 = arith.constant 2 : index
    %140 = vector.load %arg10[%c0_133, %c2_134] : memref<8x362xf32, #tpu.memory_space<vmem>>, vector<8x324xf32>
    %c2_135 = arith.constant 2 : index
    %c0_136 = arith.constant 0 : index
    %c0_137 = arith.constant 0 : index
    %141 = vector.load %arg6[%c2_135, %c0_136, %c0_137] : memref<9x8x8xf32, #tpu.memory_space<vmem>>, vector<1x8x8xf32>
    %142 = vector.shape_cast %141 : vector<1x8x8xf32> to vector<8x8xf32>
    %cst_138 = arith.constant dense<0.000000e+00> : vector<8x324xf32>
    %143 = tpu.matmul %142, %140, %cst_138 {dimension_numbers = #tpu.dot_dimension_numbers<[1], [0], [0], [1], [0, 0, 1, 1], [], []>} : vector<8x8xf32>, vector<8x324xf32>, vector<8x324xf32> -> vector<8x324xf32>
    %144 = arith.addf %139, %143 : vector<8x324xf32>
    %c0_139 = arith.constant 0 : index
    %c18_140 = arith.constant 18 : index
    %145 = vector.load %arg10[%c0_139, %c18_140] : memref<8x362xf32, #tpu.memory_space<vmem>>, vector<8x324xf32>
    %c3_141 = arith.constant 3 : index
    %c0_142 = arith.constant 0 : index
    %c0_143 = arith.constant 0 : index
    %146 = vector.load %arg6[%c3_141, %c0_142, %c0_143] : memref<9x8x8xf32, #tpu.memory_space<vmem>>, vector<1x8x8xf32>
    %147 = vector.shape_cast %146 : vector<1x8x8xf32> to vector<8x8xf32>
    %cst_144 = arith.constant dense<0.000000e+00> : vector<8x324xf32>
    %148 = tpu.matmul %147, %145, %cst_144 {dimension_numbers = #tpu.dot_dimension_numbers<[1], [0], [0], [1], [0, 0, 1, 1], [], []>} : vector<8x8xf32>, vector<8x324xf32>, vector<8x324xf32> -> vector<8x324xf32>
    %149 = arith.addf %144, %148 : vector<8x324xf32>
    %c0_145 = arith.constant 0 : index
    %c19_146 = arith.constant 19 : index
    %150 = vector.load %arg10[%c0_145, %c19_146] : memref<8x362xf32, #tpu.memory_space<vmem>>, vector<8x324xf32>
    %c4_147 = arith.constant 4 : index
    %c0_148 = arith.constant 0 : index
    %c0_149 = arith.constant 0 : index
    %151 = vector.load %arg6[%c4_147, %c0_148, %c0_149] : memref<9x8x8xf32, #tpu.memory_space<vmem>>, vector<1x8x8xf32>
    %152 = vector.shape_cast %151 : vector<1x8x8xf32> to vector<8x8xf32>
    %cst_150 = arith.constant dense<0.000000e+00> : vector<8x324xf32>
    %153 = tpu.matmul %152, %150, %cst_150 {dimension_numbers = #tpu.dot_dimension_numbers<[1], [0], [0], [1], [0, 0, 1, 1], [], []>} : vector<8x8xf32>, vector<8x324xf32>, vector<8x324xf32> -> vector<8x324xf32>
    %154 = arith.addf %149, %153 : vector<8x324xf32>
    %c0_151 = arith.constant 0 : index
    %c20_152 = arith.constant 20 : index
    %155 = vector.load %arg10[%c0_151, %c20_152] : memref<8x362xf32, #tpu.memory_space<vmem>>, vector<8x324xf32>
    %c5_153 = arith.constant 5 : index
    %c0_154 = arith.constant 0 : index
    %c0_155 = arith.constant 0 : index
    %156 = vector.load %arg6[%c5_153, %c0_154, %c0_155] : memref<9x8x8xf32, #tpu.memory_space<vmem>>, vector<1x8x8xf32>
    %157 = vector.shape_cast %156 : vector<1x8x8xf32> to vector<8x8xf32>
    %cst_156 = arith.constant dense<0.000000e+00> : vector<8x324xf32>
    %158 = tpu.matmul %157, %155, %cst_156 {dimension_numbers = #tpu.dot_dimension_numbers<[1], [0], [0], [1], [0, 0, 1, 1], [], []>} : vector<8x8xf32>, vector<8x324xf32>, vector<8x324xf32> -> vector<8x324xf32>
    %159 = arith.addf %154, %158 : vector<8x324xf32>
    %c0_157 = arith.constant 0 : index
    %c36_158 = arith.constant 36 : index
    %160 = vector.load %arg10[%c0_157, %c36_158] : memref<8x362xf32, #tpu.memory_space<vmem>>, vector<8x324xf32>
    %c6_159 = arith.constant 6 : index
    %c0_160 = arith.constant 0 : index
    %c0_161 = arith.constant 0 : index
    %161 = vector.load %arg6[%c6_159, %c0_160, %c0_161] : memref<9x8x8xf32, #tpu.memory_space<vmem>>, vector<1x8x8xf32>
    %162 = vector.shape_cast %161 : vector<1x8x8xf32> to vector<8x8xf32>
    %cst_162 = arith.constant dense<0.000000e+00> : vector<8x324xf32>
    %163 = tpu.matmul %162, %160, %cst_162 {dimension_numbers = #tpu.dot_dimension_numbers<[1], [0], [0], [1], [0, 0, 1, 1], [], []>} : vector<8x8xf32>, vector<8x324xf32>, vector<8x324xf32> -> vector<8x324xf32>
    %164 = arith.addf %159, %163 : vector<8x324xf32>
    %c0_163 = arith.constant 0 : index
    %c37_164 = arith.constant 37 : index
    %165 = vector.load %arg10[%c0_163, %c37_164] : memref<8x362xf32, #tpu.memory_space<vmem>>, vector<8x324xf32>
    %c7_165 = arith.constant 7 : index
    %c0_166 = arith.constant 0 : index
    %c0_167 = arith.constant 0 : index
    %166 = vector.load %arg6[%c7_165, %c0_166, %c0_167] : memref<9x8x8xf32, #tpu.memory_space<vmem>>, vector<1x8x8xf32>
    %167 = vector.shape_cast %166 : vector<1x8x8xf32> to vector<8x8xf32>
    %cst_168 = arith.constant dense<0.000000e+00> : vector<8x324xf32>
    %168 = tpu.matmul %167, %165, %cst_168 {dimension_numbers = #tpu.dot_dimension_numbers<[1], [0], [0], [1], [0, 0, 1, 1], [], []>} : vector<8x8xf32>, vector<8x324xf32>, vector<8x324xf32> -> vector<8x324xf32>
    %169 = arith.addf %164, %168 : vector<8x324xf32>
    %c0_169 = arith.constant 0 : index
    %c38_170 = arith.constant 38 : index
    %170 = vector.load %arg10[%c0_169, %c38_170] : memref<8x362xf32, #tpu.memory_space<vmem>>, vector<8x324xf32>
    %c8_171 = arith.constant 8 : index
    %c0_172 = arith.constant 0 : index
    %c0_173 = arith.constant 0 : index
    %171 = vector.load %arg6[%c8_171, %c0_172, %c0_173] : memref<9x8x8xf32, #tpu.memory_space<vmem>>, vector<1x8x8xf32>
    %172 = vector.shape_cast %171 : vector<1x8x8xf32> to vector<8x8xf32>
    %cst_174 = arith.constant dense<0.000000e+00> : vector<8x324xf32>
    %173 = tpu.matmul %172, %170, %cst_174 {dimension_numbers = #tpu.dot_dimension_numbers<[1], [0], [0], [1], [0, 0, 1, 1], [], []>} : vector<8x8xf32>, vector<8x324xf32>, vector<8x324xf32> -> vector<8x324xf32>
    %174 = arith.addf %169, %173 : vector<8x324xf32>
    %c0_175 = arith.constant 0 : index
    %c0_176 = arith.constant 0 : index
    %175 = vector.load %arg7[%c0_175, %c0_176] : memref<8x1xf32, #tpu.memory_space<vmem>>, vector<8x1xf32>
    %176 = vector.broadcast %175 : vector<8x1xf32> to vector<8x324xf32>
    %177 = arith.addf %174, %176 : vector<8x324xf32>
    %c0_177 = arith.constant 0 : index
    %c0_178 = arith.constant 0 : index
    %c19_179 = arith.constant 19 : index
    %178 = vector.load %arg1[%c0_177, %c0_178, %c19_179] : memref<1x8x362xf32, #tpu.memory_space<vmem>>, vector<1x8x324xf32>
    %179 = vector.shape_cast %178 : vector<1x8x324xf32> to vector<8x324xf32>
    %180 = arith.addf %177, %179 : vector<8x324xf32>
    %181 = vector.broadcast %0 : vector<1x324xf32> to vector<8x324xf32>
    %182 = arith.mulf %180, %181 : vector<8x324xf32>
    %c0_180 = arith.constant 0 : index
    %c0_181 = arith.constant 0 : index
    %c0_182 = arith.constant 0 : index
    %183 = vector.load %arg9[%c0_180, %c0_181, %c0_182] : memref<1x8x324xf32, #tpu.memory_space<vmem>>, vector<1x8x324xf32>
    %184 = vector.shape_cast %183 : vector<1x8x324xf32> to vector<8x324xf32>
    %185 = vector.shape_cast %182 : vector<8x324xf32> to vector<1x8x324xf32>
    tpu.vector_store %arg9[%c0_180, %c0_181, %c0_182], %185 {strides = array<i32>} : memref<1x8x324xf32, #tpu.memory_space<vmem>>, vector<1x8x324xf32>,
    return
  }
  func.func @transform_0(%arg0: i32) -> (i32, i32, i32) {
    %c0_i32 = arith.constant 0 : i32
    %c0_i32_0 = arith.constant 0 : i32
    %c0_i32_1 = arith.constant 0 : i32
    return %arg0, %c0_i32, %c0_i32_0 : i32, i32, i32
  }
  func.func @transform_1(%arg0: i32) -> (i32, i32, i32) {
    %c0_i32 = arith.constant 0 : i32
    %c0_i32_0 = arith.constant 0 : i32
    %c0_i32_1 = arith.constant 0 : i32
    %c0_i32_2 = arith.constant 0 : i32
    return %c0_i32, %c0_i32_0, %c0_i32_1 : i32, i32, i32
  }
  func.func @transform_2(%arg0: i32) -> (i32, i32) {
    %c0_i32 = arith.constant 0 : i32
    %c0_i32_0 = arith.constant 0 : i32
    %c0_i32_1 = arith.constant 0 : i32
    return %c0_i32, %c0_i32_0 : i32, i32
  }
  func.func @transform_3(%arg0: i32) -> (i32, i32, i32) {
    %c0_i32 = arith.constant 0 : i32
    %c0_i32_0 = arith.constant 0 : i32
    %c0_i32_1 = arith.constant 0 : i32
    %c0_i32_2 = arith.constant 0 : i32
    return %c0_i32, %c0_i32_0, %c0_i32_1 : i32, i32, i32
  }
  func.func @transform_4(%arg0: i32) -> (i32, i32) {
    %c0_i32 = arith.constant 0 : i32
    %c0_i32_0 = arith.constant 0 : i32
    %c0_i32_1 = arith.constant 0 : i32
    return %c0_i32, %c0_i32_0 : i32, i32
  }
  func.func @transform_5(%arg0: i32) -> (i32, i32, i32) {
    %c0_i32 = arith.constant 0 : i32
    %c0_i32_0 = arith.constant 0 : i32
    %c0_i32_1 = arith.constant 0 : i32
    %c0_i32_2 = arith.constant 0 : i32
    return %c0_i32, %c0_i32_0, %c0_i32_1 : i32, i32, i32
  }
  func.func @transform_6(%arg0: i32) -> (i32, i32) {
    %c0_i32 = arith.constant 0 : i32
    %c0_i32_0 = arith.constant 0 : i32
    %c0_i32_1 = arith.constant 0 : i32
    return %c0_i32, %c0_i32_0 : i32, i32
  }
  func.func @transform_7(%arg0: i32) -> (i32, i32) {
    %c0_i32 = arith.constant 0 : i32
    %c0_i32_0 = arith.constant 0 : i32
    %c0_i32_1 = arith.constant 0 : i32
    return %c0_i32, %c0_i32_0 : i32, i32
  }
  func.func @transform_8(%arg0: i32) -> (i32, i32, i32) {
    %c0_i32 = arith.constant 0 : i32
    %c0_i32_0 = arith.constant 0 : i32
    %c0_i32_1 = arith.constant 0 : i32
    return %arg0, %c0_i32, %c0_i32_0 : i32, i32, i32
  }
}

</mosaic_0001>

<llo_original>
// kernel: tpu_custom_call.1
$region0: #{tpu_custom_call.1}
  #allocation0 [shape = 'u32[]', space=smem, size = 0x4, offset = 0x4, fixed_abs, tag = 'smem constant byte address 0x4 - core index']
  #allocation1 [shape = 'u32[144,128]{1,0:T(1,128)}', space=vmem, size = 0x12000, scoped, tag = 'internal scratch']
  #allocation2 [shape = 'f32[8,362]{1,0:T(8,128)}', space=vmem, size = 0x3000, scoped, tag = 'scratch operand']
  %s0 = inlined_call_operand.vmem [shape: f32[2,8,362], index: 0, kind: input, shape index: {}]
  %s1 = inlined_call_operand.vmem [shape: f32[9,8,8], index: 1, kind: input, shape index: {}]
  %s2 = inlined_call_operand.vmem [shape: f32[8,1], index: 2, kind: input, shape index: {}]
  %s3 = inlined_call_operand.vmem [shape: f32[9,8,8], index: 3, kind: input, shape index: {}]
  %s4 = inlined_call_operand.vmem [shape: f32[8,1], index: 4, kind: input, shape index: {}]
  %s5 = inlined_call_operand.vmem [shape: f32[9,8,8], index: 5, kind: input, shape index: {}]
  %s6 = inlined_call_operand.vmem [shape: f32[8,1], index: 6, kind: input, shape index: {}]
  %s7 = inlined_call_operand.vmem [shape: f32[1,324], index: 7, kind: input, shape index: {}]
  %s8 = inlined_call_operand.hbm [shape: f32[2,8,324], index: 8, kind: output, shape index: {}]
  %s9 = sld [smem:[#allocation0]]
  $region65: #{tpu_custom_call.1} parent=0
    _
  %s11 = ssub.s32 1, %s9
  %s12 = scalar_select 0, %s11, %s9
  $region1: #{tpu_custom_call.1} parent=0
    #allocation3 [shape = 'u8[24576]{0}', space=vmem, size = 0x6000, scoped, tag = 'output window, operand 0']
    #allocation4 [shape = 's32[2]{0}', space=sflag, size = 0x8, scoped, tag = 'scoped memory for tpu_custom_call.1']
    %13 = vsyncpa [#allocation4], 0
    %s14 = scalar_lea.sflag [#allocation4], 1
    %15 = vsyncpa %s14, 0
    loop: start=0, step=1, limit=4
    $region2: #{tpu_custom_call.1} parent=1 // loop_pre_header
      _
    $region3: #{tpu_custom_call.1} parent=1 // loop_header
      %s17 = sphi 0, %s21
      %p18 = scmp.ge.s32.totalorder %s17, 4
      %s27 = sphi 0, %s29
      %s30 = sphi 0, %s27
      %s31 = sphi 0, %s30
      %s47 = sphi 0, %s31
      %s51 = sphi 0, %s51
      %s53 = sphi 0, %s51
      %s54 = sphi 0, %s53
      %s68 = sphi 0, %s54
      %s72 = sphi 0, %s72
      %s74 = sphi 0, %s72
      %s75 = sphi 0, %s74
      %s89 = sphi 0, %s75
      %s93 = sphi 0, %s93
      %s95 = sphi 0, %s93
      %s96 = sphi 0, %s95
      %s110 = sphi 0, %s96
      %s114 = sphi 0, %s114
      %s116 = sphi 0, %s114
      %s117 = sphi 0, %s116
      %s131 = sphi 0, %s117
      %s135 = sphi 0, %s135
      %s137 = sphi 0, %s135
      %s138 = sphi 0, %s137
      %s152 = sphi 0, %s138
      %s156 = sphi 0, %s156
      %s158 = sphi 0, %s156
      %s159 = sphi 0, %s158
      %s173 = sphi 0, %s159
      %s177 = sphi 0, %s177
      %s179 = sphi 0, %s177
      %s180 = sphi 0, %s179
      %s194 = sphi 0, %s180
      %s200 = sphi 0, %s202
      %s203 = sphi 0, %s200
      %s204 = sphi 0, %s203
      %s220 = sphi 0, %s204
    $region4: #{tpu_custom_call.1} parent=1 // loop_header_branch
      %20 = sbr.rel (%p18) target = $region8
    $region5: #{tpu_custom_call.1} parent=1 // loop_body
      %s22 = ssub.s32 %s17, 1
      %s23 = ssub.s32 %s17, 2
      %s24 = sadd.s32 %s17, 1
      %s25 = ssub.s32 %s17, %s24
      %p26 = scmp.eq.s32.totalorder %s25, 0
      %s28 = sadd.s32 %s27, 1
      %s29 = scalar_select %p26, %s27, %s28
      %p32 = pneg %p26
      %p33 = scmp.eq.s32.totalorder %s17, 1
      %p34 = por %p32, %p33
      %p35 = scmp.ne.s32.totalorder %s27, %s30
      %p36 = scmp.eq.s32.totalorder %s17, 0
      %p37 = por %p35, %p36
      %p38 = scmp.ne.s32.totalorder %s27, %s30
      %p39 = scmp.eq.s32.totalorder %s22, 1
      %p40 = por %p38, %p39
      %p41 = scmp.ne.s32.totalorder %s30, %s31
      %p42 = scmp.eq.s32.totalorder %s22, 0
      %p43 = por %p41, %p42
      %p44 = scmp.ne.s32.totalorder %s30, %s31
      %p45 = scmp.eq.s32.totalorder %s23, 1
      %p46 = por %p44, %p45
      %p48 = scmp.ne.s32.totalorder %s31, %s47
      %p49 = scmp.eq.s32.totalorder %s23, 0
      %p50 = por %p48, %p49
      %s52 = sadd.s32 %s51, 1
      %p55 = scmp.eq.s32.totalorder %s17, 1
      %p56 = scmp.ne.s32.totalorder %s51, %s53
      %p57 = scmp.eq.s32.totalorder %s17, 0
      %p58 = por %p56, %p57
      %p59 = scmp.ne.s32.totalorder %s51, %s53
      %p60 = scmp.eq.s32.totalorder %s22, 1
      %p61 = por %p59, %p60
      %p62 = scmp.ne.s32.totalorder %s53, %s54
      %p63 = scmp.eq.s32.totalorder %s22, 0
      %p64 = por %p62, %p63
      %p65 = scmp.ne.s32.totalorder %s53, %s54
      %p66 = scmp.eq.s32.totalorder %s23, 1
      %p67 = por %p65, %p66
      %p69 = scmp.ne.s32.totalorder %s54, %s68
      %p70 = scmp.eq.s32.totalorder %s23, 0
      %p71 = por %p69, %p70
      %s73 = sadd.s32 %s72, 1
      %p76 = scmp.eq.s32.totalorder %s17, 1
      %p77 = scmp.ne.s32.totalorder %s72, %s74
      %p78 = scmp.eq.s32.totalorder %s17, 0
      %p79 = por %p77, %p78
      %p80 = scmp.ne.s32.totalorder %s72, %s74
      %p81 = scmp.eq.s32.totalorder %s22, 1
      %p82 = por %p80, %p81
      %p83 = scmp.ne.s32.totalorder %s74, %s75
      %p84 = scmp.eq.s32.totalorder %s22, 0
      %p85 = por %p83, %p84
      %p86 = scmp.ne.s32.totalorder %s74, %s75
      %p87 = scmp.eq.s32.totalorder %s23, 1
      %p88 = por %p86, %p87
      %p90 = scmp.ne.s32.totalorder %s75, %s89
      %p91 = scmp.eq.s32.totalorder %s23, 0
      %p92 = por %p90, %p91
      %s94 = sadd.s32 %s93, 1
      %p97 = scmp.eq.s32.totalorder %s17, 1
      %p98 = scmp.ne.s32.totalorder %s93, %s95
      %p99 = scmp.eq.s32.totalorder %s17, 0
      %p100 = por %p98, %p99
      %p101 = scmp.ne.s32.totalorder %s93, %s95
      %p102 = scmp.eq.s32.totalorder %s22, 1
      %p103 = por %p101, %p102
      %p104 = scmp.ne.s32.totalorder %s95, %s96
      %p105 = scmp.eq.s32.totalorder %s22, 0
      %p106 = por %p104, %p105
      %p107 = scmp.ne.s32.totalorder %s95, %s96
      %p108 = scmp.eq.s32.totalorder %s23, 1
      %p109 = por %p107, %p108
      %p111 = scmp.ne.s32.totalorder %s96, %s110
      %p112 = scmp.eq.s32.totalorder %s23, 0
      %p113 = por %p111, %p112
      %s115 = sadd.s32 %s114, 1
      %p118 = scmp.eq.s32.totalorder %s17, 1
      %p119 = scmp.ne.s32.totalorder %s114, %s116
      %p120 = scmp.eq.s32.totalorder %s17, 0
      %p121 = por %p119, %p120
      %p122 = scmp.ne.s32.totalorder %s114, %s116
      %p123 = scmp.eq.s32.totalorder %s22, 1
      %p124 = por %p122, %p123
      %p125 = scmp.ne.s32.totalorder %s116, %s117
      %p126 = scmp.eq.s32.totalorder %s22, 0
      %p127 = por %p125, %p126
      %p128 = scmp.ne.s32.totalorder %s116, %s117
      %p129 = scmp.eq.s32.totalorder %s23, 1
      %p130 = por %p128, %p129
      %p132 = scmp.ne.s32.totalorder %s117, %s131
      %p133 = scmp.eq.s32.totalorder %s23, 0
      %p134 = por %p132, %p133
      %s136 = sadd.s32 %s135, 1
      %p139 = scmp.eq.s32.totalorder %s17, 1
      %p140 = scmp.ne.s32.totalorder %s135, %s137
      %p141 = scmp.eq.s32.totalorder %s17, 0
      %p142 = por %p140, %p141
      %p143 = scmp.ne.s32.totalorder %s135, %s137
      %p144 = scmp.eq.s32.totalorder %s22, 1
      %p145 = por %p143, %p144
      %p146 = scmp.ne.s32.totalorder %s137, %s138
      %p147 = scmp.eq.s32.totalorder %s22, 0
      %p148 = por %p146, %p147
      %p149 = scmp.ne.s32.totalorder %s137, %s138
      %p150 = scmp.eq.s32.totalorder %s23, 1
      %p151 = por %p149, %p150
      %p153 = scmp.ne.s32.totalorder %s138, %s152
      %p154 = scmp.eq.s32.totalorder %s23, 0
      %p155 = por %p153, %p154
      %s157 = sadd.s32 %s156, 1
      %p160 = scmp.eq.s32.totalorder %s17, 1
      %p161 = scmp.ne.s32.totalorder %s156, %s158
      %p162 = scmp.eq.s32.totalorder %s17, 0
      %p163 = por %p161, %p162
      %p164 = scmp.ne.s32.totalorder %s156, %s158
      %p165 = scmp.eq.s32.totalorder %s22, 1
      %p166 = por %p164, %p165
      %p167 = scmp.ne.s32.totalorder %s158, %s159
      %p168 = scmp.eq.s32.totalorder %s22, 0
      %p169 = por %p167, %p168
      %p170 = scmp.ne.s32.totalorder %s158, %s159
      %p171 = scmp.eq.s32.totalorder %s23, 1
      %p172 = por %p170, %p171
      %p174 = scmp.ne.s32.totalorder %s159, %s173
      %p175 = scmp.eq.s32.totalorder %s23, 0
      %p176 = por %p174, %p175
      %s178 = sadd.s32 %s177, 1
      %p181 = scmp.eq.s32.totalorder %s17, 1
      %p182 = scmp.ne.s32.totalorder %s177, %s179
      %p183 = scmp.eq.s32.totalorder %s17, 0
      %p184 = por %p182, %p183
      %p185 = scmp.ne.s32.totalorder %s177, %s179
      %p186 = scmp.eq.s32.totalorder %s22, 1
      %p187 = por %p185, %p186
      %p188 = scmp.ne.s32.totalorder %s179, %s180
      %p189 = scmp.eq.s32.totalorder %s22, 0
      %p190 = por %p188, %p189
      %p191 = scmp.ne.s32.totalorder %s179, %s180
      %p192 = scmp.eq.s32.totalorder %s23, 1
      %p193 = por %p191, %p192
      %p195 = scmp.ne.s32.totalorder %s180, %s194
      %p196 = scmp.eq.s32.totalorder %s23, 0
      %p197 = por %p195, %p196
      %s198 = ssub.s32 %s17, %s24
      %p199 = scmp.eq.s32.totalorder %s198, 0
      %s201 = sadd.s32 %s200, 1
      %s202 = scalar_select %p199, %s200, %s201
      %p205 = pneg %p199
      %p206 = scmp.eq.s32.totalorder %s17, 1
      %p207 = por %p205, %p206
      %p208 = scmp.ne.s32.totalorder %s200, %s203
      %p209 = scmp.eq.s32.totalorder %s17, 0
      %p210 = por %p208, %p209
      %p211 = scmp.ne.s32.totalorder %s200, %s203
      %p212 = scmp.eq.s32.totalorder %s22, 1
      %p213 = por %p211, %p212
      %p214 = scmp.ne.s32.totalorder %s203, %s204
      %p215 = scmp.eq.s32.totalorder %s22, 0
      %p216 = por %p214, %p215
      %p217 = scmp.ne.s32.totalorder %s203, %s204
      %p218 = scmp.eq.s32.totalorder %s23, 1
      %p219 = por %p217, %p218
      %p221 = scmp.ne.s32.totalorder %s204, %s220
      %p222 = scmp.eq.s32.totalorder %s23, 0
      %p223 = por %p221, %p222
      %p224 = scmp.le.s32.totalorder 1, %s17
      %p225 = scmp.lt.s32.totalorder %s17, 3
      %p226 = pnand %p224, %p225
      %p227 = pneg %p226
      // Predicated region
      $region9: #{tpu_custom_call.1} parent=5 // pred_check
        _
      $region10: #{tpu_custom_call.1} parent=5 // pred_check_branch
        %229 = sbr.rel (%p226) target = $region12
      $region11: #{tpu_custom_call.1} parent=5 // pred_region
        %s230 = ssub.s32 %s17, 1
        // Predicated region
        $region13: #{tpu_custom_call.1} parent=11 // pred_check
          %p231 = pneg %p64
        $region14: #{tpu_custom_call.1} parent=11 // pred_check_branch
          %233 = sbr.rel (%p231) target = $region16
        $region15: #{tpu_custom_call.1} parent=11 // pred_region
          _
        $region16: #{tpu_custom_call.1} parent=11 // pred_fallthru
          _
        // Predicated region
        $region17: #{tpu_custom_call.1} parent=11 // pred_check
          %p234 = pneg %p85
        $region18: #{tpu_custom_call.1} parent=11 // pred_check_branch
          %236 = sbr.rel (%p234) target = $region20
        $region19: #{tpu_custom_call.1} parent=11 // pred_region
          _
        $region20: #{tpu_custom_call.1} parent=11 // pred_fallthru
          _
        // Predicated region
        $region21: #{tpu_custom_call.1} parent=11 // pred_check
          %p237 = pneg %p106
        $region22: #{tpu_custom_call.1} parent=11 // pred_check_branch
          %239 = sbr.rel (%p237) target = $region24
        $region23: #{tpu_custom_call.1} parent=11 // pred_region
          _
        $region24: #{tpu_custom_call.1} parent=11 // pred_fallthru
          _
        // Predicated region
        $region25: #{tpu_custom_call.1} parent=11 // pred_check
          %p240 = pneg %p127
        $region26: #{tpu_custom_call.1} parent=11 // pred_check_branch
          %242 = sbr.rel (%p240) target = $region28
        $region27: #{tpu_custom_call.1} parent=11 // pred_region
          _
        $region28: #{tpu_custom_call.1} parent=11 // pred_fallthru
          _
        // Predicated region
        $region29: #{tpu_custom_call.1} parent=11 // pred_check
          %p243 = pneg %p148
        $region30: #{tpu_custom_call.1} parent=11 // pred_check_branch
          %245 = sbr.rel (%p243) target = $region32
        $region31: #{tpu_custom_call.1} parent=11 // pred_region
          _
        $region32: #{tpu_custom_call.1} parent=11 // pred_fallthru
          _
        // Predicated region
        $region33: #{tpu_custom_call.1} parent=11 // pred_check
          %p246 = pneg %p169
        $region34: #{tpu_custom_call.1} parent=11 // pred_check_branch
          %248 = sbr.rel (%p246) target = $region36
        $region35: #{tpu_custom_call.1} parent=11 // pred_region
          _
        $region36: #{tpu_custom_call.1} parent=11 // pred_fallthru
          _
        // Predicated region
        $region37: #{tpu_custom_call.1} parent=11 // pred_check
          %p249 = pneg %p190
        $region38: #{tpu_custom_call.1} parent=11 // pred_check_branch
          %251 = sbr.rel (%p249) target = $region40
        $region39: #{tpu_custom_call.1} parent=11 // pred_region
          _
        $region40: #{tpu_custom_call.1} parent=11 // pred_fallthru
          _
      $region12: #{tpu_custom_call.1} parent=5 // pred_fallthru
        _
      %p252 = scmp.lt.s32.totalorder %s17, 2
      // Predicated region
      $region41: #{tpu_custom_call.1} parent=5 // pred_check
        %p253 = pneg %p252
      $region42: #{tpu_custom_call.1} parent=5 // pred_check_branch
        %255 = sbr.rel (%p253) target = $region44
      $region43: #{tpu_custom_call.1} parent=5 // pred_region
        // Predicated region
        $region45: #{tpu_custom_call.1} parent=43 // pred_check
          %p256 = pneg %p37
        $region46: #{tpu_custom_call.1} parent=43 // pred_check_branch
          %258 = sbr.rel (%p256) target = $region48
        $region47: #{tpu_custom_call.1} parent=43 // pred_region
          %p259 = scmp.lt.s32.totalorder %s17, 1
          %s260 = scalar_select %p259, %s17, 1
          %s261 = smul.addr %s260, 3
          %s262 = smul.addr %s261, 8
          %s263 = scalar_lea.vmem %s0, %s262
        $region48: #{tpu_custom_call.1} parent=43 // pred_fallthru
          _
      $region44: #{tpu_custom_call.1} parent=5 // pred_fallthru
        _
      %p264 = scmp.le.s32.totalorder 1, %s17
      %p265 = scmp.lt.s32.totalorder %s17, 3
      %p266 = pnand %p264, %p265
      %p267 = pneg %p266
      // Predicated region
      $region49: #{tpu_custom_call.1} parent=5 // pred_check
        _
      $region50: #{tpu_custom_call.1} parent=5 // pred_check_branch
        %269 = sbr.rel (%p266) target = $region52
      $region51: #{tpu_custom_call.1} parent=5 // pred_region
        %s270 = ssub.s32 %s17, 1
        %p271 = scmp.lt.s32.totalorder %s22, 1
        %s272 = scalar_select %p271, %s22, 1
        %s273 = smul.addr %s272, 3
        %s274 = smul.addr %s273, 8
        %s275 = scalar_lea.vmem %s0, %s274
        %p276 = pneg %p43
        %p277 = pneg %p40
        %p278 = pneg %p64
        %p279 = pneg %p61
        %p280 = pneg %p85
        %p281 = pneg %p82
        %p282 = pneg %p106
        %p283 = pneg %p103
        %p284 = pneg %p127
        %p285 = pneg %p124
        %p286 = pneg %p148
        %p287 = pneg %p145
        %p288 = pneg %p169
        %p289 = pneg %p166
        %p290 = pneg %p190
        %p291 = pneg %p187
        %p292 = pneg %p216
        %p293 = pneg %p213
        %s294 = sand.u32 %s203, 1
        %s295 = scalar_lea.sflag [#allocation4], %s294
        %s296 = sand.u32 %s203, 1
        %s297 = smul.addr %s296, 24
        %s298 = scalar_lea.vmem [#allocation3], %s297
        %p299 = scmp.lt.s32.totalorder %s22, 1
        %s300 = scalar_select %p299, %s22, 1
        %s301 = smul.addr %s300, 3
        %s302 = smul.addr %s301, 8
        %s303 = scalar_lea.vmem %s0, %s302
        %v304 = vld [vmem:[%s7] sm:$0x7]
        %v305 = vld [vmem:[%s303] sm:$0xff]
        %v306 = vld [vmem:[%s303 + $0x8] sm:$0xff]
        %v307 = vld [vmem:[%s303 + $0x10] sm:$0xff]
        %v308 = vld [vmem:[%s1] sm:$0xff]
        %s309 = scalar_lea.vmem %s1, 8
        %v310 = vld [vmem:[%s309] sm:$0xff]
        %314 = vrot.lane.b32.xlu0 %v305, 127
        %v315 = vpop.permute.xlu0 %314
        %316 = vrot.lane.b32.xlu0 %v306, 127
        %v317 = vpop.permute.xlu0 %316
        %318 = vrot.lane.b32.xlu0 %v307, 127
        %v319 = vpop.permute.xlu0 %318
        %vm320 = vcmask 1039360
        %v321 = vsel %vm320, %v315, %v317
        %v322 = vsel %vm320, %v317, %v319
        %vm326 = vcmask 64512
        %v328 = vsel %vm326, %v310, 0
        %330 = vmatprep.subr.mxu0 %v322
        %331 = vmatpush1.msra.mxu0 %v321
        %332 = vmatprep.subr.mxu0 0.0
        %333 = vmatpush1.msra.mxu0 0.0
        %334 = vmatprep.subr.mxu0 0.0
        %335 = vmatpush1.msra.mxu0 0.0
        %336 = vmatprep.subr.mxu0 0.0
        %337 = vmatpush1.msra.mxu0 0.0
        %338 = vmatprep.subr.mxu0 0.0
        %339 = vmatpush1.msra.mxu0 0.0
        %340 = vmatprep.subr.mxu0 0.0
        %341 = vmatpush1.msra.mxu0 0.0
        %342 = vmatprep.subr.mxu0 0.0
        %343 = vmatpush1.msra.mxu0 0.0
        %344 = vmatprep.subr.mxu0 0.0
        %345 = vmatpush1.msra.mxu0 0.0
        %346 = vmatprep.subr.mxu0 0.0
        %347 = vmatpush1.msra.mxu0 0.0
        %348 = vmatprep.subr.mxu0 0.0
        %349 = vmatpush1.msra.mxu0 0.0
        %350 = vmatprep.subr.mxu0 0.0
        %351 = vmatpush1.msra.mxu0 0.0
        %352 = vmatprep.subr.mxu0 0.0
        %353 = vmatpush1.msra.mxu0 0.0
        %354 = vmatprep.subr.mxu0 0.0
        %355 = vmatpush1.msra.mxu0 0.0
        %356 = vmatprep.subr.mxu0 0.0
        %357 = vmatpush1.msra.mxu0 0.0
        %358 = vmatprep.subr.mxu0 0.0
        %359 = vmatpush1.msra.mxu0 0.0
        %360 = vmatprep.subr.mxu0 0.0
        %361 = vmatpush1.msra.mxu0 0.0
        %362 = vmatprep.subr.mxu0 0.0
        %363 = vmatpush1.msra.mxu0 0.0
        %364 = vmatprep.subr.mxu0 0.0
        %365 = vmatpush1.msra.mxu0 0.0
        %366 = vmatprep.subr.mxu0 0.0
        %367 = vmatpush1.msra.mxu0 0.0
        %368 = vmatprep.subr.mxu0 0.0
        %369 = vmatpush1.msra.mxu0 0.0
        %370 = vmatprep.subr.mxu0 0.0
        %371 = vmatpush1.msra.mxu0 0.0
        %372 = vmatprep.subr.mxu0 0.0
        %373 = vmatpush1.msra.mxu0 0.0
        %374 = vmatprep.subr.mxu0 0.0
        %375 = vmatpush1.msra.mxu0 0.0
        %376 = vmatprep.subr.mxu0 0.0
        %377 = vmatpush1.msra.mxu0 0.0
        %378 = vmatprep.subr.mxu0 0.0
        %379 = vmatpush1.msra.mxu0 0.0
        %380 = vmatprep.subr.mxu0 0.0
        %381 = vmatpush1.msra.mxu0 0.0
        %382 = vmatprep.subr.mxu0 0.0
        %383 = vmatpush1.msra.mxu0 0.0
        %384 = vmatprep.subr.mxu0 0.0
        %385 = vmatpush1.msra.mxu0 0.0
        %386 = vmatprep.subr.mxu0 0.0
        %387 = vmatpush1.msra.mxu0 0.0
        %388 = vmatprep.subr.mxu0 0.0
        %389 = vmatpush1.msra.mxu0 0.0
        %390 = vmatprep.subr.mxu0 0.0
        %391 = vmatpush1.msra.mxu0 0.0
        %392 = vmatprep.subr.mxu0 0.0
        %393 = vmatpush1.msra.mxu0 0.0
        %394 = vmatprep.mubr.f32.mxu0 0.0
        %395 = vmatmul.mubr.f32.gmra.mrb[0].mxu0 %v328
        %v396 = vpop.f32.mrb[0].mxu0
        %v397 = vadd.f32 0.0, %v396
        %v398 = vpop.f32.mrb[0].mxu0
        %v399 = vadd.f32 0.0, %v398
        %400 = vdwg.mxu0
        %401 = vmatprep.subr.mxu0 0.0
        %402 = vmatpush1.msra.mxu0 %v319
        %403 = vmatprep.subr.mxu0 0.0
        %404 = vmatpush1.msra.mxu0 0.0
        %405 = vmatprep.subr.mxu0 0.0
        %406 = vmatpush1.msra.mxu0 0.0
        %407 = vmatprep.subr.mxu0 0.0
        %408 = vmatpush1.msra.mxu0 0.0
        %409 = vmatprep.subr.mxu0 0.0
        %410 = vmatpush1.msra.mxu0 0.0
        %411 = vmatprep.subr.mxu0 0.0
        %412 = vmatpush1.msra.mxu0 0.0
        %413 = vmatprep.subr.mxu0 0.0
        %414 = vmatpush1.msra.mxu0 0.0
        %415 = vmatprep.subr.mxu0 0.0
        %416 = vmatpush1.msra.mxu0 0.0
        %417 = vmatprep.subr.mxu0 0.0
        %418 = vmatpush1.msra.mxu0 0.0
        %419 = vmatprep.subr.mxu0 0.0
        %420 = vmatpush1.msra.mxu0 0.0
        %421 = vmatprep.subr.mxu0 0.0
        %422 = vmatpush1.msra.mxu0 0.0
        %423 = vmatprep.subr.mxu0 0.0
        %424 = vmatpush1.msra.mxu0 0.0
        %425 = vmatprep.subr.mxu0 0.0
        %426 = vmatpush1.msra.mxu0 0.0
        %427 = vmatprep.subr.mxu0 0.0
        %428 = vmatpush1.msra.mxu0 0.0
        %429 = vmatprep.subr.mxu0 0.0
        %430 = vmatpush1.msra.mxu0 0.0
        %431 = vmatprep.subr.mxu0 0.0
        %432 = vmatpush1.msra.mxu0 0.0
        %433 = vmatprep.subr.mxu0 0.0
        %434 = vmatpush1.msra.mxu0 0.0
        %435 = vmatprep.subr.mxu0 0.0
        %436 = vmatpush1.msra.mxu0 0.0
        %437 = vmatprep.subr.mxu0 0.0
        %438 = vmatpush1.msra.mxu0 0.0
        %439 = vmatprep.subr.mxu0 0.0
        %440 = vmatpush1.msra.mxu0 0.0
        %441 = vmatprep.subr.mxu0 0.0
        %442 = vmatpush1.msra.mxu0 0.0
        %443 = vmatprep.subr.mxu0 0.0
        %444 = vmatpush1.msra.mxu0 0.0
        %445 = vmatprep.subr.mxu0 0.0
        %446 = vmatpush1.msra.mxu0 0.0
        %447 = vmatprep.subr.mxu0 0.0
        %448 = vmatpush1.msra.mxu0 0.0
        %449 = vmatprep.subr.mxu0 0.0
        %450 = vmatpush1.msra.mxu0 0.0
        %451 = vmatprep.subr.mxu0 0.0
        %452 = vmatpush1.msra.mxu0 0.0
        %453 = vmatprep.subr.mxu0 0.0
        %454 = vmatpush1.msra.mxu0 0.0
        %455 = vmatprep.subr.mxu0 0.0
        %456 = vmatpush1.msra.mxu0 0.0
        %457 = vmatprep.subr.mxu0 0.0
        %458 = vmatpush1.msra.mxu0 0.0
        %459 = vmatprep.subr.mxu0 0.0
        %460 = vmatpush1.msra.mxu0 0.0
        %461 = vmatprep.subr.mxu0 0.0
        %462 = vmatpush1.msra.mxu0 0.0
        %463 = vmatprep.subr.mxu0 0.0
        %464 = vmatpush1.msra.mxu0 0.0
        %465 = vmatprep.mubr.f32.mxu0 0.0
        %466 = vmatmul.mubr.f32.gmra.mrb[0].mxu0 %v328
        %v467 = vpop.f32.mrb[0].mxu0
        %v468 = vadd.f32 0.0, %v467
        %v469 = vpop.f32.mrb[0].mxu0
        %470 = vdwg.mxu0
        %v472 = vsel %vm326, %v308, 0
        %474 = vmatprep.subr.mxu0 %v306
        %475 = vmatpush1.msra.mxu0 %v305
        %476 = vmatprep.subr.mxu0 0.0
        %477 = vmatpush1.msra.mxu0 0.0
        %478 = vmatprep.subr.mxu0 0.0
        %479 = vmatpush1.msra.mxu0 0.0
        %480 = vmatprep.subr.mxu0 0.0
        %481 = vmatpush1.msra.mxu0 0.0
        %482 = vmatprep.subr.mxu0 0.0
        %483 = vmatpush1.msra.mxu0 0.0
        %484 = vmatprep.subr.mxu0 0.0
        %485 = vmatpush1.msra.mxu0 0.0
        %486 = vmatprep.subr.mxu0 0.0
        %487 = vmatpush1.msra.mxu0 0.0
        %488 = vmatprep.subr.mxu0 0.0
        %489 = vmatpush1.msra.mxu0 0.0
        %490 = vmatprep.subr.mxu0 0.0
        %491 = vmatpush1.msra.mxu0 0.0
        %492 = vmatprep.subr.mxu0 0.0
        %493 = vmatpush1.msra.mxu0 0.0
        %494 = vmatprep.subr.mxu0 0.0
        %495 = vmatpush1.msra.mxu0 0.0
        %496 = vmatprep.subr.mxu0 0.0
        %497 = vmatpush1.msra.mxu0 0.0
        %498 = vmatprep.subr.mxu0 0.0
        %499 = vmatpush1.msra.mxu0 0.0
        %500 = vmatprep.subr.mxu0 0.0
        %501 = vmatpush1.msra.mxu0 0.0
        %502 = vmatprep.subr.mxu0 0.0
        %503 = vmatpush1.msra.mxu0 0.0
        %504 = vmatprep.subr.mxu0 0.0
        %505 = vmatpush1.msra.mxu0 0.0
        %506 = vmatprep.subr.mxu0 0.0
        %507 = vmatpush1.msra.mxu0 0.0
        %508 = vmatprep.subr.mxu0 0.0
        %509 = vmatpush1.msra.mxu0 0.0
        %510 = vmatprep.subr.mxu0 0.0
        %511 = vmatpush1.msra.mxu0 0.0
        %512 = vmatprep.subr.mxu0 0.0
        %513 = vmatpush1.msra.mxu0 0.0
        %514 = vmatprep.subr.mxu0 0.0
        %515 = vmatpush1.msra.mxu0 0.0
        %516 = vmatprep.subr.mxu0 0.0
        %517 = vmatpush1.msra.mxu0 0.0
        %518 = vmatprep.subr.mxu0 0.0
        %519 = vmatpush1.msra.mxu0 0.0
        %520 = vmatprep.subr.mxu0 0.0
        %521 = vmatpush1.msra.mxu0 0.0
        %522 = vmatprep.subr.mxu0 0.0
        %523 = vmatpush1.msra.mxu0 0.0
        %524 = vmatprep.subr.mxu0 0.0
        %525 = vmatpush1.msra.mxu0 0.0
        %526 = vmatprep.subr.mxu0 0.0
        %527 = vmatpush1.msra.mxu0 0.0
        %528 = vmatprep.subr.mxu0 0.0
        %529 = vmatpush1.msra.mxu0 0.0
        %530 = vmatprep.subr.mxu0 0.0
        %531 = vmatpush1.msra.mxu0 0.0
        %532 = vmatprep.subr.mxu0 0.0
        %533 = vmatpush1.msra.mxu0 0.0
        %534 = vmatprep.subr.mxu0 0.0
        %535 = vmatpush1.msra.mxu0 0.0
        %536 = vmatprep.subr.mxu0 0.0
        %537 = vmatpush1.msra.mxu0 0.0
        %538 = vmatprep.mubr.f32.mxu0 0.0
        %539 = vmatmul.mubr.f32.gmra.mrb[0].mxu0 %v472
        %v540 = vpop.f32.mrb[0].mxu0
        %v541 = vadd.f32 %v397, %v540
        %v542 = vpop.f32.mrb[0].mxu0
        %v543 = vadd.f32 %v399, %v542
        %544 = vdwg.mxu0
        %545 = vmatprep.subr.mxu0 0.0
        %546 = vmatpush1.msra.mxu0 %v307
        %547 = vmatprep.subr.mxu0 0.0
        %548 = vmatpush1.msra.mxu0 0.0
        %549 = vmatprep.subr.mxu0 0.0
        %550 = vmatpush1.msra.mxu0 0.0
        %551 = vmatprep.subr.mxu0 0.0
        %552 = vmatpush1.msra.mxu0 0.0
        %553 = vmatprep.subr.mxu0 0.0
        %554 = vmatpush1.msra.mxu0 0.0
        %555 = vmatprep.subr.mxu0 0.0
        %556 = vmatpush1.msra.mxu0 0.0
        %557 = vmatprep.subr.mxu0 0.0
        %558 = vmatpush1.msra.mxu0 0.0
        %559 = vmatprep.subr.mxu0 0.0
        %560 = vmatpush1.msra.mxu0 0.0
        %561 = vmatprep.subr.mxu0 0.0
        %562 = vmatpush1.msra.mxu0 0.0
        %563 = vmatprep.subr.mxu0 0.0
        %564 = vmatpush1.msra.mxu0 0.0
        %565 = vmatprep.subr.mxu0 0.0
        %566 = vmatpush1.msra.mxu0 0.0
        %567 = vmatprep.subr.mxu0 0.0
        %568 = vmatpush1.msra.mxu0 0.0
        %569 = vmatprep.subr.mxu0 0.0
        %570 = vmatpush1.msra.mxu0 0.0
        %571 = vmatprep.subr.mxu0 0.0
        %572 = vmatpush1.msra.mxu0 0.0
        %573 = vmatprep.subr.mxu0 0.0
        %574 = vmatpush1.msra.mxu0 0.0
        %575 = vmatprep.subr.mxu0 0.0
        %576 = vmatpush1.msra.mxu0 0.0
        %577 = vmatprep.subr.mxu0 0.0
        %578 = vmatpush1.msra.mxu0 0.0
        %579 = vmatprep.subr.mxu0 0.0
        %580 = vmatpush1.msra.mxu0 0.0
        %581 = vmatprep.subr.mxu0 0.0
        %582 = vmatpush1.msra.mxu0 0.0
        %583 = vmatprep.subr.mxu0 0.0
        %584 = vmatpush1.msra.mxu0 0.0
        %585 = vmatprep.subr.mxu0 0.0
        %586 = vmatpush1.msra.mxu0 0.0
        %587 = vmatprep.subr.mxu0 0.0
        %588 = vmatpush1.msra.mxu0 0.0
        %589 = vmatprep.subr.mxu0 0.0
        %590 = vmatpush1.msra.mxu0 0.0
        %591 = vmatprep.subr.mxu0 0.0
        %592 = vmatpush1.msra.mxu0 0.0
        %593 = vmatprep.subr.mxu0 0.0
        %594 = vmatpush1.msra.mxu0 0.0
        %595 = vmatprep.subr.mxu0 0.0
        %596 = vmatpush1.msra.mxu0 0.0
        %597 = vmatprep.subr.mxu0 0.0
        %598 = vmatpush1.msra.mxu0 0.0
        %599 = vmatprep.subr.mxu0 0.0
        %600 = vmatpush1.msra.mxu0 0.0
        %601 = vmatprep.subr.mxu0 0.0
        %602 = vmatpush1.msra.mxu0 0.0
        %603 = vmatprep.subr.mxu0 0.0
        %604 = vmatpush1.msra.mxu0 0.0
        %605 = vmatprep.subr.mxu0 0.0
        %606 = vmatpush1.msra.mxu0 0.0
        %607 = vmatprep.subr.mxu0 0.0
        %608 = vmatpush1.msra.mxu0 0.0
        %609 = vmatprep.mubr.f32.mxu0 0.0
        %610 = vmatmul.mubr.f32.gmra.mrb[0].mxu0 %v472
        %v611 = vpop.f32.mrb[0].mxu0
        %v612 = vadd.f32 %v468, %v611
        %v613 = vpop.f32.mrb[0].mxu0
        %614 = vdwg.mxu0
        %s615 = scalar_lea.vmem %s1, 16
        %v616 = vld [vmem:[%s615] sm:$0xff]
        %617 = vrot.lane.b32.xlu0 %v305, 126
        %v618 = vpop.permute.xlu0 %617
        %619 = vrot.lane.b32.xlu0 %v306, 126
        %v620 = vpop.permute.xlu0 %619
        %621 = vrot.lane.b32.xlu0 %v307, 126
        %v622 = vpop.permute.xlu0 %621
        %vm623 = vcmask 1031168
        %v624 = vsel %vm623, %v618, %v620
        %v625 = vsel %vm623, %v620, %v622
        %v630 = vsel %vm326, %v616, 0
        %632 = vmatprep.subr.mxu0 %v625
        %633 = vmatpush1.msra.mxu0 %v624
        %634 = vmatprep.subr.mxu0 0.0
        %635 = vmatpush1.msra.mxu0 0.0
        %636 = vmatprep.subr.mxu0 0.0
        %637 = vmatpush1.msra.mxu0 0.0
        %638 = vmatprep.subr.mxu0 0.0
        %639 = vmatpush1.msra.mxu0 0.0
        %640 = vmatprep.subr.mxu0 0.0
        %641 = vmatpush1.msra.mxu0 0.0
        %642 = vmatprep.subr.mxu0 0.0
        %643 = vmatpush1.msra.mxu0 0.0
        %644 = vmatprep.subr.mxu0 0.0
        %645 = vmatpush1.msra.mxu0 0.0
        %646 = vmatprep.subr.mxu0 0.0
        %647 = vmatpush1.msra.mxu0 0.0
        %648 = vmatprep.subr.mxu0 0.0
        %649 = vmatpush1.msra.mxu0 0.0
        %650 = vmatprep.subr.mxu0 0.0
        %651 = vmatpush1.msra.mxu0 0.0
        %652 = vmatprep.subr.mxu0 0.0
        %653 = vmatpush1.msra.mxu0 0.0
        %654 = vmatprep.subr.mxu0 0.0
        %655 = vmatpush1.msra.mxu0 0.0
        %656 = vmatprep.subr.mxu0 0.0
        %657 = vmatpush1.msra.mxu0 0.0
        %658 = vmatprep.subr.mxu0 0.0
        %659 = vmatpush1.msra.mxu0 0.0
        %660 = vmatprep.subr.mxu0 0.0
        %661 = vmatpush1.msra.mxu0 0.0
        %662 = vmatprep.subr.mxu0 0.0
        %663 = vmatpush1.msra.mxu0 0.0
        %664 = vmatprep.subr.mxu0 0.0
        %665 = vmatpush1.msra.mxu0 0.0
        %666 = vmatprep.subr.mxu0 0.0
        %667 = vmatpush1.msra.mxu0 0.0
        %668 = vmatprep.subr.mxu0 0.0
        %669 = vmatpush1.msra.mxu0 0.0
        %670 = vmatprep.subr.mxu0 0.0
        %671 = vmatpush1.msra.mxu0 0.0
        %672 = vmatprep.subr.mxu0 0.0
        %673 = vmatpush1.msra.mxu0 0.0
        %674 = vmatprep.subr.mxu0 0.0
        %675 = vmatpush1.msra.mxu0 0.0
        %676 = vmatprep.subr.mxu0 0.0
        %677 = vmatpush1.msra.mxu0 0.0
        %678 = vmatprep.subr.mxu0 0.0
        %679 = vmatpush1.msra.mxu0 0.0
        %680 = vmatprep.subr.mxu0 0.0
        %681 = vmatpush1.msra.mxu0 0.0
        %682 = vmatprep.subr.mxu0 0.0
        %683 = vmatpush1.msra.mxu0 0.0
        %684 = vmatprep.subr.mxu0 0.0
        %685 = vmatpush1.msra.mxu0 0.0
        %686 = vmatprep.subr.mxu0 0.0
        %687 = vmatpush1.msra.mxu0 0.0
        %688 = vmatprep.subr.mxu0 0.0
        %689 = vmatpush1.msra.mxu0 0.0
        %690 = vmatprep.subr.mxu0 0.0
        %691 = vmatpush1.msra.mxu0 0.0
        %692 = vmatprep.subr.mxu0 0.0
        %693 = vmatpush1.msra.mxu0 0.0
        %694 = vmatprep.subr.mxu0 0.0
        %695 = vmatpush1.msra.mxu0 0.0
        %696 = vmatprep.mubr.f32.mxu0 0.0
        %697 = vmatmul.mubr.f32.gmra.mrb[0].mxu0 %v630
        %v698 = vpop.f32.mrb[0].mxu0
        %v699 = vadd.f32 0.0, %v698
        %v700 = vpop.f32.mrb[0].mxu0
        %v701 = vadd.f32 0.0, %v700
        %702 = vdwg.mxu0
        %703 = vmatprep.subr.mxu0 0.0
        %704 = vmatpush1.msra.mxu0 %v622
        %705 = vmatprep.subr.mxu0 0.0
        %706 = vmatpush1.msra.mxu0 0.0
        %707 = vmatprep.subr.mxu0 0.0
        %708 = vmatpush1.msra.mxu0 0.0
        %709 = vmatprep.subr.mxu0 0.0
        %710 = vmatpush1.msra.mxu0 0.0
        %711 = vmatprep.subr.mxu0 0.0
        %712 = vmatpush1.msra.mxu0 0.0
        %713 = vmatprep.subr.mxu0 0.0
        %714 = vmatpush1.msra.mxu0 0.0
        %715 = vmatprep.subr.mxu0 0.0
        %716 = vmatpush1.msra.mxu0 0.0
        %717 = vmatprep.subr.mxu0 0.0
        %718 = vmatpush1.msra.mxu0 0.0
        %719 = vmatprep.subr.mxu0 0.0
        %720 = vmatpush1.msra.mxu0 0.0
        %721 = vmatprep.subr.mxu0 0.0
        %722 = vmatpush1.msra.mxu0 0.0
        %723 = vmatprep.subr.mxu0 0.0
        %724 = vmatpush1.msra.mxu0 0.0
        %725 = vmatprep.subr.mxu0 0.0
        %726 = vmatpush1.msra.mxu0 0.0
        %727 = vmatprep.subr.mxu0 0.0
        %728 = vmatpush1.msra.mxu0 0.0
        %729 = vmatprep.subr.mxu0 0.0
        %730 = vmatpush1.msra.mxu0 0.0
        %731 = vmatprep.subr.mxu0 0.0
        %732 = vmatpush1.msra.mxu0 0.0
        %733 = vmatprep.subr.mxu0 0.0
        %734 = vmatpush1.msra.mxu0 0.0
        %735 = vmatprep.subr.mxu0 0.0
        %736 = vmatpush1.msra.mxu0 0.0
        %737 = vmatprep.subr.mxu0 0.0
        %738 = vmatpush1.msra.mxu0 0.0
        %739 = vmatprep.subr.mxu0 0.0
        %740 = vmatpush1.msra.mxu0 0.0
        %741 = vmatprep.subr.mxu0 0.0
        %742 = vmatpush1.msra.mxu0 0.0
        %743 = vmatprep.subr.mxu0 0.0
        %744 = vmatpush1.msra.mxu0 0.0
        %745 = vmatprep.subr.mxu0 0.0
        %746 = vmatpush1.msra.mxu0 0.0
        %747 = vmatprep.subr.mxu0 0.0
        %748 = vmatpush1.msra.mxu0 0.0
        %749 = vmatprep.subr.mxu0 0.0
        %750 = vmatpush1.msra.mxu0 0.0
        %751 = vmatprep.subr.mxu0 0.0
        %752 = vmatpush1.msra.mxu0 0.0
        %753 = vmatprep.subr.mxu0 0.0
        %754 = vmatpush1.msra.mxu0 0.0
        %755 = vmatprep.subr.mxu0 0.0
        %756 = vmatpush1.msra.mxu0 0.0
        %757 = vmatprep.subr.mxu0 0.0
        %758 = vmatpush1.msra.mxu0 0.0
        %759 = vmatprep.subr.mxu0 0.0
        %760 = vmatpush1.msra.mxu0 0.0
        %761 = vmatprep.subr.mxu0 0.0
        %762 = vmatpush1.msra.mxu0 0.0
        %763 = vmatprep.subr.mxu0 0.0
        %764 = vmatpush1.msra.mxu0 0.0
        %765 = vmatprep.subr.mxu0 0.0
        %766 = vmatpush1.msra.mxu0 0.0
        %767 = vmatprep.mubr.f32.mxu0 0.0
        %768 = vmatmul.mubr.f32.gmra.mrb[0].mxu0 %v630
        %v769 = vpop.f32.mrb[0].mxu0
        %v770 = vadd.f32 0.0, %v769
        %v771 = vpop.f32.mrb[0].mxu0
        %772 = vdwg.mxu0
        %v773 = vadd.f32 %v541, %v699
        %v774 = vadd.f32 %v543, %v701
        %v775 = vadd.f32 %v612, %v770
        %s776 = scalar_lea.vmem %s1, 24
        %v777 = vld [vmem:[%s776] sm:$0xff]
        %778 = vrot.lane.b32.xlu0 %v305, 110
        %v779 = vpop.permute.xlu0 %778
        %780 = vrot.lane.b32.xlu0 %v306, 110
        %v781 = vpop.permute.xlu0 %780
        %782 = vrot.lane.b32.xlu0 %v307, 110
        %v783 = vpop.permute.xlu0 %782
        %vm784 = vcmask 900096
        %v785 = vsel %vm784, %v779, %v781
        %v786 = vsel %vm784, %v781, %v783
        %v791 = vsel %vm326, %v777, 0
        %793 = vmatprep.subr.mxu0 %v786
        %794 = vmatpush1.msra.mxu0 %v785
        %795 = vmatprep.subr.mxu0 0.0
        %796 = vmatpush1.msra.mxu0 0.0
        %797 = vmatprep.subr.mxu0 0.0
        %798 = vmatpush1.msra.mxu0 0.0
        %799 = vmatprep.subr.mxu0 0.0
        %800 = vmatpush1.msra.mxu0 0.0
        %801 = vmatprep.subr.mxu0 0.0
        %802 = vmatpush1.msra.mxu0 0.0
        %803 = vmatprep.subr.mxu0 0.0
        %804 = vmatpush1.msra.mxu0 0.0
        %805 = vmatprep.subr.mxu0 0.0
        %806 = vmatpush1.msra.mxu0 0.0
        %807 = vmatprep.subr.mxu0 0.0
        %808 = vmatpush1.msra.mxu0 0.0
        %809 = vmatprep.subr.mxu0 0.0
        %810 = vmatpush1.msra.mxu0 0.0
        %811 = vmatprep.subr.mxu0 0.0
        %812 = vmatpush1.msra.mxu0 0.0
        %813 = vmatprep.subr.mxu0 0.0
        %814 = vmatpush1.msra.mxu0 0.0
        %815 = vmatprep.subr.mxu0 0.0
        %816 = vmatpush1.msra.mxu0 0.0
        %817 = vmatprep.subr.mxu0 0.0
        %818 = vmatpush1.msra.mxu0 0.0
        %819 = vmatprep.subr.mxu0 0.0
        %820 = vmatpush1.msra.mxu0 0.0
        %821 = vmatprep.subr.mxu0 0.0
        %822 = vmatpush1.msra.mxu0 0.0
        %823 = vmatprep.subr.mxu0 0.0
        %824 = vmatpush1.msra.mxu0 0.0
        %825 = vmatprep.subr.mxu0 0.0
        %826 = vmatpush1.msra.mxu0 0.0
        %827 = vmatprep.subr.mxu0 0.0
        %828 = vmatpush1.msra.mxu0 0.0
        %829 = vmatprep.subr.mxu0 0.0
        %830 = vmatpush1.msra.mxu0 0.0
        %831 = vmatprep.subr.mxu0 0.0
        %832 = vmatpush1.msra.mxu0 0.0
        %833 = vmatprep.subr.mxu0 0.0
        %834 = vmatpush1.msra.mxu0 0.0
        %835 = vmatprep.subr.mxu0 0.0
        %836 = vmatpush1.msra.mxu0 0.0
        %837 = vmatprep.subr.mxu0 0.0
        %838 = vmatpush1.msra.mxu0 0.0
        %839 = vmatprep.subr.mxu0 0.0
        %840 = vmatpush1.msra.mxu0 0.0
        %841 = vmatprep.subr.mxu0 0.0
        %842 = vmatpush1.msra.mxu0 0.0
        %843 = vmatprep.subr.mxu0 0.0
        %844 = vmatpush1.msra.mxu0 0.0
        %845 = vmatprep.subr.mxu0 0.0
        %846 = vmatpush1.msra.mxu0 0.0
        %847 = vmatprep.subr.mxu0 0.0
        %848 = vmatpush1.msra.mxu0 0.0
        %849 = vmatprep.subr.mxu0 0.0
        %850 = vmatpush1.msra.mxu0 0.0
        %851 = vmatprep.subr.mxu0 0.0
        %852 = vmatpush1.msra.mxu0 0.0
        %853 = vmatprep.subr.mxu0 0.0
        %854 = vmatpush1.msra.mxu0 0.0
        %855 = vmatprep.subr.mxu0 0.0
        %856 = vmatpush1.msra.mxu0 0.0
        %857 = vmatprep.mubr.f32.mxu0 0.0
        %858 = vmatmul.mubr.f32.gmra.mrb[0].mxu0 %v791
        %v859 = vpop.f32.mrb[0].mxu0
        %v860 = vadd.f32 0.0, %v859
        %v861 = vpop.f32.mrb[0].mxu0
        %v862 = vadd.f32 0.0, %v861
        %863 = vdwg.mxu0
        %864 = vmatprep.subr.mxu0 0.0
        %865 = vmatpush1.msra.mxu0 %v783
        %866 = vmatprep.subr.mxu0 0.0
        %867 = vmatpush1.msra.mxu0 0.0
        %868 = vmatprep.subr.mxu0 0.0
        %869 = vmatpush1.msra.mxu0 0.0
        %870 = vmatprep.subr.mxu0 0.0
        %871 = vmatpush1.msra.mxu0 0.0
        %872 = vmatprep.subr.mxu0 0.0
        %873 = vmatpush1.msra.mxu0 0.0
        %874 = vmatprep.subr.mxu0 0.0
        %875 = vmatpush1.msra.mxu0 0.0
        %876 = vmatprep.subr.mxu0 0.0
        %877 = vmatpush1.msra.mxu0 0.0
        %878 = vmatprep.subr.mxu0 0.0
        %879 = vmatpush1.msra.mxu0 0.0
        %880 = vmatprep.subr.mxu0 0.0
        %881 = vmatpush1.msra.mxu0 0.0
        %882 = vmatprep.subr.mxu0 0.0
        %883 = vmatpush1.msra.mxu0 0.0
        %884 = vmatprep.subr.mxu0 0.0
        %885 = vmatpush1.msra.mxu0 0.0
        %886 = vmatprep.subr.mxu0 0.0
        %887 = vmatpush1.msra.mxu0 0.0
        %888 = vmatprep.subr.mxu0 0.0
        %889 = vmatpush1.msra.mxu0 0.0
        %890 = vmatprep.subr.mxu0 0.0
        %891 = vmatpush1.msra.mxu0 0.0
        %892 = vmatprep.subr.mxu0 0.0
        %893 = vmatpush1.msra.mxu0 0.0
        %894 = vmatprep.subr.mxu0 0.0
        %895 = vmatpush1.msra.mxu0 0.0
        %896 = vmatprep.subr.mxu0 0.0
        %897 = vmatpush1.msra.mxu0 0.0
        %898 = vmatprep.subr.mxu0 0.0
        %899 = vmatpush1.msra.mxu0 0.0
        %900 = vmatprep.subr.mxu0 0.0
        %901 = vmatpush1.msra.mxu0 0.0
        %902 = vmatprep.subr.mxu0 0.0
        %903 = vmatpush1.msra.mxu0 0.0
        %904 = vmatprep.subr.mxu0 0.0
        %905 = vmatpush1.msra.mxu0 0.0
        %906 = vmatprep.subr.mxu0 0.0
        %907 = vmatpush1.msra.mxu0 0.0
        %908 = vmatprep.subr.mxu0 0.0
        %909 = vmatpush1.msra.mxu0 0.0
        %910 = vmatprep.subr.mxu0 0.0
        %911 = vmatpush1.msra.mxu0 0.0
        %912 = vmatprep.subr.mxu0 0.0
        %913 = vmatpush1.msra.mxu0 0.0
        %914 = vmatprep.subr.mxu0 0.0
        %915 = vmatpush1.msra.mxu0 0.0
        %916 = vmatprep.subr.mxu0 0.0
        %917 = vmatpush1.msra.mxu0 0.0
        %918 = vmatprep.subr.mxu0 0.0
        %919 = vmatpush1.msra.mxu0 0.0
        %920 = vmatprep.subr.mxu0 0.0
        %921 = vmatpush1.msra.mxu0 0.0
        %922 = vmatprep.subr.mxu0 0.0
        %923 = vmatpush1.msra.mxu0 0.0
        %924 = vmatprep.subr.mxu0 0.0
        %925 = vmatpush1.msra.mxu0 0.0
        %926 = vmatprep.subr.mxu0 0.0
        %927 = vmatpush1.msra.mxu0 0.0
        %928 = vmatprep.mubr.f32.mxu0 0.0
        %929 = vmatmul.mubr.f32.gmra.mrb[0].mxu0 %v791
        %v930 = vpop.f32.mrb[0].mxu0
        %v931 = vadd.f32 0.0, %v930
        %v932 = vpop.f32.mrb[0].mxu0
        %933 = vdwg.mxu0
        %v934 = vadd.f32 %v773, %v860
        %v935 = vadd.f32 %v774, %v862
        %v936 = vadd.f32 %v775, %v931
        %s937 = scalar_lea.vmem %s1, 32
        %v938 = vld [vmem:[%s937] sm:$0xff]
        %939 = vrot.lane.b32.xlu0 %v305, 109
        %v940 = vpop.permute.xlu0 %939
        %941 = vrot.lane.b32.xlu0 %v306, 109
        %v942 = vpop.permute.xlu0 %941
        %943 = vrot.lane.b32.xlu0 %v307, 109
        %v944 = vpop.permute.xlu0 %943
        %vm945 = vcmask 891904
        %v946 = vsel %vm945, %v940, %v942
        %v947 = vsel %vm945, %v942, %v944
        %v952 = vsel %vm326, %v938, 0
        %954 = vmatprep.subr.mxu0 %v947
        %955 = vmatpush1.msra.mxu0 %v946
        %956 = vmatprep.subr.mxu0 0.0
        %957 = vmatpush1.msra.mxu0 0.0
        %958 = vmatprep.subr.mxu0 0.0
        %959 = vmatpush1.msra.mxu0 0.0
        %960 = vmatprep.subr.mxu0 0.0
        %961 = vmatpush1.msra.mxu0 0.0
        %962 = vmatprep.subr.mxu0 0.0
        %963 = vmatpush1.msra.mxu0 0.0
        %964 = vmatprep.subr.mxu0 0.0
        %965 = vmatpush1.msra.mxu0 0.0
        %966 = vmatprep.subr.mxu0 0.0
        %967 = vmatpush1.msra.mxu0 0.0
        %968 = vmatprep.subr.mxu0 0.0
        %969 = vmatpush1.msra.mxu0 0.0
        %970 = vmatprep.subr.mxu0 0.0
        %971 = vmatpush1.msra.mxu0 0.0
        %972 = vmatprep.subr.mxu0 0.0
        %973 = vmatpush1.msra.mxu0 0.0
        %974 = vmatprep.subr.mxu0 0.0
        %975 = vmatpush1.msra.mxu0 0.0
        %976 = vmatprep.subr.mxu0 0.0
        %977 = vmatpush1.msra.mxu0 0.0
        %978 = vmatprep.subr.mxu0 0.0
        %979 = vmatpush1.msra.mxu0 0.0
        %980 = vmatprep.subr.mxu0 0.0
        %981 = vmatpush1.msra.mxu0 0.0
        %982 = vmatprep.subr.mxu0 0.0
        %983 = vmatpush1.msra.mxu0 0.0
        %984 = vmatprep.subr.mxu0 0.0
        %985 = vmatpush1.msra.mxu0 0.0
        %986 = vmatprep.subr.mxu0 0.0
        %987 = vmatpush1.msra.mxu0 0.0
        %988 = vmatprep.subr.mxu0 0.0
        %989 = vmatpush1.msra.mxu0 0.0
        %990 = vmatprep.subr.mxu0 0.0
        %991 = vmatpush1.msra.mxu0 0.0
        %992 = vmatprep.subr.mxu0 0.0
        %993 = vmatpush1.msra.mxu0 0.0
        %994 = vmatprep.subr.mxu0 0.0
        %995 = vmatpush1.msra.mxu0 0.0
        %996 = vmatprep.subr.mxu0 0.0
        %997 = vmatpush1.msra.mxu0 0.0
        %998 = vmatprep.subr.mxu0 0.0
        %999 = vmatpush1.msra.mxu0 0.0
        %1000 = vmatprep.subr.mxu0 0.0
        %1001 = vmatpush1.msra.mxu0 0.0
        %1002 = vmatprep.subr.mxu0 0.0
        %1003 = vmatpush1.msra.mxu0 0.0
        %1004 = vmatprep.subr.mxu0 0.0
        %1005 = vmatpush1.msra.mxu0 0.0
        %1006 = vmatprep.subr.mxu0 0.0
        %1007 = vmatpush1.msra.mxu0 0.0
        %1008 = vmatprep.subr.mxu0 0.0
        %1009 = vmatpush1.msra.mxu0 0.0
        %1010 = vmatprep.subr.mxu0 0.0
        %1011 = vmatpush1.msra.mxu0 0.0
        %1012 = vmatprep.subr.mxu0 0.0
        %1013 = vmatpush1.msra.mxu0 0.0
        %1014 = vmatprep.subr.mxu0 0.0
        %1015 = vmatpush1.msra.mxu0 0.0
        %1016 = vmatprep.subr.mxu0 0.0
        %1017 = vmatpush1.msra.mxu0 0.0
        %1018 = vmatprep.mubr.f32.mxu0 0.0
        %1019 = vmatmul.mubr.f32.gmra.mrb[0].mxu0 %v952
        %v1020 = vpop.f32.mrb[0].mxu0
        %v1021 = vadd.f32 0.0, %v1020
        %v1022 = vpop.f32.mrb[0].mxu0
        %v1023 = vadd.f32 0.0, %v1022
        %1024 = vdwg.mxu0
        %1025 = vmatprep.subr.mxu0 0.0
        %1026 = vmatpush1.msra.mxu0 %v944
        %1027 = vmatprep.subr.mxu0 0.0
        %1028 = vmatpush1.msra.mxu0 0.0
        %1029 = vmatprep.subr.mxu0 0.0
        %1030 = vmatpush1.msra.mxu0 0.0
        %1031 = vmatprep.subr.mxu0 0.0
        %1032 = vmatpush1.msra.mxu0 0.0
        %1033 = vmatprep.subr.mxu0 0.0
        %1034 = vmatpush1.msra.mxu0 0.0
        %1035 = vmatprep.subr.mxu0 0.0
        %1036 = vmatpush1.msra.mxu0 0.0
        %1037 = vmatprep.subr.mxu0 0.0
        %1038 = vmatpush1.msra.mxu0 0.0
        %1039 = vmatprep.subr.mxu0 0.0
        %1040 = vmatpush1.msra.mxu0 0.0
        %1041 = vmatprep.subr.mxu0 0.0
        %1042 = vmatpush1.msra.mxu0 0.0
        %1043 = vmatprep.subr.mxu0 0.0
        %1044 = vmatpush1.msra.mxu0 0.0
        %1045 = vmatprep.subr.mxu0 0.0
        %1046 = vmatpush1.msra.mxu0 0.0
        %1047 = vmatprep.subr.mxu0 0.0
        %1048 = vmatpush1.msra.mxu0 0.0
        %1049 = vmatprep.subr.mxu0 0.0
        %1050 = vmatpush1.msra.mxu0 0.0
        %1051 = vmatprep.subr.mxu0 0.0
        %1052 = vmatpush1.msra.mxu0 0.0
        %1053 = vmatprep.subr.mxu0 0.0
        %1054 = vmatpush1.msra.mxu0 0.0
        %1055 = vmatprep.subr.mxu0 0.0
        %1056 = vmatpush1.msra.mxu0 0.0
        %1057 = vmatprep.subr.mxu0 0.0
        %1058 = vmatpush1.msra.mxu0 0.0
        %1059 = vmatprep.subr.mxu0 0.0
        %1060 = vmatpush1.msra.mxu0 0.0
        %1061 = vmatprep.subr.mxu0 0.0
        %1062 = vmatpush1.msra.mxu0 0.0
        %1063 = vmatprep.subr.mxu0 0.0
        %1064 = vmatpush1.msra.mxu0 0.0
        %1065 = vmatprep.subr.mxu0 0.0
        %1066 = vmatpush1.msra.mxu0 0.0
        %1067 = vmatprep.subr.mxu0 0.0
        %1068 = vmatpush1.msra.mxu0 0.0
        %1069 = vmatprep.subr.mxu0 0.0
        %1070 = vmatpush1.msra.mxu0 0.0
        %1071 = vmatprep.subr.mxu0 0.0
        %1072 = vmatpush1.msra.mxu0 0.0
        %1073 = vmatprep.subr.mxu0 0.0
        %1074 = vmatpush1.msra.mxu0 0.0
        %1075 = vmatprep.subr.mxu0 0.0
        %1076 = vmatpush1.msra.mxu0 0.0
        %1077 = vmatprep.subr.mxu0 0.0
        %1078 = vmatpush1.msra.mxu0 0.0
        %1079 = vmatprep.subr.mxu0 0.0
        %1080 = vmatpush1.msra.mxu0 0.0
        %1081 = vmatprep.subr.mxu0 0.0
        %1082 = vmatpush1.msra.mxu0 0.0
        %1083 = vmatprep.subr.mxu0 0.0
        %1084 = vmatpush1.msra.mxu0 0.0
        %1085 = vmatprep.subr.mxu0 0.0
        %1086 = vmatpush1.msra.mxu0 0.0
        %1087 = vmatprep.subr.mxu0 0.0
        %1088 = vmatpush1.msra.mxu0 0.0
        %1089 = vmatprep.mubr.f32.mxu0 0.0
        %1090 = vmatmul.mubr.f32.gmra.mrb[0].mxu0 %v952
        %v1091 = vpop.f32.mrb[0].mxu0
        %v1092 = vadd.f32 0.0, %v1091
        %v1093 = vpop.f32.mrb[0].mxu0
        %1094 = vdwg.mxu0
        %v1095 = vadd.f32 %v934, %v1021
        %v1096 = vadd.f32 %v935, %v1023
        %v1097 = vadd.f32 %v936, %v1092
        %s1098 = scalar_lea.vmem %s1, 40
        %v1099 = vld [vmem:[%s1098] sm:$0xff]
        %1100 = vrot.lane.b32.xlu0 %v305, 108
        %v1101 = vpop.permute.xlu0 %1100
        %1102 = vrot.lane.b32.xlu0 %v306, 108
        %v1103 = vpop.permute.xlu0 %1102
        %1104 = vrot.lane.b32.xlu0 %v307, 108
        %v1105 = vpop.permute.xlu0 %1104
        %vm1106 = vcmask 883712
        %v1107 = vsel %vm1106, %v1101, %v1103
        %v1108 = vsel %vm1106, %v1103, %v1105
        %v1113 = vsel %vm326, %v1099, 0
        %1115 = vmatprep.subr.mxu0 %v1108
        %1116 = vmatpush1.msra.mxu0 %v1107
        %1117 = vmatprep.subr.mxu0 0.0
        %1118 = vmatpush1.msra.mxu0 0.0
        %1119 = vmatprep.subr.mxu0 0.0
        %1120 = vmatpush1.msra.mxu0 0.0
        %1121 = vmatprep.subr.mxu0 0.0
        %1122 = vmatpush1.msra.mxu0 0.0
        %1123 = vmatprep.subr.mxu0 0.0
        %1124 = vmatpush1.msra.mxu0 0.0
        %1125 = vmatprep.subr.mxu0 0.0
        %1126 = vmatpush1.msra.mxu0 0.0
        %1127 = vmatprep.subr.mxu0 0.0
        %1128 = vmatpush1.msra.mxu0 0.0
        %1129 = vmatprep.subr.mxu0 0.0
        %1130 = vmatpush1.msra.mxu0 0.0
        %1131 = vmatprep.subr.mxu0 0.0
        %1132 = vmatpush1.msra.mxu0 0.0
        %1133 = vmatprep.subr.mxu0 0.0
        %1134 = vmatpush1.msra.mxu0 0.0
        %1135 = vmatprep.subr.mxu0 0.0
        %1136 = vmatpush1.msra.mxu0 0.0
        %1137 = vmatprep.subr.mxu0 0.0
        %1138 = vmatpush1.msra.mxu0 0.0
        %1139 = vmatprep.subr.mxu0 0.0
        %1140 = vmatpush1.msra.mxu0 0.0
        %1141 = vmatprep.subr.mxu0 0.0
        %1142 = vmatpush1.msra.mxu0 0.0
        %1143 = vmatprep.subr.mxu0 0.0
        %1144 = vmatpush1.msra.mxu0 0.0
        %1145 = vmatprep.subr.mxu0 0.0
        %1146 = vmatpush1.msra.mxu0 0.0
        %1147 = vmatprep.subr.mxu0 0.0
        %1148 = vmatpush1.msra.mxu0 0.0
        %1149 = vmatprep.subr.mxu0 0.0
        %1150 = vmatpush1.msra.mxu0 0.0
        %1151 = vmatprep.subr.mxu0 0.0
        %1152 = vmatpush1.msra.mxu0 0.0
        %1153 = vmatprep.subr.mxu0 0.0
        %1154 = vmatpush1.msra.mxu0 0.0
        %1155 = vmatprep.subr.mxu0 0.0
        %1156 = vmatpush1.msra.mxu0 0.0
        %1157 = vmatprep.subr.mxu0 0.0
        %1158 = vmatpush1.msra.mxu0 0.0
        %1159 = vmatprep.subr.mxu0 0.0
        %1160 = vmatpush1.msra.mxu0 0.0
        %1161 = vmatprep.subr.mxu0 0.0
        %1162 = vmatpush1.msra.mxu0 0.0
        %1163 = vmatprep.subr.mxu0 0.0
        %1164 = vmatpush1.msra.mxu0 0.0
        %1165 = vmatprep.subr.mxu0 0.0
        %1166 = vmatpush1.msra.mxu0 0.0
        %1167 = vmatprep.subr.mxu0 0.0
        %1168 = vmatpush1.msra.mxu0 0.0
        %1169 = vmatprep.subr.mxu0 0.0
        %1170 = vmatpush1.msra.mxu0 0.0
        %1171 = vmatprep.subr.mxu0 0.0
        %1172 = vmatpush1.msra.mxu0 0.0
        %1173 = vmatprep.subr.mxu0 0.0
        %1174 = vmatpush1.msra.mxu0 0.0
        %1175 = vmatprep.subr.mxu0 0.0
        %1176 = vmatpush1.msra.mxu0 0.0
        %1177 = vmatprep.subr.mxu0 0.0
        %1178 = vmatpush1.msra.mxu0 0.0
        %1179 = vmatprep.mubr.f32.mxu0 0.0
        %1180 = vmatmul.mubr.f32.gmra.mrb[0].mxu0 %v1113
        %v1181 = vpop.f32.mrb[0].mxu0
        %v1182 = vadd.f32 0.0, %v1181
        %v1183 = vpop.f32.mrb[0].mxu0
        %v1184 = vadd.f32 0.0, %v1183
        %1185 = vdwg.mxu0
        %1186 = vmatprep.subr.mxu0 0.0
        %1187 = vmatpush1.msra.mxu0 %v1105
        %1188 = vmatprep.subr.mxu0 0.0
        %1189 = vmatpush1.msra.mxu0 0.0
        %1190 = vmatprep.subr.mxu0 0.0
        %1191 = vmatpush1.msra.mxu0 0.0
        %1192 = vmatprep.subr.mxu0 0.0
        %1193 = vmatpush1.msra.mxu0 0.0
        %1194 = vmatprep.subr.mxu0 0.0
        %1195 = vmatpush1.msra.mxu0 0.0
        %1196 = vmatprep.subr.mxu0 0.0
        %1197 = vmatpush1.msra.mxu0 0.0
        %1198 = vmatprep.subr.mxu0 0.0
        %1199 = vmatpush1.msra.mxu0 0.0
        %1200 = vmatprep.subr.mxu0 0.0
        %1201 = vmatpush1.msra.mxu0 0.0
        %1202 = vmatprep.subr.mxu0 0.0
        %1203 = vmatpush1.msra.mxu0 0.0
        %1204 = vmatprep.subr.mxu0 0.0
        %1205 = vmatpush1.msra.mxu0 0.0
        %1206 = vmatprep.subr.mxu0 0.0
        %1207 = vmatpush1.msra.mxu0 0.0
        %1208 = vmatprep.subr.mxu0 0.0
        %1209 = vmatpush1.msra.mxu0 0.0
        %1210 = vmatprep.subr.mxu0 0.0
        %1211 = vmatpush1.msra.mxu0 0.0
        %1212 = vmatprep.subr.mxu0 0.0
        %1213 = vmatpush1.msra.mxu0 0.0
        %1214 = vmatprep.subr.mxu0 0.0
        %1215 = vmatpush1.msra.mxu0 0.0
        %1216 = vmatprep.subr.mxu0 0.0
        %1217 = vmatpush1.msra.mxu0 0.0
        %1218 = vmatprep.subr.mxu0 0.0
        %1219 = vmatpush1.msra.mxu0 0.0
        %1220 = vmatprep.subr.mxu0 0.0
        %1221 = vmatpush1.msra.mxu0 0.0
        %1222 = vmatprep.subr.mxu0 0.0
        %1223 = vmatpush1.msra.mxu0 0.0
        %1224 = vmatprep.subr.mxu0 0.0
        %1225 = vmatpush1.msra.mxu0 0.0
        %1226 = vmatprep.subr.mxu0 0.0
        %1227 = vmatpush1.msra.mxu0 0.0
        %1228 = vmatprep.subr.mxu0 0.0
        %1229 = vmatpush1.msra.mxu0 0.0
        %1230 = vmatprep.subr.mxu0 0.0
        %1231 = vmatpush1.msra.mxu0 0.0
        %1232 = vmatprep.subr.mxu0 0.0
        %1233 = vmatpush1.msra.mxu0 0.0
        %1234 = vmatprep.subr.mxu0 0.0
        %1235 = vmatpush1.msra.mxu0 0.0
        %1236 = vmatprep.subr.mxu0 0.0
        %1237 = vmatpush1.msra.mxu0 0.0
        %1238 = vmatprep.subr.mxu0 0.0
        %1239 = vmatpush1.msra.mxu0 0.0
        %1240 = vmatprep.subr.mxu0 0.0
        %1241 = vmatpush1.msra.mxu0 0.0
        %1242 = vmatprep.subr.mxu0 0.0
        %1243 = vmatpush1.msra.mxu0 0.0
        %1244 = vmatprep.subr.mxu0 0.0
        %1245 = vmatpush1.msra.mxu0 0.0
        %1246 = vmatprep.subr.mxu0 0.0
        %1247 = vmatpush1.msra.mxu0 0.0
        %1248 = vmatprep.subr.mxu0 0.0
        %1249 = vmatpush1.msra.mxu0 0.0
        %1250 = vmatprep.mubr.f32.mxu0 0.0
        %1251 = vmatmul.mubr.f32.gmra.mrb[0].mxu0 %v1113
        %v1252 = vpop.f32.mrb[0].mxu0
        %v1253 = vadd.f32 0.0, %v1252
        %v1254 = vpop.f32.mrb[0].mxu0
        %1255 = vdwg.mxu0
        %v1256 = vadd.f32 %v1095, %v1182
        %v1257 = vadd.f32 %v1096, %v1184
        %v1258 = vadd.f32 %v1097, %v1253
        %s1259 = scalar_lea.vmem %s1, 48
        %v1260 = vld [vmem:[%s1259] sm:$0xff]
        %1261 = vrot.lane.b32.xlu0 %v305, 92
        %v1262 = vpop.permute.xlu0 %1261
        %1263 = vrot.lane.b32.xlu0 %v306, 92
        %v1264 = vpop.permute.xlu0 %1263
        %1265 = vrot.lane.b32.xlu0 %v307, 92
        %v1266 = vpop.permute.xlu0 %1265
        %vm1267 = vcmask 752640
        %v1268 = vsel %vm1267, %v1262, %v1264
        %v1269 = vsel %vm1267, %v1264, %v1266
        %v1274 = vsel %vm326, %v1260, 0
        %1276 = vmatprep.subr.mxu0 %v1269
        %1277 = vmatpush1.msra.mxu0 %v1268
        %1278 = vmatprep.subr.mxu0 0.0
        %1279 = vmatpush1.msra.mxu0 0.0
        %1280 = vmatprep.subr.mxu0 0.0
        %1281 = vmatpush1.msra.mxu0 0.0
        %1282 = vmatprep.subr.mxu0 0.0
        %1283 = vmatpush1.msra.mxu0 0.0
        %1284 = vmatprep.subr.mxu0 0.0
        %1285 = vmatpush1.msra.mxu0 0.0
        %1286 = vmatprep.subr.mxu0 0.0
        %1287 = vmatpush1.msra.mxu0 0.0
        %1288 = vmatprep.subr.mxu0 0.0
        %1289 = vmatpush1.msra.mxu0 0.0
        %1290 = vmatprep.subr.mxu0 0.0
        %1291 = vmatpush1.msra.mxu0 0.0
        %1292 = vmatprep.subr.mxu0 0.0
        %1293 = vmatpush1.msra.mxu0 0.0
        %1294 = vmatprep.subr.mxu0 0.0
        %1295 = vmatpush1.msra.mxu0 0.0
        %1296 = vmatprep.subr.mxu0 0.0
        %1297 = vmatpush1.msra.mxu0 0.0
        %1298 = vmatprep.subr.mxu0 0.0
        %1299 = vmatpush1.msra.mxu0 0.0
        %1300 = vmatprep.subr.mxu0 0.0
        %1301 = vmatpush1.msra.mxu0 0.0
        %1302 = vmatprep.subr.mxu0 0.0
        %1303 = vmatpush1.msra.mxu0 0.0
        %1304 = vmatprep.subr.mxu0 0.0
        %1305 = vmatpush1.msra.mxu0 0.0
        %1306 = vmatprep.subr.mxu0 0.0
        %1307 = vmatpush1.msra.mxu0 0.0
        %1308 = vmatprep.subr.mxu0 0.0
        %1309 = vmatpush1.msra.mxu0 0.0
        %1310 = vmatprep.subr.mxu0 0.0
        %1311 = vmatpush1.msra.mxu0 0.0
        %1312 = vmatprep.subr.mxu0 0.0
        %1313 = vmatpush1.msra.mxu0 0.0
        %1314 = vmatprep.subr.mxu0 0.0
        %1315 = vmatpush1.msra.mxu0 0.0
        %1316 = vmatprep.subr.mxu0 0.0
        %1317 = vmatpush1.msra.mxu0 0.0
        %1318 = vmatprep.subr.mxu0 0.0
        %1319 = vmatpush1.msra.mxu0 0.0
        %1320 = vmatprep.subr.mxu0 0.0
        %1321 = vmatpush1.msra.mxu0 0.0
        %1322 = vmatprep.subr.mxu0 0.0
        %1323 = vmatpush1.msra.mxu0 0.0
        %1324 = vmatprep.subr.mxu0 0.0
        %1325 = vmatpush1.msra.mxu0 0.0
        %1326 = vmatprep.subr.mxu0 0.0
        %1327 = vmatpush1.msra.mxu0 0.0
        %1328 = vmatprep.subr.mxu0 0.0
        %1329 = vmatpush1.msra.mxu0 0.0
        %1330 = vmatprep.subr.mxu0 0.0
        %1331 = vmatpush1.msra.mxu0 0.0
        %1332 = vmatprep.subr.mxu0 0.0
        %1333 = vmatpush1.msra.mxu0 0.0
        %1334 = vmatprep.subr.mxu0 0.0
        %1335 = vmatpush1.msra.mxu0 0.0
        %1336 = vmatprep.subr.mxu0 0.0
        %1337 = vmatpush1.msra.mxu0 0.0
        %1338 = vmatprep.subr.mxu0 0.0
        %1339 = vmatpush1.msra.mxu0 0.0
        %1340 = vmatprep.mubr.f32.mxu0 0.0
        %1341 = vmatmul.mubr.f32.gmra.mrb[0].mxu0 %v1274
        %v1342 = vpop.f32.mrb[0].mxu0
        %v1343 = vadd.f32 0.0, %v1342
        %v1344 = vpop.f32.mrb[0].mxu0
        %v1345 = vadd.f32 0.0, %v1344
        %1346 = vdwg.mxu0
        %1347 = vmatprep.subr.mxu0 0.0
        %1348 = vmatpush1.msra.mxu0 %v1266
        %1349 = vmatprep.subr.mxu0 0.0
        %1350 = vmatpush1.msra.mxu0 0.0
        %1351 = vmatprep.subr.mxu0 0.0
        %1352 = vmatpush1.msra.mxu0 0.0
        %1353 = vmatprep.subr.mxu0 0.0
        %1354 = vmatpush1.msra.mxu0 0.0
        %1355 = vmatprep.subr.mxu0 0.0
        %1356 = vmatpush1.msra.mxu0 0.0
        %1357 = vmatprep.subr.mxu0 0.0
        %1358 = vmatpush1.msra.mxu0 0.0
        %1359 = vmatprep.subr.mxu0 0.0
        %1360 = vmatpush1.msra.mxu0 0.0
        %1361 = vmatprep.subr.mxu0 0.0
        %1362 = vmatpush1.msra.mxu0 0.0
        %1363 = vmatprep.subr.mxu0 0.0
        %1364 = vmatpush1.msra.mxu0 0.0
        %1365 = vmatprep.subr.mxu0 0.0
        %1366 = vmatpush1.msra.mxu0 0.0
        %1367 = vmatprep.subr.mxu0 0.0
        %1368 = vmatpush1.msra.mxu0 0.0
        %1369 = vmatprep.subr.mxu0 0.0
        %1370 = vmatpush1.msra.mxu0 0.0
        %1371 = vmatprep.subr.mxu0 0.0
        %1372 = vmatpush1.msra.mxu0 0.0
        %1373 = vmatprep.subr.mxu0 0.0
        %1374 = vmatpush1.msra.mxu0 0.0
        %1375 = vmatprep.subr.mxu0 0.0
        %1376 = vmatpush1.msra.mxu0 0.0
        %1377 = vmatprep.subr.mxu0 0.0
        %1378 = vmatpush1.msra.mxu0 0.0
        %1379 = vmatprep.subr.mxu0 0.0
        %1380 = vmatpush1.msra.mxu0 0.0
        %1381 = vmatprep.subr.mxu0 0.0
        %1382 = vmatpush1.msra.mxu0 0.0
        %1383 = vmatprep.subr.mxu0 0.0
        %1384 = vmatpush1.msra.mxu0 0.0
        %1385 = vmatprep.subr.mxu0 0.0
        %1386 = vmatpush1.msra.mxu0 0.0
        %1387 = vmatprep.subr.mxu0 0.0
        %1388 = vmatpush1.msra.mxu0 0.0
        %1389 = vmatprep.subr.mxu0 0.0
        %1390 = vmatpush1.msra.mxu0 0.0
        %1391 = vmatprep.subr.mxu0 0.0
        %1392 = vmatpush1.msra.mxu0 0.0
        %1393 = vmatprep.subr.mxu0 0.0
        %1394 = vmatpush1.msra.mxu0 0.0
        %1395 = vmatprep.subr.mxu0 0.0
        %1396 = vmatpush1.msra.mxu0 0.0
        %1397 = vmatprep.subr.mxu0 0.0
        %1398 = vmatpush1.msra.mxu0 0.0
        %1399 = vmatprep.subr.mxu0 0.0
        %1400 = vmatpush1.msra.mxu0 0.0
        %1401 = vmatprep.subr.mxu0 0.0
        %1402 = vmatpush1.msra.mxu0 0.0
        %1403 = vmatprep.subr.mxu0 0.0
        %1404 = vmatpush1.msra.mxu0 0.0
        %1405 = vmatprep.subr.mxu0 0.0
        %1406 = vmatpush1.msra.mxu0 0.0
        %1407 = vmatprep.subr.mxu0 0.0
        %1408 = vmatpush1.msra.mxu0 0.0
        %1409 = vmatprep.subr.mxu0 0.0
        %1410 = vmatpush1.msra.mxu0 0.0
        %1411 = vmatprep.mubr.f32.mxu0 0.0
        %1412 = vmatmul.mubr.f32.gmra.mrb[0].mxu0 %v1274
        %v1413 = vpop.f32.mrb[0].mxu0
        %v1414 = vadd.f32 0.0, %v1413
        %v1415 = vpop.f32.mrb[0].mxu0
        %1416 = vdwg.mxu0
        %v1417 = vadd.f32 %v1256, %v1343
        %v1418 = vadd.f32 %v1257, %v1345
        %v1419 = vadd.f32 %v1258, %v1414
        %s1420 = scalar_lea.vmem %s1, 56
        %v1421 = vld [vmem:[%s1420] sm:$0xff]
        %1422 = vrot.lane.b32.xlu0 %v305, 91
        %v1423 = vpop.permute.xlu0 %1422
        %1424 = vrot.lane.b32.xlu0 %v306, 91
        %v1425 = vpop.permute.xlu0 %1424
        %1426 = vrot.lane.b32.xlu0 %v307, 91
        %v1427 = vpop.permute.xlu0 %1426
        %vm1428 = vcmask 744448
        %v1429 = vsel %vm1428, %v1423, %v1425
        %v1430 = vsel %vm1428, %v1425, %v1427
        %v1435 = vsel %vm326, %v1421, 0
        %1437 = vmatprep.subr.mxu0 %v1430
        %1438 = vmatpush1.msra.mxu0 %v1429
        %1439 = vmatprep.subr.mxu0 0.0
        %1440 = vmatpush1.msra.mxu0 0.0
        %1441 = vmatprep.subr.mxu0 0.0
        %1442 = vmatpush1.msra.mxu0 0.0
        %1443 = vmatprep.subr.mxu0 0.0
        %1444 = vmatpush1.msra.mxu0 0.0
        %1445 = vmatprep.subr.mxu0 0.0
        %1446 = vmatpush1.msra.mxu0 0.0
        %1447 = vmatprep.subr.mxu0 0.0
        %1448 = vmatpush1.msra.mxu0 0.0
        %1449 = vmatprep.subr.mxu0 0.0
        %1450 = vmatpush1.msra.mxu0 0.0
        %1451 = vmatprep.subr.mxu0 0.0
        %1452 = vmatpush1.msra.mxu0 0.0
        %1453 = vmatprep.subr.mxu0 0.0
        %1454 = vmatpush1.msra.mxu0 0.0
        %1455 = vmatprep.subr.mxu0 0.0
        %1456 = vmatpush1.msra.mxu0 0.0
        %1457 = vmatprep.subr.mxu0 0.0
        %1458 = vmatpush1.msra.mxu0 0.0
        %1459 = vmatprep.subr.mxu0 0.0
        %1460 = vmatpush1.msra.mxu0 0.0
        %1461 = vmatprep.subr.mxu0 0.0
        %1462 = vmatpush1.msra.mxu0 0.0
        %1463 = vmatprep.subr.mxu0 0.0
        %1464 = vmatpush1.msra.mxu0 0.0
        %1465 = vmatprep.subr.mxu0 0.0
        %1466 = vmatpush1.msra.mxu0 0.0
        %1467 = vmatprep.subr.mxu0 0.0
        %1468 = vmatpush1.msra.mxu0 0.0
        %1469 = vmatprep.subr.mxu0 0.0
        %1470 = vmatpush1.msra.mxu0 0.0
        %1471 = vmatprep.subr.mxu0 0.0
        %1472 = vmatpush1.msra.mxu0 0.0
        %1473 = vmatprep.subr.mxu0 0.0
        %1474 = vmatpush1.msra.mxu0 0.0
        %1475 = vmatprep.subr.mxu0 0.0
        %1476 = vmatpush1.msra.mxu0 0.0
        %1477 = vmatprep.subr.mxu0 0.0
        %1478 = vmatpush1.msra.mxu0 0.0
        %1479 = vmatprep.subr.mxu0 0.0
        %1480 = vmatpush1.msra.mxu0 0.0
        %1481 = vmatprep.subr.mxu0 0.0
        %1482 = vmatpush1.msra.mxu0 0.0
        %1483 = vmatprep.subr.mxu0 0.0
        %1484 = vmatpush1.msra.mxu0 0.0
        %1485 = vmatprep.subr.mxu0 0.0
        %1486 = vmatpush1.msra.mxu0 0.0
        %1487 = vmatprep.subr.mxu0 0.0
        %1488 = vmatpush1.msra.mxu0 0.0
        %1489 = vmatprep.subr.mxu0 0.0
        %1490 = vmatpush1.msra.mxu0 0.0
        %1491 = vmatprep.subr.mxu0 0.0
        %1492 = vmatpush1.msra.mxu0 0.0
        %1493 = vmatprep.subr.mxu0 0.0
        %1494 = vmatpush1.msra.mxu0 0.0
        %1495 = vmatprep.subr.mxu0 0.0
        %1496 = vmatpush1.msra.mxu0 0.0
        %1497 = vmatprep.subr.mxu0 0.0
        %1498 = vmatpush1.msra.mxu0 0.0
        %1499 = vmatprep.subr.mxu0 0.0
        %1500 = vmatpush1.msra.mxu0 0.0
        %1501 = vmatprep.mubr.f32.mxu0 0.0
        %1502 = vmatmul.mubr.f32.gmra.mrb[0].mxu0 %v1435
        %v1503 = vpop.f32.mrb[0].mxu0
        %v1504 = vadd.f32 0.0, %v1503
        %v1505 = vpop.f32.mrb[0].mxu0
        %v1506 = vadd.f32 0.0, %v1505
        %1507 = vdwg.mxu0
        %1508 = vmatprep.subr.mxu0 0.0
        %1509 = vmatpush1.msra.mxu0 %v1427
        %1510 = vmatprep.subr.mxu0 0.0
        %1511 = vmatpush1.msra.mxu0 0.0
        %1512 = vmatprep.subr.mxu0 0.0
        %1513 = vmatpush1.msra.mxu0 0.0
        %1514 = vmatprep.subr.mxu0 0.0
        %1515 = vmatpush1.msra.mxu0 0.0
        %1516 = vmatprep.subr.mxu0 0.0
        %1517 = vmatpush1.msra.mxu0 0.0
        %1518 = vmatprep.subr.mxu0 0.0
        %1519 = vmatpush1.msra.mxu0 0.0
        %1520 = vmatprep.subr.mxu0 0.0
        %1521 = vmatpush1.msra.mxu0 0.0
        %1522 = vmatprep.subr.mxu0 0.0
        %1523 = vmatpush1.msra.mxu0 0.0
        %1524 = vmatprep.subr.mxu0 0.0
        %1525 = vmatpush1.msra.mxu0 0.0
        %1526 = vmatprep.subr.mxu0 0.0
        %1527 = vmatpush1.msra.mxu0 0.0
        %1528 = vmatprep.subr.mxu0 0.0
        %1529 = vmatpush1.msra.mxu0 0.0
        %1530 = vmatprep.subr.mxu0 0.0
        %1531 = vmatpush1.msra.mxu0 0.0
        %1532 = vmatprep.subr.mxu0 0.0
        %1533 = vmatpush1.msra.mxu0 0.0
        %1534 = vmatprep.subr.mxu0 0.0
        %1535 = vmatpush1.msra.mxu0 0.0
        %1536 = vmatprep.subr.mxu0 0.0
        %1537 = vmatpush1.msra.mxu0 0.0
        %1538 = vmatprep.subr.mxu0 0.0
        %1539 = vmatpush1.msra.mxu0 0.0
        %1540 = vmatprep.subr.mxu0 0.0
        %1541 = vmatpush1.msra.mxu0 0.0
        %1542 = vmatprep.subr.mxu0 0.0
        %1543 = vmatpush1.msra.mxu0 0.0
        %1544 = vmatprep.subr.mxu0 0.0
        %1545 = vmatpush1.msra.mxu0 0.0
        %1546 = vmatprep.subr.mxu0 0.0
        %1547 = vmatpush1.msra.mxu0 0.0
        %1548 = vmatprep.subr.mxu0 0.0
        %1549 = vmatpush1.msra.mxu0 0.0
        %1550 = vmatprep.subr.mxu0 0.0
        %1551 = vmatpush1.msra.mxu0 0.0
        %1552 = vmatprep.subr.mxu0 0.0
        %1553 = vmatpush1.msra.mxu0 0.0
        %1554 = vmatprep.subr.mxu0 0.0
        %1555 = vmatpush1.msra.mxu0 0.0
        %1556 = vmatprep.subr.mxu0 0.0
        %1557 = vmatpush1.msra.mxu0 0.0
        %1558 = vmatprep.subr.mxu0 0.0
        %1559 = vmatpush1.msra.mxu0 0.0
        %1560 = vmatprep.subr.mxu0 0.0
        %1561 = vmatpush1.msra.mxu0 0.0
        %1562 = vmatprep.subr.mxu0 0.0
        %1563 = vmatpush1.msra.mxu0 0.0
        %1564 = vmatprep.subr.mxu0 0.0
        %1565 = vmatpush1.msra.mxu0 0.0
        %1566 = vmatprep.subr.mxu0 0.0
        %1567 = vmatpush1.msra.mxu0 0.0
        %1568 = vmatprep.subr.mxu0 0.0
        %1569 = vmatpush1.msra.mxu0 0.0
        %1570 = vmatprep.subr.mxu0 0.0
        %1571 = vmatpush1.msra.mxu0 0.0
        %1572 = vmatprep.mubr.f32.mxu0 0.0
        %1573 = vmatmul.mubr.f32.gmra.mrb[0].mxu0 %v1435
        %v1574 = vpop.f32.mrb[0].mxu0
        %v1575 = vadd.f32 0.0, %v1574
        %v1576 = vpop.f32.mrb[0].mxu0
        %1577 = vdwg.mxu0
        %v1578 = vadd.f32 %v1417, %v1504
        %v1579 = vadd.f32 %v1418, %v1506
        %v1580 = vadd.f32 %v1419, %v1575
        %s1581 = scalar_lea.vmem %s1, 64
        %v1582 = vld [vmem:[%s1581] sm:$0xff]
        %1583 = vrot.lane.b32.xlu0 %v305, 90
        %v1584 = vpop.permute.xlu0 %1583
        %1585 = vrot.lane.b32.xlu0 %v306, 90
        %v1586 = vpop.permute.xlu0 %1585
        %1587 = vrot.lane.b32.xlu0 %v307, 90
        %v1588 = vpop.permute.xlu0 %1587
        %vm1589 = vcmask 736256
        %v1590 = vsel %vm1589, %v1584, %v1586
        %v1591 = vsel %vm1589, %v1586, %v1588
        %v1596 = vsel %vm326, %v1582, 0
        %1598 = vmatprep.subr.mxu0 %v1591
        %1599 = vmatpush1.msra.mxu0 %v1590
        %1600 = vmatprep.subr.mxu0 0.0
        %1601 = vmatpush1.msra.mxu0 0.0
        %1602 = vmatprep.subr.mxu0 0.0
        %1603 = vmatpush1.msra.mxu0 0.0
        %1604 = vmatprep.subr.mxu0 0.0
        %1605 = vmatpush1.msra.mxu0 0.0
        %1606 = vmatprep.subr.mxu0 0.0
        %1607 = vmatpush1.msra.mxu0 0.0
        %1608 = vmatprep.subr.mxu0 0.0
        %1609 = vmatpush1.msra.mxu0 0.0
        %1610 = vmatprep.subr.mxu0 0.0
        %1611 = vmatpush1.msra.mxu0 0.0
        %1612 = vmatprep.subr.mxu0 0.0
        %1613 = vmatpush1.msra.mxu0 0.0
        %1614 = vmatprep.subr.mxu0 0.0
        %1615 = vmatpush1.msra.mxu0 0.0
        %1616 = vmatprep.subr.mxu0 0.0
        %1617 = vmatpush1.msra.mxu0 0.0
        %1618 = vmatprep.subr.mxu0 0.0
        %1619 = vmatpush1.msra.mxu0 0.0
        %1620 = vmatprep.subr.mxu0 0.0
        %1621 = vmatpush1.msra.mxu0 0.0
        %1622 = vmatprep.subr.mxu0 0.0
        %1623 = vmatpush1.msra.mxu0 0.0
        %1624 = vmatprep.subr.mxu0 0.0
        %1625 = vmatpush1.msra.mxu0 0.0
        %1626 = vmatprep.subr.mxu0 0.0
        %1627 = vmatpush1.msra.mxu0 0.0
        %1628 = vmatprep.subr.mxu0 0.0
        %1629 = vmatpush1.msra.mxu0 0.0
        %1630 = vmatprep.subr.mxu0 0.0
        %1631 = vmatpush1.msra.mxu0 0.0
        %1632 = vmatprep.subr.mxu0 0.0
        %1633 = vmatpush1.msra.mxu0 0.0
        %1634 = vmatprep.subr.mxu0 0.0
        %1635 = vmatpush1.msra.mxu0 0.0
        %1636 = vmatprep.subr.mxu0 0.0
        %1637 = vmatpush1.msra.mxu0 0.0
        %1638 = vmatprep.subr.mxu0 0.0
        %1639 = vmatpush1.msra.mxu0 0.0
        %1640 = vmatprep.subr.mxu0 0.0
        %1641 = vmatpush1.msra.mxu0 0.0
        %1642 = vmatprep.subr.mxu0 0.0
        %1643 = vmatpush1.msra.mxu0 0.0
        %1644 = vmatprep.subr.mxu0 0.0
        %1645 = vmatpush1.msra.mxu0 0.0
        %1646 = vmatprep.subr.mxu0 0.0
        %1647 = vmatpush1.msra.mxu0 0.0
        %1648 = vmatprep.subr.mxu0 0.0
        %1649 = vmatpush1.msra.mxu0 0.0
        %1650 = vmatprep.subr.mxu0 0.0
        %1651 = vmatpush1.msra.mxu0 0.0
        %1652 = vmatprep.subr.mxu0 0.0
        %1653 = vmatpush1.msra.mxu0 0.0
        %1654 = vmatprep.subr.mxu0 0.0
        %1655 = vmatpush1.msra.mxu0 0.0
        %1656 = vmatprep.subr.mxu0 0.0
        %1657 = vmatpush1.msra.mxu0 0.0
        %1658 = vmatprep.subr.mxu0 0.0
        %1659 = vmatpush1.msra.mxu0 0.0
        %1660 = vmatprep.subr.mxu0 0.0
        %1661 = vmatpush1.msra.mxu0 0.0
        %1662 = vmatprep.mubr.f32.mxu0 0.0
        %1663 = vmatmul.mubr.f32.gmra.mrb[0].mxu0 %v1596
        %v1664 = vpop.f32.mrb[0].mxu0
        %v1665 = vadd.f32 0.0, %v1664
        %v1666 = vpop.f32.mrb[0].mxu0
        %v1667 = vadd.f32 0.0, %v1666
        %1668 = vdwg.mxu0
        %1669 = vmatprep.subr.mxu0 0.0
        %1670 = vmatpush1.msra.mxu0 %v1588
        %1671 = vmatprep.subr.mxu0 0.0
        %1672 = vmatpush1.msra.mxu0 0.0
        %1673 = vmatprep.subr.mxu0 0.0
        %1674 = vmatpush1.msra.mxu0 0.0
        %1675 = vmatprep.subr.mxu0 0.0
        %1676 = vmatpush1.msra.mxu0 0.0
        %1677 = vmatprep.subr.mxu0 0.0
        %1678 = vmatpush1.msra.mxu0 0.0
        %1679 = vmatprep.subr.mxu0 0.0
        %1680 = vmatpush1.msra.mxu0 0.0
        %1681 = vmatprep.subr.mxu0 0.0
        %1682 = vmatpush1.msra.mxu0 0.0
        %1683 = vmatprep.subr.mxu0 0.0
        %1684 = vmatpush1.msra.mxu0 0.0
        %1685 = vmatprep.subr.mxu0 0.0
        %1686 = vmatpush1.msra.mxu0 0.0
        %1687 = vmatprep.subr.mxu0 0.0
        %1688 = vmatpush1.msra.mxu0 0.0
        %1689 = vmatprep.subr.mxu0 0.0
        %1690 = vmatpush1.msra.mxu0 0.0
        %1691 = vmatprep.subr.mxu0 0.0
        %1692 = vmatpush1.msra.mxu0 0.0
        %1693 = vmatprep.subr.mxu0 0.0
        %1694 = vmatpush1.msra.mxu0 0.0
        %1695 = vmatprep.subr.mxu0 0.0
        %1696 = vmatpush1.msra.mxu0 0.0
        %1697 = vmatprep.subr.mxu0 0.0
        %1698 = vmatpush1.msra.mxu0 0.0
        %1699 = vmatprep.subr.mxu0 0.0
        %1700 = vmatpush1.msra.mxu0 0.0
        %1701 = vmatprep.subr.mxu0 0.0
        %1702 = vmatpush1.msra.mxu0 0.0
        %1703 = vmatprep.subr.mxu0 0.0
        %1704 = vmatpush1.msra.mxu0 0.0
        %1705 = vmatprep.subr.mxu0 0.0
        %1706 = vmatpush1.msra.mxu0 0.0
        %1707 = vmatprep.subr.mxu0 0.0
        %1708 = vmatpush1.msra.mxu0 0.0
        %1709 = vmatprep.subr.mxu0 0.0
        %1710 = vmatpush1.msra.mxu0 0.0
        %1711 = vmatprep.subr.mxu0 0.0
        %1712 = vmatpush1.msra.mxu0 0.0
        %1713 = vmatprep.subr.mxu0 0.0
        %1714 = vmatpush1.msra.mxu0 0.0
        %1715 = vmatprep.subr.mxu0 0.0
        %1716 = vmatpush1.msra.mxu0 0.0
        %1717 = vmatprep.subr.mxu0 0.0
        %1718 = vmatpush1.msra.mxu0 0.0
        %1719 = vmatprep.subr.mxu0 0.0
        %1720 = vmatpush1.msra.mxu0 0.0
        %1721 = vmatprep.subr.mxu0 0.0
        %1722 = vmatpush1.msra.mxu0 0.0
        %1723 = vmatprep.subr.mxu0 0.0
        %1724 = vmatpush1.msra.mxu0 0.0
        %1725 = vmatprep.subr.mxu0 0.0
        %1726 = vmatpush1.msra.mxu0 0.0
        %1727 = vmatprep.subr.mxu0 0.0
        %1728 = vmatpush1.msra.mxu0 0.0
        %1729 = vmatprep.subr.mxu0 0.0
        %1730 = vmatpush1.msra.mxu0 0.0
        %1731 = vmatprep.subr.mxu0 0.0
        %1732 = vmatpush1.msra.mxu0 0.0
        %1733 = vmatprep.mubr.f32.mxu0 0.0
        %1734 = vmatmul.mubr.f32.gmra.mrb[0].mxu0 %v1596
        %v1735 = vpop.f32.mrb[0].mxu0
        %v1736 = vadd.f32 0.0, %v1735
        %v1737 = vpop.f32.mrb[0].mxu0
        %1738 = vdwg.mxu0
        %v1739 = vadd.f32 %v1578, %v1665
        %v1740 = vadd.f32 %v1579, %v1667
        %v1741 = vadd.f32 %v1580, %v1736
        %v1742 = vld [vmem:[%s2] sm:$0xff]
        %1744 = vset.pattern.permute.xlu0 0
        %1745 = vperm.xlu0 %1744, %v1742
        %v1746 = vpop.permute.xlu0 %1745
        %v1748 = vadd.f32 %v1739, %v1746
        %v1749 = vadd.f32 %v1740, %v1746
        %v1750 = vadd.f32 %v1741, %v1746
        %v1751 = vmul.f32 %v1748, 0.5
        %v1752 = vmul.f32 %v1749, 0.5
        %v1753 = vmul.f32 %v1750, 0.5
        %v1754 = vmul.f32 %v1748, %v1748
        %v1755 = vmul.f32 %v1749, %v1749
        %v1756 = vmul.f32 %v1750, %v1750
        %v1757 = vmul.f32 %v1754, %v1748
        %v1758 = vmul.f32 %v1755, %v1749
        %v1759 = vmul.f32 %v1756, %v1750
        %v1760 = vmul.f32 %v1757, 0.044715
        %v1761 = vmul.f32 %v1758, 0.044715
        %v1762 = vmul.f32 %v1759, 0.044715
        %v1763 = vadd.f32 %v1748, %v1760
        %v1764 = vadd.f32 %v1749, %v1761
        %v1765 = vadd.f32 %v1750, %v1762
        %v1766 = vmul.f32 %v1763, 0.7978846
        %v1767 = vmul.f32 %v1764, 0.7978846
        %v1768 = vmul.f32 %v1765, 0.7978846
        %v1769 = vtanh.pop %v1766
        %v1770 = vtanh.pop %v1767
        %v1771 = vtanh.pop %v1768
        %v1772 = vadd.f32 %v1769, 1.0
        %v1773 = vadd.f32 %v1770, 1.0
        %v1774 = vadd.f32 %v1771, 1.0
        %v1775 = vmul.f32 %v1751, %v1772
        %v1776 = vmul.f32 %v1752, %v1773
        %v1777 = vmul.f32 %v1753, %v1774
        %v1779 = vlaneseq
        %v1780 = vshrl.u32 %v1779, 7
        %v1781 = vsub.s32 0, %v1780
        %v1782 = vrot.slane %v304, %v1781
        %v1783 = vlaneseq
        %v1784 = vshrl.u32 %v1783, 7
        %v1785 = vsub.s32 1, %v1784
        %v1786 = vrot.slane %v304, %v1785
        %v1787 = vlaneseq
        %v1788 = vshrl.u32 %v1787, 7
        %v1789 = vsub.s32 2, %v1788
        %v1790 = vrot.slane %v304, %v1789
        %v1794 = vmul.f32 %v1775, %v1782
        %v1795 = vmul.f32 %v1776, %v1786
        %v1796 = vmul.f32 %v1777, %v1790
        %1797 = vst [vmem:[#allocation2] sm:$0xff] 0.0
        %1798 = vst [vmem:[#allocation2 + $0x8] sm:$0xff] 0.0
        %vm1799 = vcmask 867328
        %1800 = vst.msk [vmem:[#allocation2 + $0x10] sm:$0xff] %vm1799, 0.0
        %1804 = vrot.lane.b32.xlu0 %v1794, 19
        %v1805 = vpop.permute.xlu0 %1804
        %1806 = vrot.lane.b32.xlu0 %v1795, 19
        %v1807 = vpop.permute.xlu0 %1806
        %1808 = vrot.lane.b32.xlu0 %v1796, 19
        %v1809 = vpop.permute.xlu0 %1808
        %vm1810 = vcmask 154624
        %v1811 = vsel %vm1810, %v1805, %v1807
        %v1812 = vsel %vm1810, %v1807, %v1809
        %vm1816 = vcmask 1047704
        %1817 = vst.msk [vmem:[#allocation2] sm:$0xff] %vm1816, %v1805
        %1818 = vst [vmem:[#allocation2 + $0x8] sm:$0xff] %v1811
        %vm1819 = vcmask 711680
        %1820 = vst.msk [vmem:[#allocation2 + $0x10] sm:$0xff] %vm1819, %v1812
        %v1821 = vld [vmem:[#allocation2] sm:$0xff]
        %v1822 = vld [vmem:[#allocation2 + $0x8] sm:$0xff]
        %v1823 = vld [vmem:[#allocation2 + $0x10] sm:$0xff]
        %v1824 = vld [vmem:[%s3] sm:$0xff]
        %s1825 = scalar_lea.vmem %s3, 8
        %v1826 = vld [vmem:[%s1825] sm:$0xff]
        %1830 = vrot.lane.b32.xlu0 %v1821, 127
        %v1831 = vpop.permute.xlu0 %1830
        %1832 = vrot.lane.b32.xlu0 %v1822, 127
        %v1833 = vpop.permute.xlu0 %1832
        %1834 = vrot.lane.b32.xlu0 %v1823, 127
        %v1835 = vpop.permute.xlu0 %1834
        %v1836 = vsel %vm320, %v1831, %v1833
        %v1837 = vsel %vm320, %v1833, %v1835
        %v1842 = vsel %vm326, %v1826, 0
        %1844 = vmatprep.subr.mxu0 %v1837
        %1845 = vmatpush1.msra.mxu0 %v1836
        %1846 = vmatprep.subr.mxu0 0.0
        %1847 = vmatpush1.msra.mxu0 0.0
        %1848 = vmatprep.subr.mxu0 0.0
        %1849 = vmatpush1.msra.mxu0 0.0
        %1850 = vmatprep.subr.mxu0 0.0
        %1851 = vmatpush1.msra.mxu0 0.0
        %1852 = vmatprep.subr.mxu0 0.0
        %1853 = vmatpush1.msra.mxu0 0.0
        %1854 = vmatprep.subr.mxu0 0.0
        %1855 = vmatpush1.msra.mxu0 0.0
        %1856 = vmatprep.subr.mxu0 0.0
        %1857 = vmatpush1.msra.mxu0 0.0
        %1858 = vmatprep.subr.mxu0 0.0
        %1859 = vmatpush1.msra.mxu0 0.0
        %1860 = vmatprep.subr.mxu0 0.0
        %1861 = vmatpush1.msra.mxu0 0.0
        %1862 = vmatprep.subr.mxu0 0.0
        %1863 = vmatpush1.msra.mxu0 0.0
        %1864 = vmatprep.subr.mxu0 0.0
        %1865 = vmatpush1.msra.mxu0 0.0
        %1866 = vmatprep.subr.mxu0 0.0
        %1867 = vmatpush1.msra.mxu0 0.0
        %1868 = vmatprep.subr.mxu0 0.0
        %1869 = vmatpush1.msra.mxu0 0.0
        %1870 = vmatprep.subr.mxu0 0.0
        %1871 = vmatpush1.msra.mxu0 0.0
        %1872 = vmatprep.subr.mxu0 0.0
        %1873 = vmatpush1.msra.mxu0 0.0
        %1874 = vmatprep.subr.mxu0 0.0
        %1875 = vmatpush1.msra.mxu0 0.0
        %1876 = vmatprep.subr.mxu0 0.0
        %1877 = vmatpush1.msra.mxu0 0.0
        %1878 = vmatprep.subr.mxu0 0.0
        %1879 = vmatpush1.msra.mxu0 0.0
        %1880 = vmatprep.subr.mxu0 0.0
        %1881 = vmatpush1.msra.mxu0 0.0
        %1882 = vmatprep.subr.mxu0 0.0
        %1883 = vmatpush1.msra.mxu0 0.0
        %1884 = vmatprep.subr.mxu0 0.0
        %1885 = vmatpush1.msra.mxu0 0.0
        %1886 = vmatprep.subr.mxu0 0.0
        %1887 = vmatpush1.msra.mxu0 0.0
        %1888 = vmatprep.subr.mxu0 0.0
        %1889 = vmatpush1.msra.mxu0 0.0
        %1890 = vmatprep.subr.mxu0 0.0
        %1891 = vmatpush1.msra.mxu0 0.0
        %1892 = vmatprep.subr.mxu0 0.0
        %1893 = vmatpush1.msra.mxu0 0.0
        %1894 = vmatprep.subr.mxu0 0.0
        %1895 = vmatpush1.msra.mxu0 0.0
        %1896 = vmatprep.subr.mxu0 0.0
        %1897 = vmatpush1.msra.mxu0 0.0
        %1898 = vmatprep.subr.mxu0 0.0
        %1899 = vmatpush1.msra.mxu0 0.0
        %1900 = vmatprep.subr.mxu0 0.0
        %1901 = vmatpush1.msra.mxu0 0.0
        %1902 = vmatprep.subr.mxu0 0.0
        %1903 = vmatpush1.msra.mxu0 0.0
        %1904 = vmatprep.subr.mxu0 0.0
        %1905 = vmatpush1.msra.mxu0 0.0
        %1906 = vmatprep.subr.mxu0 0.0
        %1907 = vmatpush1.msra.mxu0 0.0
        %1908 = vmatprep.mubr.f32.mxu0 0.0
        %1909 = vmatmul.mubr.f32.gmra.mrb[0].mxu0 %v1842
        %v1910 = vpop.f32.mrb[0].mxu0
        %v1911 = vadd.f32 0.0, %v1910
        %v1912 = vpop.f32.mrb[0].mxu0
        %v1913 = vadd.f32 0.0, %v1912
        %1914 = vdwg.mxu0
        %1915 = vmatprep.subr.mxu0 0.0
        %1916 = vmatpush1.msra.mxu0 %v1835
        %1917 = vmatprep.subr.mxu0 0.0
        %1918 = vmatpush1.msra.mxu0 0.0
        %1919 = vmatprep.subr.mxu0 0.0
        %1920 = vmatpush1.msra.mxu0 0.0
        %1921 = vmatprep.subr.mxu0 0.0
        %1922 = vmatpush1.msra.mxu0 0.0
        %1923 = vmatprep.subr.mxu0 0.0
        %1924 = vmatpush1.msra.mxu0 0.0
        %1925 = vmatprep.subr.mxu0 0.0
        %1926 = vmatpush1.msra.mxu0 0.0
        %1927 = vmatprep.subr.mxu0 0.0
        %1928 = vmatpush1.msra.mxu0 0.0
        %1929 = vmatprep.subr.mxu0 0.0
        %1930 = vmatpush1.msra.mxu0 0.0
        %1931 = vmatprep.subr.mxu0 0.0
        %1932 = vmatpush1.msra.mxu0 0.0
        %1933 = vmatprep.subr.mxu0 0.0
        %1934 = vmatpush1.msra.mxu0 0.0
        %1935 = vmatprep.subr.mxu0 0.0
        %1936 = vmatpush1.msra.mxu0 0.0
        %1937 = vmatprep.subr.mxu0 0.0
        %1938 = vmatpush1.msra.mxu0 0.0
        %1939 = vmatprep.subr.mxu0 0.0
        %1940 = vmatpush1.msra.mxu0 0.0
        %1941 = vmatprep.subr.mxu0 0.0
        %1942 = vmatpush1.msra.mxu0 0.0
        %1943 = vmatprep.subr.mxu0 0.0
        %1944 = vmatpush1.msra.mxu0 0.0
        %1945 = vmatprep.subr.mxu0 0.0
        %1946 = vmatpush1.msra.mxu0 0.0
        %1947 = vmatprep.subr.mxu0 0.0
        %1948 = vmatpush1.msra.mxu0 0.0
        %1949 = vmatprep.subr.mxu0 0.0
        %1950 = vmatpush1.msra.mxu0 0.0
        %1951 = vmatprep.subr.mxu0 0.0
        %1952 = vmatpush1.msra.mxu0 0.0
        %1953 = vmatprep.subr.mxu0 0.0
        %1954 = vmatpush1.msra.mxu0 0.0
        %1955 = vmatprep.subr.mxu0 0.0
        %1956 = vmatpush1.msra.mxu0 0.0
        %1957 = vmatprep.subr.mxu0 0.0
        %1958 = vmatpush1.msra.mxu0 0.0
        %1959 = vmatprep.subr.mxu0 0.0
        %1960 = vmatpush1.msra.mxu0 0.0
        %1961 = vmatprep.subr.mxu0 0.0
        %1962 = vmatpush1.msra.mxu0 0.0
        %1963 = vmatprep.subr.mxu0 0.0
        %1964 = vmatpush1.msra.mxu0 0.0
        %1965 = vmatprep.subr.mxu0 0.0
        %1966 = vmatpush1.msra.mxu0 0.0
        %1967 = vmatprep.subr.mxu0 0.0
        %1968 = vmatpush1.msra.mxu0 0.0
        %1969 = vmatprep.subr.mxu0 0.0
        %1970 = vmatpush1.msra.mxu0 0.0
        %1971 = vmatprep.subr.mxu0 0.0
        %1972 = vmatpush1.msra.mxu0 0.0
        %1973 = vmatprep.subr.mxu0 0.0
        %1974 = vmatpush1.msra.mxu0 0.0
        %1975 = vmatprep.subr.mxu0 0.0
        %1976 = vmatpush1.msra.mxu0 0.0
        %1977 = vmatprep.subr.mxu0 0.0
        %1978 = vmatpush1.msra.mxu0 0.0
        %1979 = vmatprep.mubr.f32.mxu0 0.0
        %1980 = vmatmul.mubr.f32.gmra.mrb[0].mxu0 %v1842
        %v1981 = vpop.f32.mrb[0].mxu0
        %v1982 = vadd.f32 0.0, %v1981
        %v1983 = vpop.f32.mrb[0].mxu0
        %1984 = vdwg.mxu0
        %v1986 = vsel %vm326, %v1824, 0
        %1988 = vmatprep.subr.mxu0 %v1822
        %1989 = vmatpush1.msra.mxu0 %v1821
        %1990 = vmatprep.subr.mxu0 0.0
        %1991 = vmatpush1.msra.mxu0 0.0
        %1992 = vmatprep.subr.mxu0 0.0
        %1993 = vmatpush1.msra.mxu0 0.0
        %1994 = vmatprep.subr.mxu0 0.0
        %1995 = vmatpush1.msra.mxu0 0.0
        %1996 = vmatprep.subr.mxu0 0.0
        %1997 = vmatpush1.msra.mxu0 0.0
        %1998 = vmatprep.subr.mxu0 0.0
        %1999 = vmatpush1.msra.mxu0 0.0
        %2000 = vmatprep.subr.mxu0 0.0
        %2001 = vmatpush1.msra.mxu0 0.0
        %2002 = vmatprep.subr.mxu0 0.0
        %2003 = vmatpush1.msra.mxu0 0.0
        %2004 = vmatprep.subr.mxu0 0.0
        %2005 = vmatpush1.msra.mxu0 0.0
        %2006 = vmatprep.subr.mxu0 0.0
        %2007 = vmatpush1.msra.mxu0 0.0
        %2008 = vmatprep.subr.mxu0 0.0
        %2009 = vmatpush1.msra.mxu0 0.0
        %2010 = vmatprep.subr.mxu0 0.0
        %2011 = vmatpush1.msra.mxu0 0.0
        %2012 = vmatprep.subr.mxu0 0.0
        %2013 = vmatpush1.msra.mxu0 0.0
        %2014 = vmatprep.subr.mxu0 0.0
        %2015 = vmatpush1.msra.mxu0 0.0
        %2016 = vmatprep.subr.mxu0 0.0
        %2017 = vmatpush1.msra.mxu0 0.0
        %2018 = vmatprep.subr.mxu0 0.0
        %2019 = vmatpush1.msra.mxu0 0.0
        %2020 = vmatprep.subr.mxu0 0.0
        %2021 = vmatpush1.msra.mxu0 0.0
        %2022 = vmatprep.subr.mxu0 0.0
        %2023 = vmatpush1.msra.mxu0 0.0
        %2024 = vmatprep.subr.mxu0 0.0
        %2025 = vmatpush1.msra.mxu0 0.0
        %2026 = vmatprep.subr.mxu0 0.0
        %2027 = vmatpush1.msra.mxu0 0.0
        %2028 = vmatprep.subr.mxu0 0.0
        %2029 = vmatpush1.msra.mxu0 0.0
        %2030 = vmatprep.subr.mxu0 0.0
        %2031 = vmatpush1.msra.mxu0 0.0
        %2032 = vmatprep.subr.mxu0 0.0
        %2033 = vmatpush1.msra.mxu0 0.0
        %2034 = vmatprep.subr.mxu0 0.0
        %2035 = vmatpush1.msra.mxu0 0.0
        %2036 = vmatprep.subr.mxu0 0.0
        %2037 = vmatpush1.msra.mxu0 0.0
        %2038 = vmatprep.subr.mxu0 0.0
        %2039 = vmatpush1.msra.mxu0 0.0
        %2040 = vmatprep.subr.mxu0 0.0
        %2041 = vmatpush1.msra.mxu0 0.0
        %2042 = vmatprep.subr.mxu0 0.0
        %2043 = vmatpush1.msra.mxu0 0.0
        %2044 = vmatprep.subr.mxu0 0.0
        %2045 = vmatpush1.msra.mxu0 0.0
        %2046 = vmatprep.subr.mxu0 0.0
        %2047 = vmatpush1.msra.mxu0 0.0
        %2048 = vmatprep.subr.mxu0 0.0
        %2049 = vmatpush1.msra.mxu0 0.0
        %2050 = vmatprep.subr.mxu0 0.0
        %2051 = vmatpush1.msra.mxu0 0.0
        %2052 = vmatprep.mubr.f32.mxu0 0.0
        %2053 = vmatmul.mubr.f32.gmra.mrb[0].mxu0 %v1986
        %v2054 = vpop.f32.mrb[0].mxu0
        %v2055 = vadd.f32 %v1911, %v2054
        %v2056 = vpop.f32.mrb[0].mxu0
        %v2057 = vadd.f32 %v1913, %v2056
        %2058 = vdwg.mxu0
        %2059 = vmatprep.subr.mxu0 0.0
        %2060 = vmatpush1.msra.mxu0 %v1823
        %2061 = vmatprep.subr.mxu0 0.0
        %2062 = vmatpush1.msra.mxu0 0.0
        %2063 = vmatprep.subr.mxu0 0.0
        %2064 = vmatpush1.msra.mxu0 0.0
        %2065 = vmatprep.subr.mxu0 0.0
        %2066 = vmatpush1.msra.mxu0 0.0
        %2067 = vmatprep.subr.mxu0 0.0
        %2068 = vmatpush1.msra.mxu0 0.0
        %2069 = vmatprep.subr.mxu0 0.0
        %2070 = vmatpush1.msra.mxu0 0.0
        %2071 = vmatprep.subr.mxu0 0.0
        %2072 = vmatpush1.msra.mxu0 0.0
        %2073 = vmatprep.subr.mxu0 0.0
        %2074 = vmatpush1.msra.mxu0 0.0
        %2075 = vmatprep.subr.mxu0 0.0
        %2076 = vmatpush1.msra.mxu0 0.0
        %2077 = vmatprep.subr.mxu0 0.0
        %2078 = vmatpush1.msra.mxu0 0.0
        %2079 = vmatprep.subr.mxu0 0.0
        %2080 = vmatpush1.msra.mxu0 0.0
        %2081 = vmatprep.subr.mxu0 0.0
        %2082 = vmatpush1.msra.mxu0 0.0
        %2083 = vmatprep.subr.mxu0 0.0
        %2084 = vmatpush1.msra.mxu0 0.0
        %2085 = vmatprep.subr.mxu0 0.0
        %2086 = vmatpush1.msra.mxu0 0.0
        %2087 = vmatprep.subr.mxu0 0.0
        %2088 = vmatpush1.msra.mxu0 0.0
        %2089 = vmatprep.subr.mxu0 0.0
        %2090 = vmatpush1.msra.mxu0 0.0
        %2091 = vmatprep.subr.mxu0 0.0
        %2092 = vmatpush1.msra.mxu0 0.0
        %2093 = vmatprep.subr.mxu0 0.0
        %2094 = vmatpush1.msra.mxu0 0.0
        %2095 = vmatprep.subr.mxu0 0.0
        %2096 = vmatpush1.msra.mxu0 0.0
        %2097 = vmatprep.subr.mxu0 0.0
        %2098 = vmatpush1.msra.mxu0 0.0
        %2099 = vmatprep.subr.mxu0 0.0
        %2100 = vmatpush1.msra.mxu0 0.0
        %2101 = vmatprep.subr.mxu0 0.0
        %2102 = vmatpush1.msra.mxu0 0.0
        %2103 = vmatprep.subr.mxu0 0.0
        %2104 = vmatpush1.msra.mxu0 0.0
        %2105 = vmatprep.subr.mxu0 0.0
        %2106 = vmatpush1.msra.mxu0 0.0
        %2107 = vmatprep.subr.mxu0 0.0
        %2108 = vmatpush1.msra.mxu0 0.0
        %2109 = vmatprep.subr.mxu0 0.0
        %2110 = vmatpush1.msra.mxu0 0.0
        %2111 = vmatprep.subr.mxu0 0.0
        %2112 = vmatpush1.msra.mxu0 0.0
        %2113 = vmatprep.subr.mxu0 0.0
        %2114 = vmatpush1.msra.mxu0 0.0
        %2115 = vmatprep.subr.mxu0 0.0
        %2116 = vmatpush1.msra.mxu0 0.0
        %2117 = vmatprep.subr.mxu0 0.0
        %2118 = vmatpush1.msra.mxu0 0.0
        %2119 = vmatprep.subr.mxu0 0.0
        %2120 = vmatpush1.msra.mxu0 0.0
        %2121 = vmatprep.subr.mxu0 0.0
        %2122 = vmatpush1.msra.mxu0 0.0
        %2123 = vmatprep.mubr.f32.mxu0 0.0
        %2124 = vmatmul.mubr.f32.gmra.mrb[0].mxu0 %v1986
        %v2125 = vpop.f32.mrb[0].mxu0
        %v2126 = vadd.f32 %v1982, %v2125
        %v2127 = vpop.f32.mrb[0].mxu0
        %2128 = vdwg.mxu0
        %s2129 = scalar_lea.vmem %s3, 16
        %v2130 = vld [vmem:[%s2129] sm:$0xff]
        %2131 = vrot.lane.b32.xlu0 %v1821, 126
        %v2132 = vpop.permute.xlu0 %2131
        %2133 = vrot.lane.b32.xlu0 %v1822, 126
        %v2134 = vpop.permute.xlu0 %2133
        %2135 = vrot.lane.b32.xlu0 %v1823, 126
        %v2136 = vpop.permute.xlu0 %2135
        %v2137 = vsel %vm623, %v2132, %v2134
        %v2138 = vsel %vm623, %v2134, %v2136
        %v2143 = vsel %vm326, %v2130, 0
        %2145 = vmatprep.subr.mxu0 %v2138
        %2146 = vmatpush1.msra.mxu0 %v2137
        %2147 = vmatprep.subr.mxu0 0.0
        %2148 = vmatpush1.msra.mxu0 0.0
        %2149 = vmatprep.subr.mxu0 0.0
        %2150 = vmatpush1.msra.mxu0 0.0
        %2151 = vmatprep.subr.mxu0 0.0
        %2152 = vmatpush1.msra.mxu0 0.0
        %2153 = vmatprep.subr.mxu0 0.0
        %2154 = vmatpush1.msra.mxu0 0.0
        %2155 = vmatprep.subr.mxu0 0.0
        %2156 = vmatpush1.msra.mxu0 0.0
        %2157 = vmatprep.subr.mxu0 0.0
        %2158 = vmatpush1.msra.mxu0 0.0
        %2159 = vmatprep.subr.mxu0 0.0
        %2160 = vmatpush1.msra.mxu0 0.0
        %2161 = vmatprep.subr.mxu0 0.0
        %2162 = vmatpush1.msra.mxu0 0.0
        %2163 = vmatprep.subr.mxu0 0.0
        %2164 = vmatpush1.msra.mxu0 0.0
        %2165 = vmatprep.subr.mxu0 0.0
        %2166 = vmatpush1.msra.mxu0 0.0
        %2167 = vmatprep.subr.mxu0 0.0
        %2168 = vmatpush1.msra.mxu0 0.0
        %2169 = vmatprep.subr.mxu0 0.0
        %2170 = vmatpush1.msra.mxu0 0.0
        %2171 = vmatprep.subr.mxu0 0.0
        %2172 = vmatpush1.msra.mxu0 0.0
        %2173 = vmatprep.subr.mxu0 0.0
        %2174 = vmatpush1.msra.mxu0 0.0
        %2175 = vmatprep.subr.mxu0 0.0
        %2176 = vmatpush1.msra.mxu0 0.0
        %2177 = vmatprep.subr.mxu0 0.0
        %2178 = vmatpush1.msra.mxu0 0.0
        %2179 = vmatprep.subr.mxu0 0.0
        %2180 = vmatpush1.msra.mxu0 0.0
        %2181 = vmatprep.subr.mxu0 0.0
        %2182 = vmatpush1.msra.mxu0 0.0
        %2183 = vmatprep.subr.mxu0 0.0
        %2184 = vmatpush1.msra.mxu0 0.0
        %2185 = vmatprep.subr.mxu0 0.0
        %2186 = vmatpush1.msra.mxu0 0.0
        %2187 = vmatprep.subr.mxu0 0.0
        %2188 = vmatpush1.msra.mxu0 0.0
        %2189 = vmatprep.subr.mxu0 0.0
        %2190 = vmatpush1.msra.mxu0 0.0
        %2191 = vmatprep.subr.mxu0 0.0
        %2192 = vmatpush1.msra.mxu0 0.0
        %2193 = vmatprep.subr.mxu0 0.0
        %2194 = vmatpush1.msra.mxu0 0.0
        %2195 = vmatprep.subr.mxu0 0.0
        %2196 = vmatpush1.msra.mxu0 0.0
        %2197 = vmatprep.subr.mxu0 0.0
        %2198 = vmatpush1.msra.mxu0 0.0
        %2199 = vmatprep.subr.mxu0 0.0
        %2200 = vmatpush1.msra.mxu0 0.0
        %2201 = vmatprep.subr.mxu0 0.0
        %2202 = vmatpush1.msra.mxu0 0.0
        %2203 = vmatprep.subr.mxu0 0.0
        %2204 = vmatpush1.msra.mxu0 0.0
        %2205 = vmatprep.subr.mxu0 0.0
        %2206 = vmatpush1.msra.mxu0 0.0
        %2207 = vmatprep.subr.mxu0 0.0
        %2208 = vmatpush1.msra.mxu0 0.0
        %2209 = vmatprep.mubr.f32.mxu0 0.0
        %2210 = vmatmul.mubr.f32.gmra.mrb[0].mxu0 %v2143
        %v2211 = vpop.f32.mrb[0].mxu0
        %v2212 = vadd.f32 0.0, %v2211
        %v2213 = vpop.f32.mrb[0].mxu0
        %v2214 = vadd.f32 0.0, %v2213
        %2215 = vdwg.mxu0
        %2216 = vmatprep.subr.mxu0 0.0
        %2217 = vmatpush1.msra.mxu0 %v2136
        %2218 = vmatprep.subr.mxu0 0.0
        %2219 = vmatpush1.msra.mxu0 0.0
        %2220 = vmatprep.subr.mxu0 0.0
        %2221 = vmatpush1.msra.mxu0 0.0
        %2222 = vmatprep.subr.mxu0 0.0
        %2223 = vmatpush1.msra.mxu0 0.0
        %2224 = vmatprep.subr.mxu0 0.0
        %2225 = vmatpush1.msra.mxu0 0.0
        %2226 = vmatprep.subr.mxu0 0.0
        %2227 = vmatpush1.msra.mxu0 0.0
        %2228 = vmatprep.subr.mxu0 0.0
        %2229 = vmatpush1.msra.mxu0 0.0
        %2230 = vmatprep.subr.mxu0 0.0
        %2231 = vmatpush1.msra.mxu0 0.0
        %2232 = vmatprep.subr.mxu0 0.0
        %2233 = vmatpush1.msra.mxu0 0.0
        %2234 = vmatprep.subr.mxu0 0.0
        %2235 = vmatpush1.msra.mxu0 0.0
        %2236 = vmatprep.subr.mxu0 0.0
        %2237 = vmatpush1.msra.mxu0 0.0
        %2238 = vmatprep.subr.mxu0 0.0
        %2239 = vmatpush1.msra.mxu0 0.0
        %2240 = vmatprep.subr.mxu0 0.0
        %2241 = vmatpush1.msra.mxu0 0.0
        %2242 = vmatprep.subr.mxu0 0.0
        %2243 = vmatpush1.msra.mxu0 0.0
        %2244 = vmatprep.subr.mxu0 0.0
        %2245 = vmatpush1.msra.mxu0 0.0
        %2246 = vmatprep.subr.mxu0 0.0
        %2247 = vmatpush1.msra.mxu0 0.0
        %2248 = vmatprep.subr.mxu0 0.0
        %2249 = vmatpush1.msra.mxu0 0.0
        %2250 = vmatprep.subr.mxu0 0.0
        %2251 = vmatpush1.msra.mxu0 0.0
        %2252 = vmatprep.subr.mxu0 0.0
        %2253 = vmatpush1.msra.mxu0 0.0
        %2254 = vmatprep.subr.mxu0 0.0
        %2255 = vmatpush1.msra.mxu0 0.0
        %2256 = vmatprep.subr.mxu0 0.0
        %2257 = vmatpush1.msra.mxu0 0.0
        %2258 = vmatprep.subr.mxu0 0.0
        %2259 = vmatpush1.msra.mxu0 0.0
        %2260 = vmatprep.subr.mxu0 0.0
        %2261 = vmatpush1.msra.mxu0 0.0
        %2262 = vmatprep.subr.mxu0 0.0
        %2263 = vmatpush1.msra.mxu0 0.0
        %2264 = vmatprep.subr.mxu0 0.0
        %2265 = vmatpush1.msra.mxu0 0.0
        %2266 = vmatprep.subr.mxu0 0.0
        %2267 = vmatpush1.msra.mxu0 0.0
        %2268 = vmatprep.subr.mxu0 0.0
        %2269 = vmatpush1.msra.mxu0 0.0
        %2270 = vmatprep.subr.mxu0 0.0
        %2271 = vmatpush1.msra.mxu0 0.0
        %2272 = vmatprep.subr.mxu0 0.0
        %2273 = vmatpush1.msra.mxu0 0.0
        %2274 = vmatprep.subr.mxu0 0.0
        %2275 = vmatpush1.msra.mxu0 0.0
        %2276 = vmatprep.subr.mxu0 0.0
        %2277 = vmatpush1.msra.mxu0 0.0
        %2278 = vmatprep.subr.mxu0 0.0
        %2279 = vmatpush1.msra.mxu0 0.0
        %2280 = vmatprep.mubr.f32.mxu0 0.0
        %2281 = vmatmul.mubr.f32.gmra.mrb[0].mxu0 %v2143
        %v2282 = vpop.f32.mrb[0].mxu0
        %v2283 = vadd.f32 0.0, %v2282
        %v2284 = vpop.f32.mrb[0].mxu0
        %2285 = vdwg.mxu0
        %v2286 = vadd.f32 %v2055, %v2212
        %v2287 = vadd.f32 %v2057, %v2214
        %v2288 = vadd.f32 %v2126, %v2283
        %s2289 = scalar_lea.vmem %s3, 24
        %v2290 = vld [vmem:[%s2289] sm:$0xff]
        %2291 = vrot.lane.b32.xlu0 %v1821, 110
        %v2292 = vpop.permute.xlu0 %2291
        %2293 = vrot.lane.b32.xlu0 %v1822, 110
        %v2294 = vpop.permute.xlu0 %2293
        %2295 = vrot.lane.b32.xlu0 %v1823, 110
        %v2296 = vpop.permute.xlu0 %2295
        %v2297 = vsel %vm784, %v2292, %v2294
        %v2298 = vsel %vm784, %v2294, %v2296
        %v2303 = vsel %vm326, %v2290, 0
        %2305 = vmatprep.subr.mxu0 %v2298
        %2306 = vmatpush1.msra.mxu0 %v2297
        %2307 = vmatprep.subr.mxu0 0.0
        %2308 = vmatpush1.msra.mxu0 0.0
        %2309 = vmatprep.subr.mxu0 0.0
        %2310 = vmatpush1.msra.mxu0 0.0
        %2311 = vmatprep.subr.mxu0 0.0
        %2312 = vmatpush1.msra.mxu0 0.0
        %2313 = vmatprep.subr.mxu0 0.0
        %2314 = vmatpush1.msra.mxu0 0.0
        %2315 = vmatprep.subr.mxu0 0.0
        %2316 = vmatpush1.msra.mxu0 0.0
        %2317 = vmatprep.subr.mxu0 0.0
        %2318 = vmatpush1.msra.mxu0 0.0
        %2319 = vmatprep.subr.mxu0 0.0
        %2320 = vmatpush1.msra.mxu0 0.0
        %2321 = vmatprep.subr.mxu0 0.0
        %2322 = vmatpush1.msra.mxu0 0.0
        %2323 = vmatprep.subr.mxu0 0.0
        %2324 = vmatpush1.msra.mxu0 0.0
        %2325 = vmatprep.subr.mxu0 0.0
        %2326 = vmatpush1.msra.mxu0 0.0
        %2327 = vmatprep.subr.mxu0 0.0
        %2328 = vmatpush1.msra.mxu0 0.0
        %2329 = vmatprep.subr.mxu0 0.0
        %2330 = vmatpush1.msra.mxu0 0.0
        %2331 = vmatprep.subr.mxu0 0.0
        %2332 = vmatpush1.msra.mxu0 0.0
        %2333 = vmatprep.subr.mxu0 0.0
        %2334 = vmatpush1.msra.mxu0 0.0
        %2335 = vmatprep.subr.mxu0 0.0
        %2336 = vmatpush1.msra.mxu0 0.0
        %2337 = vmatprep.subr.mxu0 0.0
        %2338 = vmatpush1.msra.mxu0 0.0
        %2339 = vmatprep.subr.mxu0 0.0
        %2340 = vmatpush1.msra.mxu0 0.0
        %2341 = vmatprep.subr.mxu0 0.0
        %2342 = vmatpush1.msra.mxu0 0.0
        %2343 = vmatprep.subr.mxu0 0.0
        %2344 = vmatpush1.msra.mxu0 0.0
        %2345 = vmatprep.subr.mxu0 0.0
        %2346 = vmatpush1.msra.mxu0 0.0
        %2347 = vmatprep.subr.mxu0 0.0
        %2348 = vmatpush1.msra.mxu0 0.0
        %2349 = vmatprep.subr.mxu0 0.0
        %2350 = vmatpush1.msra.mxu0 0.0
        %2351 = vmatprep.subr.mxu0 0.0
        %2352 = vmatpush1.msra.mxu0 0.0
        %2353 = vmatprep.subr.mxu0 0.0
        %2354 = vmatpush1.msra.mxu0 0.0
        %2355 = vmatprep.subr.mxu0 0.0
        %2356 = vmatpush1.msra.mxu0 0.0
        %2357 = vmatprep.subr.mxu0 0.0
        %2358 = vmatpush1.msra.mxu0 0.0
        %2359 = vmatprep.subr.mxu0 0.0
        %2360 = vmatpush1.msra.mxu0 0.0
        %2361 = vmatprep.subr.mxu0 0.0
        %2362 = vmatpush1.msra.mxu0 0.0
        %2363 = vmatprep.subr.mxu0 0.0
        %2364 = vmatpush1.msra.mxu0 0.0
        %2365 = vmatprep.subr.mxu0 0.0
        %2366 = vmatpush1.msra.mxu0 0.0
        %2367 = vmatprep.subr.mxu0 0.0
        %2368 = vmatpush1.msra.mxu0 0.0
        %2369 = vmatprep.mubr.f32.mxu0 0.0
        %2370 = vmatmul.mubr.f32.gmra.mrb[0].mxu0 %v2303
        %v2371 = vpop.f32.mrb[0].mxu0
        %v2372 = vadd.f32 0.0, %v2371
        %v2373 = vpop.f32.mrb[0].mxu0
        %v2374 = vadd.f32 0.0, %v2373
        %2375 = vdwg.mxu0
        %2376 = vmatprep.subr.mxu0 0.0
        %2377 = vmatpush1.msra.mxu0 %v2296
        %2378 = vmatprep.subr.mxu0 0.0
        %2379 = vmatpush1.msra.mxu0 0.0
        %2380 = vmatprep.subr.mxu0 0.0
        %2381 = vmatpush1.msra.mxu0 0.0
        %2382 = vmatprep.subr.mxu0 0.0
        %2383 = vmatpush1.msra.mxu0 0.0
        %2384 = vmatprep.subr.mxu0 0.0
        %2385 = vmatpush1.msra.mxu0 0.0
        %2386 = vmatprep.subr.mxu0 0.0
        %2387 = vmatpush1.msra.mxu0 0.0
        %2388 = vmatprep.subr.mxu0 0.0
        %2389 = vmatpush1.msra.mxu0 0.0
        %2390 = vmatprep.subr.mxu0 0.0
        %2391 = vmatpush1.msra.mxu0 0.0
        %2392 = vmatprep.subr.mxu0 0.0
        %2393 = vmatpush1.msra.mxu0 0.0
        %2394 = vmatprep.subr.mxu0 0.0
        %2395 = vmatpush1.msra.mxu0 0.0
        %2396 = vmatprep.subr.mxu0 0.0
        %2397 = vmatpush1.msra.mxu0 0.0
        %2398 = vmatprep.subr.mxu0 0.0
        %2399 = vmatpush1.msra.mxu0 0.0
        %2400 = vmatprep.subr.mxu0 0.0
        %2401 = vmatpush1.msra.mxu0 0.0
        %2402 = vmatprep.subr.mxu0 0.0
        %2403 = vmatpush1.msra.mxu0 0.0
        %2404 = vmatprep.subr.mxu0 0.0
        %2405 = vmatpush1.msra.mxu0 0.0
        %2406 = vmatprep.subr.mxu0 0.0
        %2407 = vmatpush1.msra.mxu0 0.0
        %2408 = vmatprep.subr.mxu0 0.0
        %2409 = vmatpush1.msra.mxu0 0.0
        %2410 = vmatprep.subr.mxu0 0.0
        %2411 = vmatpush1.msra.mxu0 0.0
        %2412 = vmatprep.subr.mxu0 0.0
        %2413 = vmatpush1.msra.mxu0 0.0
        %2414 = vmatprep.subr.mxu0 0.0
        %2415 = vmatpush1.msra.mxu0 0.0
        %2416 = vmatprep.subr.mxu0 0.0
        %2417 = vmatpush1.msra.mxu0 0.0
        %2418 = vmatprep.subr.mxu0 0.0
        %2419 = vmatpush1.msra.mxu0 0.0
        %2420 = vmatprep.subr.mxu0 0.0
        %2421 = vmatpush1.msra.mxu0 0.0
        %2422 = vmatprep.subr.mxu0 0.0
        %2423 = vmatpush1.msra.mxu0 0.0
        %2424 = vmatprep.subr.mxu0 0.0
        %2425 = vmatpush1.msra.mxu0 0.0
        %2426 = vmatprep.subr.mxu0 0.0
        %2427 = vmatpush1.msra.mxu0 0.0
        %2428 = vmatprep.subr.mxu0 0.0
        %2429 = vmatpush1.msra.mxu0 0.0
        %2430 = vmatprep.subr.mxu0 0.0
        %2431 = vmatpush1.msra.mxu0 0.0
        %2432 = vmatprep.subr.mxu0 0.0
        %2433 = vmatpush1.msra.mxu0 0.0
        %2434 = vmatprep.subr.mxu0 0.0
        %2435 = vmatpush1.msra.mxu0 0.0
        %2436 = vmatprep.subr.mxu0 0.0
        %2437 = vmatpush1.msra.mxu0 0.0
        %2438 = vmatprep.subr.mxu0 0.0
        %2439 = vmatpush1.msra.mxu0 0.0
        %2440 = vmatprep.mubr.f32.mxu0 0.0
        %2441 = vmatmul.mubr.f32.gmra.mrb[0].mxu0 %v2303
        %v2442 = vpop.f32.mrb[0].mxu0
        %v2443 = vadd.f32 0.0, %v2442
        %v2444 = vpop.f32.mrb[0].mxu0
        %2445 = vdwg.mxu0
        %v2446 = vadd.f32 %v2286, %v2372
        %v2447 = vadd.f32 %v2287, %v2374
        %v2448 = vadd.f32 %v2288, %v2443
        %s2449 = scalar_lea.vmem %s3, 32
        %v2450 = vld [vmem:[%s2449] sm:$0xff]
        %2451 = vrot.lane.b32.xlu0 %v1821, 109
        %v2452 = vpop.permute.xlu0 %2451
        %2453 = vrot.lane.b32.xlu0 %v1822, 109
        %v2454 = vpop.permute.xlu0 %2453
        %2455 = vrot.lane.b32.xlu0 %v1823, 109
        %v2456 = vpop.permute.xlu0 %2455
        %v2457 = vsel %vm945, %v2452, %v2454
        %v2458 = vsel %vm945, %v2454, %v2456
        %v2463 = vsel %vm326, %v2450, 0
        %2465 = vmatprep.subr.mxu0 %v2458
        %2466 = vmatpush1.msra.mxu0 %v2457
        %2467 = vmatprep.subr.mxu0 0.0
        %2468 = vmatpush1.msra.mxu0 0.0
        %2469 = vmatprep.subr.mxu0 0.0
        %2470 = vmatpush1.msra.mxu0 0.0
        %2471 = vmatprep.subr.mxu0 0.0
        %2472 = vmatpush1.msra.mxu0 0.0
        %2473 = vmatprep.subr.mxu0 0.0
        %2474 = vmatpush1.msra.mxu0 0.0
        %2475 = vmatprep.subr.mxu0 0.0
        %2476 = vmatpush1.msra.mxu0 0.0
        %2477 = vmatprep.subr.mxu0 0.0
        %2478 = vmatpush1.msra.mxu0 0.0
        %2479 = vmatprep.subr.mxu0 0.0
        %2480 = vmatpush1.msra.mxu0 0.0
        %2481 = vmatprep.subr.mxu0 0.0
        %2482 = vmatpush1.msra.mxu0 0.0
        %2483 = vmatprep.subr.mxu0 0.0
        %2484 = vmatpush1.msra.mxu0 0.0
        %2485 = vmatprep.subr.mxu0 0.0
        %2486 = vmatpush1.msra.mxu0 0.0
        %2487 = vmatprep.subr.mxu0 0.0
        %2488 = vmatpush1.msra.mxu0 0.0
        %2489 = vmatprep.subr.mxu0 0.0
        %2490 = vmatpush1.msra.mxu0 0.0
        %2491 = vmatprep.subr.mxu0 0.0
        %2492 = vmatpush1.msra.mxu0 0.0
        %2493 = vmatprep.subr.mxu0 0.0
        %2494 = vmatpush1.msra.mxu0 0.0
        %2495 = vmatprep.subr.mxu0 0.0
        %2496 = vmatpush1.msra.mxu0 0.0
        %2497 = vmatprep.subr.mxu0 0.0
        %2498 = vmatpush1.msra.mxu0 0.0
        %2499 = vmatprep.subr.mxu0 0.0
        %2500 = vmatpush1.msra.mxu0 0.0
        %2501 = vmatprep.subr.mxu0 0.0
        %2502 = vmatpush1.msra.mxu0 0.0
        %2503 = vmatprep.subr.mxu0 0.0
        %2504 = vmatpush1.msra.mxu0 0.0
        %2505 = vmatprep.subr.mxu0 0.0
        %2506 = vmatpush1.msra.mxu0 0.0
        %2507 = vmatprep.subr.mxu0 0.0
        %2508 = vmatpush1.msra.mxu0 0.0
        %2509 = vmatprep.subr.mxu0 0.0
        %2510 = vmatpush1.msra.mxu0 0.0
        %2511 = vmatprep.subr.mxu0 0.0
        %2512 = vmatpush1.msra.mxu0 0.0
        %2513 = vmatprep.subr.mxu0 0.0
        %2514 = vmatpush1.msra.mxu0 0.0
        %2515 = vmatprep.subr.mxu0 0.0
        %2516 = vmatpush1.msra.mxu0 0.0
        %2517 = vmatprep.subr.mxu0 0.0
        %2518 = vmatpush1.msra.mxu0 0.0
        %2519 = vmatprep.subr.mxu0 0.0
        %2520 = vmatpush1.msra.mxu0 0.0
        %2521 = vmatprep.subr.mxu0 0.0
        %2522 = vmatpush1.msra.mxu0 0.0
        %2523 = vmatprep.subr.mxu0 0.0
        %2524 = vmatpush1.msra.mxu0 0.0
        %2525 = vmatprep.subr.mxu0 0.0
        %2526 = vmatpush1.msra.mxu0 0.0
        %2527 = vmatprep.subr.mxu0 0.0
        %2528 = vmatpush1.msra.mxu0 0.0
        %2529 = vmatprep.mubr.f32.mxu0 0.0
        %2530 = vmatmul.mubr.f32.gmra.mrb[0].mxu0 %v2463
        %v2531 = vpop.f32.mrb[0].mxu0
        %v2532 = vadd.f32 0.0, %v2531
        %v2533 = vpop.f32.mrb[0].mxu0
        %v2534 = vadd.f32 0.0, %v2533
        %2535 = vdwg.mxu0
        %2536 = vmatprep.subr.mxu0 0.0
        %2537 = vmatpush1.msra.mxu0 %v2456
        %2538 = vmatprep.subr.mxu0 0.0
        %2539 = vmatpush1.msra.mxu0 0.0
        %2540 = vmatprep.subr.mxu0 0.0
        %2541 = vmatpush1.msra.mxu0 0.0
        %2542 = vmatprep.subr.mxu0 0.0
        %2543 = vmatpush1.msra.mxu0 0.0
        %2544 = vmatprep.subr.mxu0 0.0
        %2545 = vmatpush1.msra.mxu0 0.0
        %2546 = vmatprep.subr.mxu0 0.0
        %2547 = vmatpush1.msra.mxu0 0.0
        %2548 = vmatprep.subr.mxu0 0.0
        %2549 = vmatpush1.msra.mxu0 0.0
        %2550 = vmatprep.subr.mxu0 0.0
        %2551 = vmatpush1.msra.mxu0 0.0
        %2552 = vmatprep.subr.mxu0 0.0
        %2553 = vmatpush1.msra.mxu0 0.0
        %2554 = vmatprep.subr.mxu0 0.0
        %2555 = vmatpush1.msra.mxu0 0.0
        %2556 = vmatprep.subr.mxu0 0.0
        %2557 = vmatpush1.msra.mxu0 0.0
        %2558 = vmatprep.subr.mxu0 0.0
        %2559 = vmatpush1.msra.mxu0 0.0
        %2560 = vmatprep.subr.mxu0 0.0
        %2561 = vmatpush1.msra.mxu0 0.0
        %2562 = vmatprep.subr.mxu0 0.0
        %2563 = vmatpush1.msra.mxu0 0.0
        %2564 = vmatprep.subr.mxu0 0.0
        %2565 = vmatpush1.msra.mxu0 0.0
        %2566 = vmatprep.subr.mxu0 0.0
        %2567 = vmatpush1.msra.mxu0 0.0
        %2568 = vmatprep.subr.mxu0 0.0
        %2569 = vmatpush1.msra.mxu0 0.0
        %2570 = vmatprep.subr.mxu0 0.0
        %2571 = vmatpush1.msra.mxu0 0.0
        %2572 = vmatprep.subr.mxu0 0.0
        %2573 = vmatpush1.msra.mxu0 0.0
        %2574 = vmatprep.subr.mxu0 0.0
        %2575 = vmatpush1.msra.mxu0 0.0
        %2576 = vmatprep.subr.mxu0 0.0
        %2577 = vmatpush1.msra.mxu0 0.0
        %2578 = vmatprep.subr.mxu0 0.0
        %2579 = vmatpush1.msra.mxu0 0.0
        %2580 = vmatprep.subr.mxu0 0.0
        %2581 = vmatpush1.msra.mxu0 0.0
        %2582 = vmatprep.subr.mxu0 0.0
        %2583 = vmatpush1.msra.mxu0 0.0
        %2584 = vmatprep.subr.mxu0 0.0
        %2585 = vmatpush1.msra.mxu0 0.0
        %2586 = vmatprep.subr.mxu0 0.0
        %2587 = vmatpush1.msra.mxu0 0.0
        %2588 = vmatprep.subr.mxu0 0.0
        %2589 = vmatpush1.msra.mxu0 0.0
        %2590 = vmatprep.subr.mxu0 0.0
        %2591 = vmatpush1.msra.mxu0 0.0
        %2592 = vmatprep.subr.mxu0 0.0
        %2593 = vmatpush1.msra.mxu0 0.0
        %2594 = vmatprep.subr.mxu0 0.0
        %2595 = vmatpush1.msra.mxu0 0.0
        %2596 = vmatprep.subr.mxu0 0.0
        %2597 = vmatpush1.msra.mxu0 0.0
        %2598 = vmatprep.subr.mxu0 0.0
        %2599 = vmatpush1.msra.mxu0 0.0
        %2600 = vmatprep.mubr.f32.mxu0 0.0
        %2601 = vmatmul.mubr.f32.gmra.mrb[0].mxu0 %v2463
        %v2602 = vpop.f32.mrb[0].mxu0
        %v2603 = vadd.f32 0.0, %v2602
        %v2604 = vpop.f32.mrb[0].mxu0
        %2605 = vdwg.mxu0
        %v2606 = vadd.f32 %v2446, %v2532
        %v2607 = vadd.f32 %v2447, %v2534
        %v2608 = vadd.f32 %v2448, %v2603
        %s2609 = scalar_lea.vmem %s3, 40
        %v2610 = vld [vmem:[%s2609] sm:$0xff]
        %2611 = vrot.lane.b32.xlu0 %v1821, 108
        %v2612 = vpop.permute.xlu0 %2611
        %2613 = vrot.lane.b32.xlu0 %v1822, 108
        %v2614 = vpop.permute.xlu0 %2613
        %2615 = vrot.lane.b32.xlu0 %v1823, 108
        %v2616 = vpop.permute.xlu0 %2615
        %v2617 = vsel %vm1106, %v2612, %v2614
        %v2618 = vsel %vm1106, %v2614, %v2616
        %v2623 = vsel %vm326, %v2610, 0
        %2625 = vmatprep.subr.mxu0 %v2618
        %2626 = vmatpush1.msra.mxu0 %v2617
        %2627 = vmatprep.subr.mxu0 0.0
        %2628 = vmatpush1.msra.mxu0 0.0
        %2629 = vmatprep.subr.mxu0 0.0
        %2630 = vmatpush1.msra.mxu0 0.0
        %2631 = vmatprep.subr.mxu0 0.0
        %2632 = vmatpush1.msra.mxu0 0.0
        %2633 = vmatprep.subr.mxu0 0.0
        %2634 = vmatpush1.msra.mxu0 0.0
        %2635 = vmatprep.subr.mxu0 0.0
        %2636 = vmatpush1.msra.mxu0 0.0
        %2637 = vmatprep.subr.mxu0 0.0
        %2638 = vmatpush1.msra.mxu0 0.0
        %2639 = vmatprep.subr.mxu0 0.0
        %2640 = vmatpush1.msra.mxu0 0.0
        %2641 = vmatprep.subr.mxu0 0.0
        %2642 = vmatpush1.msra.mxu0 0.0
        %2643 = vmatprep.subr.mxu0 0.0
        %2644 = vmatpush1.msra.mxu0 0.0
        %2645 = vmatprep.subr.mxu0 0.0
        %2646 = vmatpush1.msra.mxu0 0.0
        %2647 = vmatprep.subr.mxu0 0.0
        %2648 = vmatpush1.msra.mxu0 0.0
        %2649 = vmatprep.subr.mxu0 0.0
        %2650 = vmatpush1.msra.mxu0 0.0
        %2651 = vmatprep.subr.mxu0 0.0
        %2652 = vmatpush1.msra.mxu0 0.0
        %2653 = vmatprep.subr.mxu0 0.0
        %2654 = vmatpush1.msra.mxu0 0.0
        %2655 = vmatprep.subr.mxu0 0.0
        %2656 = vmatpush1.msra.mxu0 0.0
        %2657 = vmatprep.subr.mxu0 0.0
        %2658 = vmatpush1.msra.mxu0 0.0
        %2659 = vmatprep.subr.mxu0 0.0
        %2660 = vmatpush1.msra.mxu0 0.0
        %2661 = vmatprep.subr.mxu0 0.0
        %2662 = vmatpush1.msra.mxu0 0.0
        %2663 = vmatprep.subr.mxu0 0.0
        %2664 = vmatpush1.msra.mxu0 0.0
        %2665 = vmatprep.subr.mxu0 0.0
        %2666 = vmatpush1.msra.mxu0 0.0
        %2667 = vmatprep.subr.mxu0 0.0
        %2668 = vmatpush1.msra.mxu0 0.0
        %2669 = vmatprep.subr.mxu0 0.0
        %2670 = vmatpush1.msra.mxu0 0.0
        %2671 = vmatprep.subr.mxu0 0.0
        %2672 = vmatpush1.msra.mxu0 0.0
        %2673 = vmatprep.subr.mxu0 0.0
        %2674 = vmatpush1.msra.mxu0 0.0
        %2675 = vmatprep.subr.mxu0 0.0
        %2676 = vmatpush1.msra.mxu0 0.0
        %2677 = vmatprep.subr.mxu0 0.0
        %2678 = vmatpush1.msra.mxu0 0.0
        %2679 = vmatprep.subr.mxu0 0.0
        %2680 = vmatpush1.msra.mxu0 0.0
        %2681 = vmatprep.subr.mxu0 0.0
        %2682 = vmatpush1.msra.mxu0 0.0
        %2683 = vmatprep.subr.mxu0 0.0
        %2684 = vmatpush1.msra.mxu0 0.0
        %2685 = vmatprep.subr.mxu0 0.0
        %2686 = vmatpush1.msra.mxu0 0.0
        %2687 = vmatprep.subr.mxu0 0.0
        %2688 = vmatpush1.msra.mxu0 0.0
        %2689 = vmatprep.mubr.f32.mxu0 0.0
        %2690 = vmatmul.mubr.f32.gmra.mrb[0].mxu0 %v2623
        %v2691 = vpop.f32.mrb[0].mxu0
        %v2692 = vadd.f32 0.0, %v2691
        %v2693 = vpop.f32.mrb[0].mxu0
        %v2694 = vadd.f32 0.0, %v2693
        %2695 = vdwg.mxu0
        %2696 = vmatprep.subr.mxu0 0.0
        %2697 = vmatpush1.msra.mxu0 %v2616
        %2698 = vmatprep.subr.mxu0 0.0
        %2699 = vmatpush1.msra.mxu0 0.0
        %2700 = vmatprep.subr.mxu0 0.0
        %2701 = vmatpush1.msra.mxu0 0.0
        %2702 = vmatprep.subr.mxu0 0.0
        %2703 = vmatpush1.msra.mxu0 0.0
        %2704 = vmatprep.subr.mxu0 0.0
        %2705 = vmatpush1.msra.mxu0 0.0
        %2706 = vmatprep.subr.mxu0 0.0
        %2707 = vmatpush1.msra.mxu0 0.0
        %2708 = vmatprep.subr.mxu0 0.0
        %2709 = vmatpush1.msra.mxu0 0.0
        %2710 = vmatprep.subr.mxu0 0.0
        %2711 = vmatpush1.msra.mxu0 0.0
        %2712 = vmatprep.subr.mxu0 0.0
        %2713 = vmatpush1.msra.mxu0 0.0
        %2714 = vmatprep.subr.mxu0 0.0
        %2715 = vmatpush1.msra.mxu0 0.0
        %2716 = vmatprep.subr.mxu0 0.0
        %2717 = vmatpush1.msra.mxu0 0.0
        %2718 = vmatprep.subr.mxu0 0.0
        %2719 = vmatpush1.msra.mxu0 0.0
        %2720 = vmatprep.subr.mxu0 0.0
        %2721 = vmatpush1.msra.mxu0 0.0
        %2722 = vmatprep.subr.mxu0 0.0
        %2723 = vmatpush1.msra.mxu0 0.0
        %2724 = vmatprep.subr.mxu0 0.0
        %2725 = vmatpush1.msra.mxu0 0.0
        %2726 = vmatprep.subr.mxu0 0.0
        %2727 = vmatpush1.msra.mxu0 0.0
        %2728 = vmatprep.subr.mxu0 0.0
        %2729 = vmatpush1.msra.mxu0 0.0
        %2730 = vmatprep.subr.mxu0 0.0
        %2731 = vmatpush1.msra.mxu0 0.0
        %2732 = vmatprep.subr.mxu0 0.0
        %2733 = vmatpush1.msra.mxu0 0.0
        %2734 = vmatprep.subr.mxu0 0.0
        %2735 = vmatpush1.msra.mxu0 0.0
        %2736 = vmatprep.subr.mxu0 0.0
        %2737 = vmatpush1.msra.mxu0 0.0
        %2738 = vmatprep.subr.mxu0 0.0
        %2739 = vmatpush1.msra.mxu0 0.0
        %2740 = vmatprep.subr.mxu0 0.0
        %2741 = vmatpush1.msra.mxu0 0.0
        %2742 = vmatprep.subr.mxu0 0.0
        %2743 = vmatpush1.msra.mxu0 0.0
        %2744 = vmatprep.subr.mxu0 0.0
        %2745 = vmatpush1.msra.mxu0 0.0
        %2746 = vmatprep.subr.mxu0 0.0
        %2747 = vmatpush1.msra.mxu0 0.0
        %2748 = vmatprep.subr.mxu0 0.0
        %2749 = vmatpush1.msra.mxu0 0.0
        %2750 = vmatprep.subr.mxu0 0.0
        %2751 = vmatpush1.msra.mxu0 0.0
        %2752 = vmatprep.subr.mxu0 0.0
        %2753 = vmatpush1.msra.mxu0 0.0
        %2754 = vmatprep.subr.mxu0 0.0
        %2755 = vmatpush1.msra.mxu0 0.0
        %2756 = vmatprep.subr.mxu0 0.0
        %2757 = vmatpush1.msra.mxu0 0.0
        %2758 = vmatprep.subr.mxu0 0.0
        %2759 = vmatpush1.msra.mxu0 0.0
        %2760 = vmatprep.mubr.f32.mxu0 0.0
        %2761 = vmatmul.mubr.f32.gmra.mrb[0].mxu0 %v2623
        %v2762 = vpop.f32.mrb[0].mxu0
        %v2763 = vadd.f32 0.0, %v2762
        %v2764 = vpop.f32.mrb[0].mxu0
        %2765 = vdwg.mxu0
        %v2766 = vadd.f32 %v2606, %v2692
        %v2767 = vadd.f32 %v2607, %v2694
        %v2768 = vadd.f32 %v2608, %v2763
        %s2769 = scalar_lea.vmem %s3, 48
        %v2770 = vld [vmem:[%s2769] sm:$0xff]
        %2771 = vrot.lane.b32.xlu0 %v1821, 92
        %v2772 = vpop.permute.xlu0 %2771
        %2773 = vrot.lane.b32.xlu0 %v1822, 92
        %v2774 = vpop.permute.xlu0 %2773
        %2775 = vrot.lane.b32.xlu0 %v1823, 92
        %v2776 = vpop.permute.xlu0 %2775
        %v2777 = vsel %vm1267, %v2772, %v2774
        %v2778 = vsel %vm1267, %v2774, %v2776
        %v2783 = vsel %vm326, %v2770, 0
        %2785 = vmatprep.subr.mxu0 %v2778
        %2786 = vmatpush1.msra.mxu0 %v2777
        %2787 = vmatprep.subr.mxu0 0.0
        %2788 = vmatpush1.msra.mxu0 0.0
        %2789 = vmatprep.subr.mxu0 0.0
        %2790 = vmatpush1.msra.mxu0 0.0
        %2791 = vmatprep.subr.mxu0 0.0
        %2792 = vmatpush1.msra.mxu0 0.0
        %2793 = vmatprep.subr.mxu0 0.0
        %2794 = vmatpush1.msra.mxu0 0.0
        %2795 = vmatprep.subr.mxu0 0.0
        %2796 = vmatpush1.msra.mxu0 0.0
        %2797 = vmatprep.subr.mxu0 0.0
        %2798 = vmatpush1.msra.mxu0 0.0
        %2799 = vmatprep.subr.mxu0 0.0
        %2800 = vmatpush1.msra.mxu0 0.0
        %2801 = vmatprep.subr.mxu0 0.0
        %2802 = vmatpush1.msra.mxu0 0.0
        %2803 = vmatprep.subr.mxu0 0.0
        %2804 = vmatpush1.msra.mxu0 0.0
        %2805 = vmatprep.subr.mxu0 0.0
        %2806 = vmatpush1.msra.mxu0 0.0
        %2807 = vmatprep.subr.mxu0 0.0
        %2808 = vmatpush1.msra.mxu0 0.0
        %2809 = vmatprep.subr.mxu0 0.0
        %2810 = vmatpush1.msra.mxu0 0.0
        %2811 = vmatprep.subr.mxu0 0.0
        %2812 = vmatpush1.msra.mxu0 0.0
        %2813 = vmatprep.subr.mxu0 0.0
        %2814 = vmatpush1.msra.mxu0 0.0
        %2815 = vmatprep.subr.mxu0 0.0
        %2816 = vmatpush1.msra.mxu0 0.0
        %2817 = vmatprep.subr.mxu0 0.0
        %2818 = vmatpush1.msra.mxu0 0.0
        %2819 = vmatprep.subr.mxu0 0.0
        %2820 = vmatpush1.msra.mxu0 0.0
        %2821 = vmatprep.subr.mxu0 0.0
        %2822 = vmatpush1.msra.mxu0 0.0
        %2823 = vmatprep.subr.mxu0 0.0
        %2824 = vmatpush1.msra.mxu0 0.0
        %2825 = vmatprep.subr.mxu0 0.0
        %2826 = vmatpush1.msra.mxu0 0.0
        %2827 = vmatprep.subr.mxu0 0.0
        %2828 = vmatpush1.msra.mxu0 0.0
        %2829 = vmatprep.subr.mxu0 0.0
        %2830 = vmatpush1.msra.mxu0 0.0
        %2831 = vmatprep.subr.mxu0 0.0
        %2832 = vmatpush1.msra.mxu0 0.0
        %2833 = vmatprep.subr.mxu0 0.0
        %2834 = vmatpush1.msra.mxu0 0.0
        %2835 = vmatprep.subr.mxu0 0.0
        %2836 = vmatpush1.msra.mxu0 0.0
        %2837 = vmatprep.subr.mxu0 0.0
        %2838 = vmatpush1.msra.mxu0 0.0
        %2839 = vmatprep.subr.mxu0 0.0
        %2840 = vmatpush1.msra.mxu0 0.0
        %2841 = vmatprep.subr.mxu0 0.0
        %2842 = vmatpush1.msra.mxu0 0.0
        %2843 = vmatprep.subr.mxu0 0.0
        %2844 = vmatpush1.msra.mxu0 0.0
        %2845 = vmatprep.subr.mxu0 0.0
        %2846 = vmatpush1.msra.mxu0 0.0
        %2847 = vmatprep.subr.mxu0 0.0
        %2848 = vmatpush1.msra.mxu0 0.0
        %2849 = vmatprep.mubr.f32.mxu0 0.0
        %2850 = vmatmul.mubr.f32.gmra.mrb[0].mxu0 %v2783
        %v2851 = vpop.f32.mrb[0].mxu0
        %v2852 = vadd.f32 0.0, %v2851
        %v2853 = vpop.f32.mrb[0].mxu0
        %v2854 = vadd.f32 0.0, %v2853
        %2855 = vdwg.mxu0
        %2856 = vmatprep.subr.mxu0 0.0
        %2857 = vmatpush1.msra.mxu0 %v2776
        %2858 = vmatprep.subr.mxu0 0.0
        %2859 = vmatpush1.msra.mxu0 0.0
        %2860 = vmatprep.subr.mxu0 0.0
        %2861 = vmatpush1.msra.mxu0 0.0
        %2862 = vmatprep.subr.mxu0 0.0
        %2863 = vmatpush1.msra.mxu0 0.0
        %2864 = vmatprep.subr.mxu0 0.0
        %2865 = vmatpush1.msra.mxu0 0.0
        %2866 = vmatprep.subr.mxu0 0.0
        %2867 = vmatpush1.msra.mxu0 0.0
        %2868 = vmatprep.subr.mxu0 0.0
        %2869 = vmatpush1.msra.mxu0 0.0
        %2870 = vmatprep.subr.mxu0 0.0
        %2871 = vmatpush1.msra.mxu0 0.0
        %2872 = vmatprep.subr.mxu0 0.0
        %2873 = vmatpush1.msra.mxu0 0.0
        %2874 = vmatprep.subr.mxu0 0.0
        %2875 = vmatpush1.msra.mxu0 0.0
        %2876 = vmatprep.subr.mxu0 0.0
        %2877 = vmatpush1.msra.mxu0 0.0
        %2878 = vmatprep.subr.mxu0 0.0
        %2879 = vmatpush1.msra.mxu0 0.0
        %2880 = vmatprep.subr.mxu0 0.0
        %2881 = vmatpush1.msra.mxu0 0.0
        %2882 = vmatprep.subr.mxu0 0.0
        %2883 = vmatpush1.msra.mxu0 0.0
        %2884 = vmatprep.subr.mxu0 0.0
        %2885 = vmatpush1.msra.mxu0 0.0
        %2886 = vmatprep.subr.mxu0 0.0
        %2887 = vmatpush1.msra.mxu0 0.0
        %2888 = vmatprep.subr.mxu0 0.0
        %2889 = vmatpush1.msra.mxu0 0.0
        %2890 = vmatprep.subr.mxu0 0.0
        %2891 = vmatpush1.msra.mxu0 0.0
        %2892 = vmatprep.subr.mxu0 0.0
        %2893 = vmatpush1.msra.mxu0 0.0
        %2894 = vmatprep.subr.mxu0 0.0
        %2895 = vmatpush1.msra.mxu0 0.0
        %2896 = vmatprep.subr.mxu0 0.0
        %2897 = vmatpush1.msra.mxu0 0.0
        %2898 = vmatprep.subr.mxu0 0.0
        %2899 = vmatpush1.msra.mxu0 0.0
        %2900 = vmatprep.subr.mxu0 0.0
        %2901 = vmatpush1.msra.mxu0 0.0
        %2902 = vmatprep.subr.mxu0 0.0
        %2903 = vmatpush1.msra.mxu0 0.0
        %2904 = vmatprep.subr.mxu0 0.0
        %2905 = vmatpush1.msra.mxu0 0.0
        %2906 = vmatprep.subr.mxu0 0.0
        %2907 = vmatpush1.msra.mxu0 0.0
        %2908 = vmatprep.subr.mxu0 0.0
        %2909 = vmatpush1.msra.mxu0 0.0
        %2910 = vmatprep.subr.mxu0 0.0
        %2911 = vmatpush1.msra.mxu0 0.0
        %2912 = vmatprep.subr.mxu0 0.0
        %2913 = vmatpush1.msra.mxu0 0.0
        %2914 = vmatprep.subr.mxu0 0.0
        %2915 = vmatpush1.msra.mxu0 0.0
        %2916 = vmatprep.subr.mxu0 0.0
        %2917 = vmatpush1.msra.mxu0 0.0
        %2918 = vmatprep.subr.mxu0 0.0
        %2919 = vmatpush1.msra.mxu0 0.0
        %2920 = vmatprep.mubr.f32.mxu0 0.0
        %2921 = vmatmul.mubr.f32.gmra.mrb[0].mxu0 %v2783
        %v2922 = vpop.f32.mrb[0].mxu0
        %v2923 = vadd.f32 0.0, %v2922
        %v2924 = vpop.f32.mrb[0].mxu0
        %2925 = vdwg.mxu0
        %v2926 = vadd.f32 %v2766, %v2852
        %v2927 = vadd.f32 %v2767, %v2854
        %v2928 = vadd.f32 %v2768, %v2923
        %s2929 = scalar_lea.vmem %s3, 56
        %v2930 = vld [vmem:[%s2929] sm:$0xff]
        %2931 = vrot.lane.b32.xlu0 %v1821, 91
        %v2932 = vpop.permute.xlu0 %2931
        %2933 = vrot.lane.b32.xlu0 %v1822, 91
        %v2934 = vpop.permute.xlu0 %2933
        %2935 = vrot.lane.b32.xlu0 %v1823, 91
        %v2936 = vpop.permute.xlu0 %2935
        %v2937 = vsel %vm1428, %v2932, %v2934
        %v2938 = vsel %vm1428, %v2934, %v2936
        %v2943 = vsel %vm326, %v2930, 0
        %2945 = vmatprep.subr.mxu0 %v2938
        %2946 = vmatpush1.msra.mxu0 %v2937
        %2947 = vmatprep.subr.mxu0 0.0
        %2948 = vmatpush1.msra.mxu0 0.0
        %2949 = vmatprep.subr.mxu0 0.0
        %2950 = vmatpush1.msra.mxu0 0.0
        %2951 = vmatprep.subr.mxu0 0.0
        %2952 = vmatpush1.msra.mxu0 0.0
        %2953 = vmatprep.subr.mxu0 0.0
        %2954 = vmatpush1.msra.mxu0 0.0
        %2955 = vmatprep.subr.mxu0 0.0
        %2956 = vmatpush1.msra.mxu0 0.0
        %2957 = vmatprep.subr.mxu0 0.0
        %2958 = vmatpush1.msra.mxu0 0.0
        %2959 = vmatprep.subr.mxu0 0.0
        %2960 = vmatpush1.msra.mxu0 0.0
        %2961 = vmatprep.subr.mxu0 0.0
        %2962 = vmatpush1.msra.mxu0 0.0
        %2963 = vmatprep.subr.mxu0 0.0
        %2964 = vmatpush1.msra.mxu0 0.0
        %2965 = vmatprep.subr.mxu0 0.0
        %2966 = vmatpush1.msra.mxu0 0.0
        %2967 = vmatprep.subr.mxu0 0.0
        %2968 = vmatpush1.msra.mxu0 0.0
        %2969 = vmatprep.subr.mxu0 0.0
        %2970 = vmatpush1.msra.mxu0 0.0
        %2971 = vmatprep.subr.mxu0 0.0
        %2972 = vmatpush1.msra.mxu0 0.0
        %2973 = vmatprep.subr.mxu0 0.0
        %2974 = vmatpush1.msra.mxu0 0.0
        %2975 = vmatprep.subr.mxu0 0.0
        %2976 = vmatpush1.msra.mxu0 0.0
        %2977 = vmatprep.subr.mxu0 0.0
        %2978 = vmatpush1.msra.mxu0 0.0
        %2979 = vmatprep.subr.mxu0 0.0
        %2980 = vmatpush1.msra.mxu0 0.0
        %2981 = vmatprep.subr.mxu0 0.0
        %2982 = vmatpush1.msra.mxu0 0.0
        %2983 = vmatprep.subr.mxu0 0.0
        %2984 = vmatpush1.msra.mxu0 0.0
        %2985 = vmatprep.subr.mxu0 0.0
        %2986 = vmatpush1.msra.mxu0 0.0
        %2987 = vmatprep.subr.mxu0 0.0
        %2988 = vmatpush1.msra.mxu0 0.0
        %2989 = vmatprep.subr.mxu0 0.0
        %2990 = vmatpush1.msra.mxu0 0.0
        %2991 = vmatprep.subr.mxu0 0.0
        %2992 = vmatpush1.msra.mxu0 0.0
        %2993 = vmatprep.subr.mxu0 0.0
        %2994 = vmatpush1.msra.mxu0 0.0
        %2995 = vmatprep.subr.mxu0 0.0
        %2996 = vmatpush1.msra.mxu0 0.0
        %2997 = vmatprep.subr.mxu0 0.0
        %2998 = vmatpush1.msra.mxu0 0.0
        %2999 = vmatprep.subr.mxu0 0.0
        %3000 = vmatpush1.msra.mxu0 0.0
        %3001 = vmatprep.subr.mxu0 0.0
        %3002 = vmatpush1.msra.mxu0 0.0
        %3003 = vmatprep.subr.mxu0 0.0
        %3004 = vmatpush1.msra.mxu0 0.0
        %3005 = vmatprep.subr.mxu0 0.0
        %3006 = vmatpush1.msra.mxu0 0.0
        %3007 = vmatprep.subr.mxu0 0.0
        %3008 = vmatpush1.msra.mxu0 0.0
        %3009 = vmatprep.mubr.f32.mxu0 0.0
        %3010 = vmatmul.mubr.f32.gmra.mrb[0].mxu0 %v2943
        %v3011 = vpop.f32.mrb[0].mxu0
        %v3012 = vadd.f32 0.0, %v3011
        %v3013 = vpop.f32.mrb[0].mxu0
        %v3014 = vadd.f32 0.0, %v3013
        %3015 = vdwg.mxu0
        %3016 = vmatprep.subr.mxu0 0.0
        %3017 = vmatpush1.msra.mxu0 %v2936
        %3018 = vmatprep.subr.mxu0 0.0
        %3019 = vmatpush1.msra.mxu0 0.0
        %3020 = vmatprep.subr.mxu0 0.0
        %3021 = vmatpush1.msra.mxu0 0.0
        %3022 = vmatprep.subr.mxu0 0.0
        %3023 = vmatpush1.msra.mxu0 0.0
        %3024 = vmatprep.subr.mxu0 0.0
        %3025 = vmatpush1.msra.mxu0 0.0
        %3026 = vmatprep.subr.mxu0 0.0
        %3027 = vmatpush1.msra.mxu0 0.0
        %3028 = vmatprep.subr.mxu0 0.0
        %3029 = vmatpush1.msra.mxu0 0.0
        %3030 = vmatprep.subr.mxu0 0.0
        %3031 = vmatpush1.msra.mxu0 0.0
        %3032 = vmatprep.subr.mxu0 0.0
        %3033 = vmatpush1.msra.mxu0 0.0
        %3034 = vmatprep.subr.mxu0 0.0
        %3035 = vmatpush1.msra.mxu0 0.0
        %3036 = vmatprep.subr.mxu0 0.0
        %3037 = vmatpush1.msra.mxu0 0.0
        %3038 = vmatprep.subr.mxu0 0.0
        %3039 = vmatpush1.msra.mxu0 0.0
        %3040 = vmatprep.subr.mxu0 0.0
        %3041 = vmatpush1.msra.mxu0 0.0
        %3042 = vmatprep.subr.mxu0 0.0
        %3043 = vmatpush1.msra.mxu0 0.0
        %3044 = vmatprep.subr.mxu0 0.0
        %3045 = vmatpush1.msra.mxu0 0.0
        %3046 = vmatprep.subr.mxu0 0.0
        %3047 = vmatpush1.msra.mxu0 0.0
        %3048 = vmatprep.subr.mxu0 0.0
        %3049 = vmatpush1.msra.mxu0 0.0
        %3050 = vmatprep.subr.mxu0 0.0
        %3051 = vmatpush1.msra.mxu0 0.0
        %3052 = vmatprep.subr.mxu0 0.0
        %3053 = vmatpush1.msra.mxu0 0.0
        %3054 = vmatprep.subr.mxu0 0.0
        %3055 = vmatpush1.msra.mxu0 0.0
        %3056 = vmatprep.subr.mxu0 0.0
        %3057 = vmatpush1.msra.mxu0 0.0
        %3058 = vmatprep.subr.mxu0 0.0
        %3059 = vmatpush1.msra.mxu0 0.0
        %3060 = vmatprep.subr.mxu0 0.0
        %3061 = vmatpush1.msra.mxu0 0.0
        %3062 = vmatprep.subr.mxu0 0.0
        %3063 = vmatpush1.msra.mxu0 0.0
        %3064 = vmatprep.subr.mxu0 0.0
        %3065 = vmatpush1.msra.mxu0 0.0
        %3066 = vmatprep.subr.mxu0 0.0
        %3067 = vmatpush1.msra.mxu0 0.0
        %3068 = vmatprep.subr.mxu0 0.0
        %3069 = vmatpush1.msra.mxu0 0.0
        %3070 = vmatprep.subr.mxu0 0.0
        %3071 = vmatpush1.msra.mxu0 0.0
        %3072 = vmatprep.subr.mxu0 0.0
        %3073 = vmatpush1.msra.mxu0 0.0
        %3074 = vmatprep.subr.mxu0 0.0
        %3075 = vmatpush1.msra.mxu0 0.0
        %3076 = vmatprep.subr.mxu0 0.0
        %3077 = vmatpush1.msra.mxu0 0.0
        %3078 = vmatprep.subr.mxu0 0.0
        %3079 = vmatpush1.msra.mxu0 0.0
        %3080 = vmatprep.mubr.f32.mxu0 0.0
        %3081 = vmatmul.mubr.f32.gmra.mrb[0].mxu0 %v2943
        %v3082 = vpop.f32.mrb[0].mxu0
        %v3083 = vadd.f32 0.0, %v3082
        %v3084 = vpop.f32.mrb[0].mxu0
        %3085 = vdwg.mxu0
        %v3086 = vadd.f32 %v2926, %v3012
        %v3087 = vadd.f32 %v2927, %v3014
        %v3088 = vadd.f32 %v2928, %v3083
        %s3089 = scalar_lea.vmem %s3, 64
        %v3090 = vld [vmem:[%s3089] sm:$0xff]
        %3091 = vrot.lane.b32.xlu0 %v1821, 90
        %v3092 = vpop.permute.xlu0 %3091
        %3093 = vrot.lane.b32.xlu0 %v1822, 90
        %v3094 = vpop.permute.xlu0 %3093
        %3095 = vrot.lane.b32.xlu0 %v1823, 90
        %v3096 = vpop.permute.xlu0 %3095
        %v3097 = vsel %vm1589, %v3092, %v3094
        %v3098 = vsel %vm1589, %v3094, %v3096
        %v3103 = vsel %vm326, %v3090, 0
        %3105 = vmatprep.subr.mxu0 %v3098
        %3106 = vmatpush1.msra.mxu0 %v3097
        %3107 = vmatprep.subr.mxu0 0.0
        %3108 = vmatpush1.msra.mxu0 0.0
        %3109 = vmatprep.subr.mxu0 0.0
        %3110 = vmatpush1.msra.mxu0 0.0
        %3111 = vmatprep.subr.mxu0 0.0
        %3112 = vmatpush1.msra.mxu0 0.0
        %3113 = vmatprep.subr.mxu0 0.0
        %3114 = vmatpush1.msra.mxu0 0.0
        %3115 = vmatprep.subr.mxu0 0.0
        %3116 = vmatpush1.msra.mxu0 0.0
        %3117 = vmatprep.subr.mxu0 0.0
        %3118 = vmatpush1.msra.mxu0 0.0
        %3119 = vmatprep.subr.mxu0 0.0
        %3120 = vmatpush1.msra.mxu0 0.0
        %3121 = vmatprep.subr.mxu0 0.0
        %3122 = vmatpush1.msra.mxu0 0.0
        %3123 = vmatprep.subr.mxu0 0.0
        %3124 = vmatpush1.msra.mxu0 0.0
        %3125 = vmatprep.subr.mxu0 0.0
        %3126 = vmatpush1.msra.mxu0 0.0
        %3127 = vmatprep.subr.mxu0 0.0
        %3128 = vmatpush1.msra.mxu0 0.0
        %3129 = vmatprep.subr.mxu0 0.0
        %3130 = vmatpush1.msra.mxu0 0.0
        %3131 = vmatprep.subr.mxu0 0.0
        %3132 = vmatpush1.msra.mxu0 0.0
        %3133 = vmatprep.subr.mxu0 0.0
        %3134 = vmatpush1.msra.mxu0 0.0
        %3135 = vmatprep.subr.mxu0 0.0
        %3136 = vmatpush1.msra.mxu0 0.0
        %3137 = vmatprep.subr.mxu0 0.0
        %3138 = vmatpush1.msra.mxu0 0.0
        %3139 = vmatprep.subr.mxu0 0.0
        %3140 = vmatpush1.msra.mxu0 0.0
        %3141 = vmatprep.subr.mxu0 0.0
        %3142 = vmatpush1.msra.mxu0 0.0
        %3143 = vmatprep.subr.mxu0 0.0
        %3144 = vmatpush1.msra.mxu0 0.0
        %3145 = vmatprep.subr.mxu0 0.0
        %3146 = vmatpush1.msra.mxu0 0.0
        %3147 = vmatprep.subr.mxu0 0.0
        %3148 = vmatpush1.msra.mxu0 0.0
        %3149 = vmatprep.subr.mxu0 0.0
        %3150 = vmatpush1.msra.mxu0 0.0
        %3151 = vmatprep.subr.mxu0 0.0
        %3152 = vmatpush1.msra.mxu0 0.0
        %3153 = vmatprep.subr.mxu0 0.0
        %3154 = vmatpush1.msra.mxu0 0.0
        %3155 = vmatprep.subr.mxu0 0.0
        %3156 = vmatpush1.msra.mxu0 0.0
        %3157 = vmatprep.subr.mxu0 0.0
        %3158 = vmatpush1.msra.mxu0 0.0
        %3159 = vmatprep.subr.mxu0 0.0
        %3160 = vmatpush1.msra.mxu0 0.0
        %3161 = vmatprep.subr.mxu0 0.0
        %3162 = vmatpush1.msra.mxu0 0.0
        %3163 = vmatprep.subr.mxu0 0.0
        %3164 = vmatpush1.msra.mxu0 0.0
        %3165 = vmatprep.subr.mxu0 0.0
        %3166 = vmatpush1.msra.mxu0 0.0
        %3167 = vmatprep.subr.mxu0 0.0
        %3168 = vmatpush1.msra.mxu0 0.0
        %3169 = vmatprep.mubr.f32.mxu0 0.0
        %3170 = vmatmul.mubr.f32.gmra.mrb[0].mxu0 %v3103
        %v3171 = vpop.f32.mrb[0].mxu0
        %v3172 = vadd.f32 0.0, %v3171
        %v3173 = vpop.f32.mrb[0].mxu0
        %v3174 = vadd.f32 0.0, %v3173
        %3175 = vdwg.mxu0
        %3176 = vmatprep.subr.mxu0 0.0
        %3177 = vmatpush1.msra.mxu0 %v3096
        %3178 = vmatprep.subr.mxu0 0.0
        %3179 = vmatpush1.msra.mxu0 0.0
        %3180 = vmatprep.subr.mxu0 0.0
        %3181 = vmatpush1.msra.mxu0 0.0
        %3182 = vmatprep.subr.mxu0 0.0
        %3183 = vmatpush1.msra.mxu0 0.0
        %3184 = vmatprep.subr.mxu0 0.0
        %3185 = vmatpush1.msra.mxu0 0.0
        %3186 = vmatprep.subr.mxu0 0.0
        %3187 = vmatpush1.msra.mxu0 0.0
        %3188 = vmatprep.subr.mxu0 0.0
        %3189 = vmatpush1.msra.mxu0 0.0
        %3190 = vmatprep.subr.mxu0 0.0
        %3191 = vmatpush1.msra.mxu0 0.0
        %3192 = vmatprep.subr.mxu0 0.0
        %3193 = vmatpush1.msra.mxu0 0.0
        %3194 = vmatprep.subr.mxu0 0.0
        %3195 = vmatpush1.msra.mxu0 0.0
        %3196 = vmatprep.subr.mxu0 0.0
        %3197 = vmatpush1.msra.mxu0 0.0
        %3198 = vmatprep.subr.mxu0 0.0
        %3199 = vmatpush1.msra.mxu0 0.0
        %3200 = vmatprep.subr.mxu0 0.0
        %3201 = vmatpush1.msra.mxu0 0.0
        %3202 = vmatprep.subr.mxu0 0.0
        %3203 = vmatpush1.msra.mxu0 0.0
        %3204 = vmatprep.subr.mxu0 0.0
        %3205 = vmatpush1.msra.mxu0 0.0
        %3206 = vmatprep.subr.mxu0 0.0
        %3207 = vmatpush1.msra.mxu0 0.0
        %3208 = vmatprep.subr.mxu0 0.0
        %3209 = vmatpush1.msra.mxu0 0.0
        %3210 = vmatprep.subr.mxu0 0.0
        %3211 = vmatpush1.msra.mxu0 0.0
        %3212 = vmatprep.subr.mxu0 0.0
        %3213 = vmatpush1.msra.mxu0 0.0
        %3214 = vmatprep.subr.mxu0 0.0
        %3215 = vmatpush1.msra.mxu0 0.0
        %3216 = vmatprep.subr.mxu0 0.0
        %3217 = vmatpush1.msra.mxu0 0.0
        %3218 = vmatprep.subr.mxu0 0.0
        %3219 = vmatpush1.msra.mxu0 0.0
        %3220 = vmatprep.subr.mxu0 0.0
        %3221 = vmatpush1.msra.mxu0 0.0
        %3222 = vmatprep.subr.mxu0 0.0
        %3223 = vmatpush1.msra.mxu0 0.0
        %3224 = vmatprep.subr.mxu0 0.0
        %3225 = vmatpush1.msra.mxu0 0.0
        %3226 = vmatprep.subr.mxu0 0.0
        %3227 = vmatpush1.msra.mxu0 0.0
        %3228 = vmatprep.subr.mxu0 0.0
        %3229 = vmatpush1.msra.mxu0 0.0
        %3230 = vmatprep.subr.mxu0 0.0
        %3231 = vmatpush1.msra.mxu0 0.0
        %3232 = vmatprep.subr.mxu0 0.0
        %3233 = vmatpush1.msra.mxu0 0.0
        %3234 = vmatprep.subr.mxu0 0.0
        %3235 = vmatpush1.msra.mxu0 0.0
        %3236 = vmatprep.subr.mxu0 0.0
        %3237 = vmatpush1.msra.mxu0 0.0
        %3238 = vmatprep.subr.mxu0 0.0
        %3239 = vmatpush1.msra.mxu0 0.0
        %3240 = vmatprep.mubr.f32.mxu0 0.0
        %3241 = vmatmul.mubr.f32.gmra.mrb[0].mxu0 %v3103
        %v3242 = vpop.f32.mrb[0].mxu0
        %v3243 = vadd.f32 0.0, %v3242
        %v3244 = vpop.f32.mrb[0].mxu0
        %3245 = vdwg.mxu0
        %v3246 = vadd.f32 %v3086, %v3172
        %v3247 = vadd.f32 %v3087, %v3174
        %v3248 = vadd.f32 %v3088, %v3243
        %v3249 = vld [vmem:[%s4] sm:$0xff]
        %3251 = vset.pattern.permute.xlu0 0
        %3252 = vperm.xlu0 %3251, %v3249
        %v3253 = vpop.permute.xlu0 %3252
        %v3255 = vadd.f32 %v3246, %v3253
        %v3256 = vadd.f32 %v3247, %v3253
        %v3257 = vadd.f32 %v3248, %v3253
        %v3258 = vmul.f32 %v3255, %v1782
        %v3259 = vmul.f32 %v3256, %v1786
        %v3260 = vmul.f32 %v3257, %v1790
        %3264 = vrot.lane.b32.xlu0 %v3258, 19
        %v3265 = vpop.permute.xlu0 %3264
        %3266 = vrot.lane.b32.xlu0 %v3259, 19
        %v3267 = vpop.permute.xlu0 %3266
        %3268 = vrot.lane.b32.xlu0 %v3260, 19
        %v3269 = vpop.permute.xlu0 %3268
        %v3270 = vsel %vm1810, %v3265, %v3267
        %v3271 = vsel %vm1810, %v3267, %v3269
        %3275 = vst.msk [vmem:[#allocation2] sm:$0xff] %vm1816, %v3265
        %3276 = vst [vmem:[#allocation2 + $0x8] sm:$0xff] %v3270
        %3277 = vst.msk [vmem:[#allocation2 + $0x10] sm:$0xff] %vm1819, %v3271
        %v3278 = vld [vmem:[#allocation2] sm:$0xff]
        %v3279 = vld [vmem:[#allocation2 + $0x8] sm:$0xff]
        %v3280 = vld [vmem:[#allocation2 + $0x10] sm:$0xff]
        %v3281 = vld [vmem:[%s5] sm:$0xff]
        %s3282 = scalar_lea.vmem %s5, 8
        %v3283 = vld [vmem:[%s3282] sm:$0xff]
        %3287 = vrot.lane.b32.xlu0 %v3278, 127
        %v3288 = vpop.permute.xlu0 %3287
        %3289 = vrot.lane.b32.xlu0 %v3279, 127
        %v3290 = vpop.permute.xlu0 %3289
        %3291 = vrot.lane.b32.xlu0 %v3280, 127
        %v3292 = vpop.permute.xlu0 %3291
        %v3293 = vsel %vm320, %v3288, %v3290
        %v3294 = vsel %vm320, %v3290, %v3292
        %v3299 = vsel %vm326, %v3283, 0
        %3301 = vmatprep.subr.mxu0 %v3294
        %3302 = vmatpush1.msra.mxu0 %v3293
        %3303 = vmatprep.subr.mxu0 0.0
        %3304 = vmatpush1.msra.mxu0 0.0
        %3305 = vmatprep.subr.mxu0 0.0
        %3306 = vmatpush1.msra.mxu0 0.0
        %3307 = vmatprep.subr.mxu0 0.0
        %3308 = vmatpush1.msra.mxu0 0.0
        %3309 = vmatprep.subr.mxu0 0.0
        %3310 = vmatpush1.msra.mxu0 0.0
        %3311 = vmatprep.subr.mxu0 0.0
        %3312 = vmatpush1.msra.mxu0 0.0
        %3313 = vmatprep.subr.mxu0 0.0
        %3314 = vmatpush1.msra.mxu0 0.0
        %3315 = vmatprep.subr.mxu0 0.0
        %3316 = vmatpush1.msra.mxu0 0.0
        %3317 = vmatprep.subr.mxu0 0.0
        %3318 = vmatpush1.msra.mxu0 0.0
        %3319 = vmatprep.subr.mxu0 0.0
        %3320 = vmatpush1.msra.mxu0 0.0
        %3321 = vmatprep.subr.mxu0 0.0
        %3322 = vmatpush1.msra.mxu0 0.0
        %3323 = vmatprep.subr.mxu0 0.0
        %3324 = vmatpush1.msra.mxu0 0.0
        %3325 = vmatprep.subr.mxu0 0.0
        %3326 = vmatpush1.msra.mxu0 0.0
        %3327 = vmatprep.subr.mxu0 0.0
        %3328 = vmatpush1.msra.mxu0 0.0
        %3329 = vmatprep.subr.mxu0 0.0
        %3330 = vmatpush1.msra.mxu0 0.0
        %3331 = vmatprep.subr.mxu0 0.0
        %3332 = vmatpush1.msra.mxu0 0.0
        %3333 = vmatprep.subr.mxu0 0.0
        %3334 = vmatpush1.msra.mxu0 0.0
        %3335 = vmatprep.subr.mxu0 0.0
        %3336 = vmatpush1.msra.mxu0 0.0
        %3337 = vmatprep.subr.mxu0 0.0
        %3338 = vmatpush1.msra.mxu0 0.0
        %3339 = vmatprep.subr.mxu0 0.0
        %3340 = vmatpush1.msra.mxu0 0.0
        %3341 = vmatprep.subr.mxu0 0.0
        %3342 = vmatpush1.msra.mxu0 0.0
        %3343 = vmatprep.subr.mxu0 0.0
        %3344 = vmatpush1.msra.mxu0 0.0
        %3345 = vmatprep.subr.mxu0 0.0
        %3346 = vmatpush1.msra.mxu0 0.0
        %3347 = vmatprep.subr.mxu0 0.0
        %3348 = vmatpush1.msra.mxu0 0.0
        %3349 = vmatprep.subr.mxu0 0.0
        %3350 = vmatpush1.msra.mxu0 0.0
        %3351 = vmatprep.subr.mxu0 0.0
        %3352 = vmatpush1.msra.mxu0 0.0
        %3353 = vmatprep.subr.mxu0 0.0
        %3354 = vmatpush1.msra.mxu0 0.0
        %3355 = vmatprep.subr.mxu0 0.0
        %3356 = vmatpush1.msra.mxu0 0.0
        %3357 = vmatprep.subr.mxu0 0.0
        %3358 = vmatpush1.msra.mxu0 0.0
        %3359 = vmatprep.subr.mxu0 0.0
        %3360 = vmatpush1.msra.mxu0 0.0
        %3361 = vmatprep.subr.mxu0 0.0
        %3362 = vmatpush1.msra.mxu0 0.0
        %3363 = vmatprep.subr.mxu0 0.0
        %3364 = vmatpush1.msra.mxu0 0.0
        %3365 = vmatprep.mubr.f32.mxu0 0.0
        %3366 = vmatmul.mubr.f32.gmra.mrb[0].mxu0 %v3299
        %v3367 = vpop.f32.mrb[0].mxu0
        %v3368 = vadd.f32 0.0, %v3367
        %v3369 = vpop.f32.mrb[0].mxu0
        %v3370 = vadd.f32 0.0, %v3369
        %3371 = vdwg.mxu0
        %3372 = vmatprep.subr.mxu0 0.0
        %3373 = vmatpush1.msra.mxu0 %v3292
        %3374 = vmatprep.subr.mxu0 0.0
        %3375 = vmatpush1.msra.mxu0 0.0
        %3376 = vmatprep.subr.mxu0 0.0
        %3377 = vmatpush1.msra.mxu0 0.0
        %3378 = vmatprep.subr.mxu0 0.0
        %3379 = vmatpush1.msra.mxu0 0.0
        %3380 = vmatprep.subr.mxu0 0.0
        %3381 = vmatpush1.msra.mxu0 0.0
        %3382 = vmatprep.subr.mxu0 0.0
        %3383 = vmatpush1.msra.mxu0 0.0
        %3384 = vmatprep.subr.mxu0 0.0
        %3385 = vmatpush1.msra.mxu0 0.0
        %3386 = vmatprep.subr.mxu0 0.0
        %3387 = vmatpush1.msra.mxu0 0.0
        %3388 = vmatprep.subr.mxu0 0.0
        %3389 = vmatpush1.msra.mxu0 0.0
        %3390 = vmatprep.subr.mxu0 0.0
        %3391 = vmatpush1.msra.mxu0 0.0
        %3392 = vmatprep.subr.mxu0 0.0
        %3393 = vmatpush1.msra.mxu0 0.0
        %3394 = vmatprep.subr.mxu0 0.0
        %3395 = vmatpush1.msra.mxu0 0.0
        %3396 = vmatprep.subr.mxu0 0.0
        %3397 = vmatpush1.msra.mxu0 0.0
        %3398 = vmatprep.subr.mxu0 0.0
        %3399 = vmatpush1.msra.mxu0 0.0
        %3400 = vmatprep.subr.mxu0 0.0
        %3401 = vmatpush1.msra.mxu0 0.0
        %3402 = vmatprep.subr.mxu0 0.0
        %3403 = vmatpush1.msra.mxu0 0.0
        %3404 = vmatprep.subr.mxu0 0.0
        %3405 = vmatpush1.msra.mxu0 0.0
        %3406 = vmatprep.subr.mxu0 0.0
        %3407 = vmatpush1.msra.mxu0 0.0
        %3408 = vmatprep.subr.mxu0 0.0
        %3409 = vmatpush1.msra.mxu0 0.0
        %3410 = vmatprep.subr.mxu0 0.0
        %3411 = vmatpush1.msra.mxu0 0.0
        %3412 = vmatprep.subr.mxu0 0.0
        %3413 = vmatpush1.msra.mxu0 0.0
        %3414 = vmatprep.subr.mxu0 0.0
        %3415 = vmatpush1.msra.mxu0 0.0
        %3416 = vmatprep.subr.mxu0 0.0
        %3417 = vmatpush1.msra.mxu0 0.0
        %3418 = vmatprep.subr.mxu0 0.0
        %3419 = vmatpush1.msra.mxu0 0.0
        %3420 = vmatprep.subr.mxu0 0.0
        %3421 = vmatpush1.msra.mxu0 0.0
        %3422 = vmatprep.subr.mxu0 0.0
        %3423 = vmatpush1.msra.mxu0 0.0
        %3424 = vmatprep.subr.mxu0 0.0
        %3425 = vmatpush1.msra.mxu0 0.0
        %3426 = vmatprep.subr.mxu0 0.0
        %3427 = vmatpush1.msra.mxu0 0.0
        %3428 = vmatprep.subr.mxu0 0.0
        %3429 = vmatpush1.msra.mxu0 0.0
        %3430 = vmatprep.subr.mxu0 0.0
        %3431 = vmatpush1.msra.mxu0 0.0
        %3432 = vmatprep.subr.mxu0 0.0
        %3433 = vmatpush1.msra.mxu0 0.0
        %3434 = vmatprep.subr.mxu0 0.0
        %3435 = vmatpush1.msra.mxu0 0.0
        %3436 = vmatprep.mubr.f32.mxu0 0.0
        %3437 = vmatmul.mubr.f32.gmra.mrb[0].mxu0 %v3299
        %v3438 = vpop.f32.mrb[0].mxu0
        %v3439 = vadd.f32 0.0, %v3438
        %v3440 = vpop.f32.mrb[0].mxu0
        %3441 = vdwg.mxu0
        %v3443 = vsel %vm326, %v3281, 0
        %3445 = vmatprep.subr.mxu0 %v3279
        %3446 = vmatpush1.msra.mxu0 %v3278
        %3447 = vmatprep.subr.mxu0 0.0
        %3448 = vmatpush1.msra.mxu0 0.0
        %3449 = vmatprep.subr.mxu0 0.0
        %3450 = vmatpush1.msra.mxu0 0.0
        %3451 = vmatprep.subr.mxu0 0.0
        %3452 = vmatpush1.msra.mxu0 0.0
        %3453 = vmatprep.subr.mxu0 0.0
        %3454 = vmatpush1.msra.mxu0 0.0
        %3455 = vmatprep.subr.mxu0 0.0
        %3456 = vmatpush1.msra.mxu0 0.0
        %3457 = vmatprep.subr.mxu0 0.0
        %3458 = vmatpush1.msra.mxu0 0.0
        %3459 = vmatprep.subr.mxu0 0.0
        %3460 = vmatpush1.msra.mxu0 0.0
        %3461 = vmatprep.subr.mxu0 0.0
        %3462 = vmatpush1.msra.mxu0 0.0
        %3463 = vmatprep.subr.mxu0 0.0
        %3464 = vmatpush1.msra.mxu0 0.0
        %3465 = vmatprep.subr.mxu0 0.0
        %3466 = vmatpush1.msra.mxu0 0.0
        %3467 = vmatprep.subr.mxu0 0.0
        %3468 = vmatpush1.msra.mxu0 0.0
        %3469 = vmatprep.subr.mxu0 0.0
        %3470 = vmatpush1.msra.mxu0 0.0
        %3471 = vmatprep.subr.mxu0 0.0
        %3472 = vmatpush1.msra.mxu0 0.0
        %3473 = vmatprep.subr.mxu0 0.0
        %3474 = vmatpush1.msra.mxu0 0.0
        %3475 = vmatprep.subr.mxu0 0.0
        %3476 = vmatpush1.msra.mxu0 0.0
        %3477 = vmatprep.subr.mxu0 0.0
        %3478 = vmatpush1.msra.mxu0 0.0
        %3479 = vmatprep.subr.mxu0 0.0
        %3480 = vmatpush1.msra.mxu0 0.0
        %3481 = vmatprep.subr.mxu0 0.0
        %3482 = vmatpush1.msra.mxu0 0.0
        %3483 = vmatprep.subr.mxu0 0.0
        %3484 = vmatpush1.msra.mxu0 0.0
        %3485 = vmatprep.subr.mxu0 0.0
        %3486 = vmatpush1.msra.mxu0 0.0
        %3487 = vmatprep.subr.mxu0 0.0
        %3488 = vmatpush1.msra.mxu0 0.0
        %3489 = vmatprep.subr.mxu0 0.0
        %3490 = vmatpush1.msra.mxu0 0.0
        %3491 = vmatprep.subr.mxu0 0.0
        %3492 = vmatpush1.msra.mxu0 0.0
        %3493 = vmatprep.subr.mxu0 0.0
        %3494 = vmatpush1.msra.mxu0 0.0
        %3495 = vmatprep.subr.mxu0 0.0
        %3496 = vmatpush1.msra.mxu0 0.0
        %3497 = vmatprep.subr.mxu0 0.0
        %3498 = vmatpush1.msra.mxu0 0.0
        %3499 = vmatprep.subr.mxu0 0.0
        %3500 = vmatpush1.msra.mxu0 0.0
        %3501 = vmatprep.subr.mxu0 0.0
        %3502 = vmatpush1.msra.mxu0 0.0
        %3503 = vmatprep.subr.mxu0 0.0
        %3504 = vmatpush1.msra.mxu0 0.0
        %3505 = vmatprep.subr.mxu0 0.0
        %3506 = vmatpush1.msra.mxu0 0.0
        %3507 = vmatprep.subr.mxu0 0.0
        %3508 = vmatpush1.msra.mxu0 0.0
        %3509 = vmatprep.mubr.f32.mxu0 0.0
        %3510 = vmatmul.mubr.f32.gmra.mrb[0].mxu0 %v3443
        %v3511 = vpop.f32.mrb[0].mxu0
        %v3512 = vadd.f32 %v3368, %v3511
        %v3513 = vpop.f32.mrb[0].mxu0
        %v3514 = vadd.f32 %v3370, %v3513
        %3515 = vdwg.mxu0
        %3516 = vmatprep.subr.mxu0 0.0
        %3517 = vmatpush1.msra.mxu0 %v3280
        %3518 = vmatprep.subr.mxu0 0.0
        %3519 = vmatpush1.msra.mxu0 0.0
        %3520 = vmatprep.subr.mxu0 0.0
        %3521 = vmatpush1.msra.mxu0 0.0
        %3522 = vmatprep.subr.mxu0 0.0
        %3523 = vmatpush1.msra.mxu0 0.0
        %3524 = vmatprep.subr.mxu0 0.0
        %3525 = vmatpush1.msra.mxu0 0.0
        %3526 = vmatprep.subr.mxu0 0.0
        %3527 = vmatpush1.msra.mxu0 0.0
        %3528 = vmatprep.subr.mxu0 0.0
        %3529 = vmatpush1.msra.mxu0 0.0
        %3530 = vmatprep.subr.mxu0 0.0
        %3531 = vmatpush1.msra.mxu0 0.0
        %3532 = vmatprep.subr.mxu0 0.0
        %3533 = vmatpush1.msra.mxu0 0.0
        %3534 = vmatprep.subr.mxu0 0.0
        %3535 = vmatpush1.msra.mxu0 0.0
        %3536 = vmatprep.subr.mxu0 0.0
        %3537 = vmatpush1.msra.mxu0 0.0
        %3538 = vmatprep.subr.mxu0 0.0
        %3539 = vmatpush1.msra.mxu0 0.0
        %3540 = vmatprep.subr.mxu0 0.0
        %3541 = vmatpush1.msra.mxu0 0.0
        %3542 = vmatprep.subr.mxu0 0.0
        %3543 = vmatpush1.msra.mxu0 0.0
        %3544 = vmatprep.subr.mxu0 0.0
        %3545 = vmatpush1.msra.mxu0 0.0
        %3546 = vmatprep.subr.mxu0 0.0
        %3547 = vmatpush1.msra.mxu0 0.0
        %3548 = vmatprep.subr.mxu0 0.0
        %3549 = vmatpush1.msra.mxu0 0.0
        %3550 = vmatprep.subr.mxu0 0.0
        %3551 = vmatpush1.msra.mxu0 0.0
        %3552 = vmatprep.subr.mxu0 0.0
        %3553 = vmatpush1.msra.mxu0 0.0
        %3554 = vmatprep.subr.mxu0 0.0
        %3555 = vmatpush1.msra.mxu0 0.0
        %3556 = vmatprep.subr.mxu0 0.0
        %3557 = vmatpush1.msra.mxu0 0.0
        %3558 = vmatprep.subr.mxu0 0.0
        %3559 = vmatpush1.msra.mxu0 0.0
        %3560 = vmatprep.subr.mxu0 0.0
        %3561 = vmatpush1.msra.mxu0 0.0
        %3562 = vmatprep.subr.mxu0 0.0
        %3563 = vmatpush1.msra.mxu0 0.0
        %3564 = vmatprep.subr.mxu0 0.0
        %3565 = vmatpush1.msra.mxu0 0.0
        %3566 = vmatprep.subr.mxu0 0.0
        %3567 = vmatpush1.msra.mxu0 0.0
        %3568 = vmatprep.subr.mxu0 0.0
        %3569 = vmatpush1.msra.mxu0 0.0
        %3570 = vmatprep.subr.mxu0 0.0
        %3571 = vmatpush1.msra.mxu0 0.0
        %3572 = vmatprep.subr.mxu0 0.0
        %3573 = vmatpush1.msra.mxu0 0.0
        %3574 = vmatprep.subr.mxu0 0.0
        %3575 = vmatpush1.msra.mxu0 0.0
        %3576 = vmatprep.subr.mxu0 0.0
        %3577 = vmatpush1.msra.mxu0 0.0
        %3578 = vmatprep.subr.mxu0 0.0
        %3579 = vmatpush1.msra.mxu0 0.0
        %3580 = vmatprep.mubr.f32.mxu0 0.0
        %3581 = vmatmul.mubr.f32.gmra.mrb[0].mxu0 %v3443
        %v3582 = vpop.f32.mrb[0].mxu0
        %v3583 = vadd.f32 %v3439, %v3582
        %v3584 = vpop.f32.mrb[0].mxu0
        %3585 = vdwg.mxu0
        %s3586 = scalar_lea.vmem %s5, 16
        %v3587 = vld [vmem:[%s3586] sm:$0xff]
        %3588 = vrot.lane.b32.xlu0 %v3278, 126
        %v3589 = vpop.permute.xlu0 %3588
        %3590 = vrot.lane.b32.xlu0 %v3279, 126
        %v3591 = vpop.permute.xlu0 %3590
        %3592 = vrot.lane.b32.xlu0 %v3280, 126
        %v3593 = vpop.permute.xlu0 %3592
        %v3594 = vsel %vm623, %v3589, %v3591
        %v3595 = vsel %vm623, %v3591, %v3593
        %v3600 = vsel %vm326, %v3587, 0
        %3602 = vmatprep.subr.mxu0 %v3595
        %3603 = vmatpush1.msra.mxu0 %v3594
        %3604 = vmatprep.subr.mxu0 0.0
        %3605 = vmatpush1.msra.mxu0 0.0
        %3606 = vmatprep.subr.mxu0 0.0
        %3607 = vmatpush1.msra.mxu0 0.0
        %3608 = vmatprep.subr.mxu0 0.0
        %3609 = vmatpush1.msra.mxu0 0.0
        %3610 = vmatprep.subr.mxu0 0.0
        %3611 = vmatpush1.msra.mxu0 0.0
        %3612 = vmatprep.subr.mxu0 0.0
        %3613 = vmatpush1.msra.mxu0 0.0
        %3614 = vmatprep.subr.mxu0 0.0
        %3615 = vmatpush1.msra.mxu0 0.0
        %3616 = vmatprep.subr.mxu0 0.0
        %3617 = vmatpush1.msra.mxu0 0.0
        %3618 = vmatprep.subr.mxu0 0.0
        %3619 = vmatpush1.msra.mxu0 0.0
        %3620 = vmatprep.subr.mxu0 0.0
        %3621 = vmatpush1.msra.mxu0 0.0
        %3622 = vmatprep.subr.mxu0 0.0
        %3623 = vmatpush1.msra.mxu0 0.0
        %3624 = vmatprep.subr.mxu0 0.0
        %3625 = vmatpush1.msra.mxu0 0.0
        %3626 = vmatprep.subr.mxu0 0.0
        %3627 = vmatpush1.msra.mxu0 0.0
        %3628 = vmatprep.subr.mxu0 0.0
        %3629 = vmatpush1.msra.mxu0 0.0
        %3630 = vmatprep.subr.mxu0 0.0
        %3631 = vmatpush1.msra.mxu0 0.0
        %3632 = vmatprep.subr.mxu0 0.0
        %3633 = vmatpush1.msra.mxu0 0.0
        %3634 = vmatprep.subr.mxu0 0.0
        %3635 = vmatpush1.msra.mxu0 0.0
        %3636 = vmatprep.subr.mxu0 0.0
        %3637 = vmatpush1.msra.mxu0 0.0
        %3638 = vmatprep.subr.mxu0 0.0
        %3639 = vmatpush1.msra.mxu0 0.0
        %3640 = vmatprep.subr.mxu0 0.0
        %3641 = vmatpush1.msra.mxu0 0.0
        %3642 = vmatprep.subr.mxu0 0.0
        %3643 = vmatpush1.msra.mxu0 0.0
        %3644 = vmatprep.subr.mxu0 0.0
        %3645 = vmatpush1.msra.mxu0 0.0
        %3646 = vmatprep.subr.mxu0 0.0
        %3647 = vmatpush1.msra.mxu0 0.0
        %3648 = vmatprep.subr.mxu0 0.0
        %3649 = vmatpush1.msra.mxu0 0.0
        %3650 = vmatprep.subr.mxu0 0.0
        %3651 = vmatpush1.msra.mxu0 0.0
        %3652 = vmatprep.subr.mxu0 0.0
        %3653 = vmatpush1.msra.mxu0 0.0
        %3654 = vmatprep.subr.mxu0 0.0
        %3655 = vmatpush1.msra.mxu0 0.0
        %3656 = vmatprep.subr.mxu0 0.0
        %3657 = vmatpush1.msra.mxu0 0.0
        %3658 = vmatprep.subr.mxu0 0.0
        %3659 = vmatpush1.msra.mxu0 0.0
        %3660 = vmatprep.subr.mxu0 0.0
        %3661 = vmatpush1.msra.mxu0 0.0
        %3662 = vmatprep.subr.mxu0 0.0
        %3663 = vmatpush1.msra.mxu0 0.0
        %3664 = vmatprep.subr.mxu0 0.0
        %3665 = vmatpush1.msra.mxu0 0.0
        %3666 = vmatprep.mubr.f32.mxu0 0.0
        %3667 = vmatmul.mubr.f32.gmra.mrb[0].mxu0 %v3600
        %v3668 = vpop.f32.mrb[0].mxu0
        %v3669 = vadd.f32 0.0, %v3668
        %v3670 = vpop.f32.mrb[0].mxu0
        %v3671 = vadd.f32 0.0, %v3670
        %3672 = vdwg.mxu0
        %3673 = vmatprep.subr.mxu0 0.0
        %3674 = vmatpush1.msra.mxu0 %v3593
        %3675 = vmatprep.subr.mxu0 0.0
        %3676 = vmatpush1.msra.mxu0 0.0
        %3677 = vmatprep.subr.mxu0 0.0
        %3678 = vmatpush1.msra.mxu0 0.0
        %3679 = vmatprep.subr.mxu0 0.0
        %3680 = vmatpush1.msra.mxu0 0.0
        %3681 = vmatprep.subr.mxu0 0.0
        %3682 = vmatpush1.msra.mxu0 0.0
        %3683 = vmatprep.subr.mxu0 0.0
        %3684 = vmatpush1.msra.mxu0 0.0
        %3685 = vmatprep.subr.mxu0 0.0
        %3686 = vmatpush1.msra.mxu0 0.0
        %3687 = vmatprep.subr.mxu0 0.0
        %3688 = vmatpush1.msra.mxu0 0.0
        %3689 = vmatprep.subr.mxu0 0.0
        %3690 = vmatpush1.msra.mxu0 0.0
        %3691 = vmatprep.subr.mxu0 0.0
        %3692 = vmatpush1.msra.mxu0 0.0
        %3693 = vmatprep.subr.mxu0 0.0
        %3694 = vmatpush1.msra.mxu0 0.0
        %3695 = vmatprep.subr.mxu0 0.0
        %3696 = vmatpush1.msra.mxu0 0.0
        %3697 = vmatprep.subr.mxu0 0.0
        %3698 = vmatpush1.msra.mxu0 0.0
        %3699 = vmatprep.subr.mxu0 0.0
        %3700 = vmatpush1.msra.mxu0 0.0
        %3701 = vmatprep.subr.mxu0 0.0
        %3702 = vmatpush1.msra.mxu0 0.0
        %3703 = vmatprep.subr.mxu0 0.0
        %3704 = vmatpush1.msra.mxu0 0.0
        %3705 = vmatprep.subr.mxu0 0.0
        %3706 = vmatpush1.msra.mxu0 0.0
        %3707 = vmatprep.subr.mxu0 0.0
        %3708 = vmatpush1.msra.mxu0 0.0
        %3709 = vmatprep.subr.mxu0 0.0
        %3710 = vmatpush1.msra.mxu0 0.0
        %3711 = vmatprep.subr.mxu0 0.0
        %3712 = vmatpush1.msra.mxu0 0.0
        %3713 = vmatprep.subr.mxu0 0.0
        %3714 = vmatpush1.msra.mxu0 0.0
        %3715 = vmatprep.subr.mxu0 0.0
        %3716 = vmatpush1.msra.mxu0 0.0
        %3717 = vmatprep.subr.mxu0 0.0
        %3718 = vmatpush1.msra.mxu0 0.0
        %3719 = vmatprep.subr.mxu0 0.0
        %3720 = vmatpush1.msra.mxu0 0.0
        %3721 = vmatprep.subr.mxu0 0.0
        %3722 = vmatpush1.msra.mxu0 0.0
        %3723 = vmatprep.subr.mxu0 0.0
        %3724 = vmatpush1.msra.mxu0 0.0
        %3725 = vmatprep.subr.mxu0 0.0
        %3726 = vmatpush1.msra.mxu0 0.0
        %3727 = vmatprep.subr.mxu0 0.0
        %3728 = vmatpush1.msra.mxu0 0.0
        %3729 = vmatprep.subr.mxu0 0.0
        %3730 = vmatpush1.msra.mxu0 0.0
        %3731 = vmatprep.subr.mxu0 0.0
        %3732 = vmatpush1.msra.mxu0 0.0
        %3733 = vmatprep.subr.mxu0 0.0
        %3734 = vmatpush1.msra.mxu0 0.0
        %3735 = vmatprep.subr.mxu0 0.0
        %3736 = vmatpush1.msra.mxu0 0.0
        %3737 = vmatprep.mubr.f32.mxu0 0.0
        %3738 = vmatmul.mubr.f32.gmra.mrb[0].mxu0 %v3600
        %v3739 = vpop.f32.mrb[0].mxu0
        %v3740 = vadd.f32 0.0, %v3739
        %v3741 = vpop.f32.mrb[0].mxu0
        %3742 = vdwg.mxu0
        %v3743 = vadd.f32 %v3512, %v3669
        %v3744 = vadd.f32 %v3514, %v3671
        %v3745 = vadd.f32 %v3583, %v3740
        %s3746 = scalar_lea.vmem %s5, 24
        %v3747 = vld [vmem:[%s3746] sm:$0xff]
        %3748 = vrot.lane.b32.xlu0 %v3278, 110
        %v3749 = vpop.permute.xlu0 %3748
        %3750 = vrot.lane.b32.xlu0 %v3279, 110
        %v3751 = vpop.permute.xlu0 %3750
        %3752 = vrot.lane.b32.xlu0 %v3280, 110
        %v3753 = vpop.permute.xlu0 %3752
        %v3754 = vsel %vm784, %v3749, %v3751
        %v3755 = vsel %vm784, %v3751, %v3753
        %v3760 = vsel %vm326, %v3747, 0
        %3762 = vmatprep.subr.mxu0 %v3755
        %3763 = vmatpush1.msra.mxu0 %v3754
        %3764 = vmatprep.subr.mxu0 0.0
        %3765 = vmatpush1.msra.mxu0 0.0
        %3766 = vmatprep.subr.mxu0 0.0
        %3767 = vmatpush1.msra.mxu0 0.0
        %3768 = vmatprep.subr.mxu0 0.0
        %3769 = vmatpush1.msra.mxu0 0.0
        %3770 = vmatprep.subr.mxu0 0.0
        %3771 = vmatpush1.msra.mxu0 0.0
        %3772 = vmatprep.subr.mxu0 0.0
        %3773 = vmatpush1.msra.mxu0 0.0
        %3774 = vmatprep.subr.mxu0 0.0
        %3775 = vmatpush1.msra.mxu0 0.0
        %3776 = vmatprep.subr.mxu0 0.0
        %3777 = vmatpush1.msra.mxu0 0.0
        %3778 = vmatprep.subr.mxu0 0.0
        %3779 = vmatpush1.msra.mxu0 0.0
        %3780 = vmatprep.subr.mxu0 0.0
        %3781 = vmatpush1.msra.mxu0 0.0
        %3782 = vmatprep.subr.mxu0 0.0
        %3783 = vmatpush1.msra.mxu0 0.0
        %3784 = vmatprep.subr.mxu0 0.0
        %3785 = vmatpush1.msra.mxu0 0.0
        %3786 = vmatprep.subr.mxu0 0.0
        %3787 = vmatpush1.msra.mxu0 0.0
        %3788 = vmatprep.subr.mxu0 0.0
        %3789 = vmatpush1.msra.mxu0 0.0
        %3790 = vmatprep.subr.mxu0 0.0
        %3791 = vmatpush1.msra.mxu0 0.0
        %3792 = vmatprep.subr.mxu0 0.0
        %3793 = vmatpush1.msra.mxu0 0.0
        %3794 = vmatprep.subr.mxu0 0.0
        %3795 = vmatpush1.msra.mxu0 0.0
        %3796 = vmatprep.subr.mxu0 0.0
        %3797 = vmatpush1.msra.mxu0 0.0
        %3798 = vmatprep.subr.mxu0 0.0
        %3799 = vmatpush1.msra.mxu0 0.0
        %3800 = vmatprep.subr.mxu0 0.0
        %3801 = vmatpush1.msra.mxu0 0.0
        %3802 = vmatprep.subr.mxu0 0.0
        %3803 = vmatpush1.msra.mxu0 0.0
        %3804 = vmatprep.subr.mxu0 0.0
        %3805 = vmatpush1.msra.mxu0 0.0
        %3806 = vmatprep.subr.mxu0 0.0
        %3807 = vmatpush1.msra.mxu0 0.0
        %3808 = vmatprep.subr.mxu0 0.0
        %3809 = vmatpush1.msra.mxu0 0.0
        %3810 = vmatprep.subr.mxu0 0.0
        %3811 = vmatpush1.msra.mxu0 0.0
        %3812 = vmatprep.subr.mxu0 0.0
        %3813 = vmatpush1.msra.mxu0 0.0
        %3814 = vmatprep.subr.mxu0 0.0
        %3815 = vmatpush1.msra.mxu0 0.0
        %3816 = vmatprep.subr.mxu0 0.0
        %3817 = vmatpush1.msra.mxu0 0.0
        %3818 = vmatprep.subr.mxu0 0.0
        %3819 = vmatpush1.msra.mxu0 0.0
        %3820 = vmatprep.subr.mxu0 0.0
        %3821 = vmatpush1.msra.mxu0 0.0
        %3822 = vmatprep.subr.mxu0 0.0
        %3823 = vmatpush1.msra.mxu0 0.0
        %3824 = vmatprep.subr.mxu0 0.0
        %3825 = vmatpush1.msra.mxu0 0.0
        %3826 = vmatprep.mubr.f32.mxu0 0.0
        %3827 = vmatmul.mubr.f32.gmra.mrb[0].mxu0 %v3760
        %v3828 = vpop.f32.mrb[0].mxu0
        %v3829 = vadd.f32 0.0, %v3828
        %v3830 = vpop.f32.mrb[0].mxu0
        %v3831 = vadd.f32 0.0, %v3830
        %3832 = vdwg.mxu0
        %3833 = vmatprep.subr.mxu0 0.0
        %3834 = vmatpush1.msra.mxu0 %v3753
        %3835 = vmatprep.subr.mxu0 0.0
        %3836 = vmatpush1.msra.mxu0 0.0
        %3837 = vmatprep.subr.mxu0 0.0
        %3838 = vmatpush1.msra.mxu0 0.0
        %3839 = vmatprep.subr.mxu0 0.0
        %3840 = vmatpush1.msra.mxu0 0.0
        %3841 = vmatprep.subr.mxu0 0.0
        %3842 = vmatpush1.msra.mxu0 0.0
        %3843 = vmatprep.subr.mxu0 0.0
        %3844 = vmatpush1.msra.mxu0 0.0
        %3845 = vmatprep.subr.mxu0 0.0
        %3846 = vmatpush1.msra.mxu0 0.0
        %3847 = vmatprep.subr.mxu0 0.0
        %3848 = vmatpush1.msra.mxu0 0.0
        %3849 = vmatprep.subr.mxu0 0.0
        %3850 = vmatpush1.msra.mxu0 0.0
        %3851 = vmatprep.subr.mxu0 0.0
        %3852 = vmatpush1.msra.mxu0 0.0
        %3853 = vmatprep.subr.mxu0 0.0
        %3854 = vmatpush1.msra.mxu0 0.0
        %3855 = vmatprep.subr.mxu0 0.0
        %3856 = vmatpush1.msra.mxu0 0.0
        %3857 = vmatprep.subr.mxu0 0.0
        %3858 = vmatpush1.msra.mxu0 0.0
        %3859 = vmatprep.subr.mxu0 0.0
        %3860 = vmatpush1.msra.mxu0 0.0
        %3861 = vmatprep.subr.mxu0 0.0
        %3862 = vmatpush1.msra.mxu0 0.0
        %3863 = vmatprep.subr.mxu0 0.0
        %3864 = vmatpush1.msra.mxu0 0.0
        %3865 = vmatprep.subr.mxu0 0.0
        %3866 = vmatpush1.msra.mxu0 0.0
        %3867 = vmatprep.subr.mxu0 0.0
        %3868 = vmatpush1.msra.mxu0 0.0
        %3869 = vmatprep.subr.mxu0 0.0
        %3870 = vmatpush1.msra.mxu0 0.0
        %3871 = vmatprep.subr.mxu0 0.0
        %3872 = vmatpush1.msra.mxu0 0.0
        %3873 = vmatprep.subr.mxu0 0.0
        %3874 = vmatpush1.msra.mxu0 0.0
        %3875 = vmatprep.subr.mxu0 0.0
        %3876 = vmatpush1.msra.mxu0 0.0
        %3877 = vmatprep.subr.mxu0 0.0
        %3878 = vmatpush1.msra.mxu0 0.0
        %3879 = vmatprep.subr.mxu0 0.0
        %3880 = vmatpush1.msra.mxu0 0.0
        %3881 = vmatprep.subr.mxu0 0.0
        %3882 = vmatpush1.msra.mxu0 0.0
        %3883 = vmatprep.subr.mxu0 0.0
        %3884 = vmatpush1.msra.mxu0 0.0
        %3885 = vmatprep.subr.mxu0 0.0
        %3886 = vmatpush1.msra.mxu0 0.0
        %3887 = vmatprep.subr.mxu0 0.0
        %3888 = vmatpush1.msra.mxu0 0.0
        %3889 = vmatprep.subr.mxu0 0.0
        %3890 = vmatpush1.msra.mxu0 0.0
        %3891 = vmatprep.subr.mxu0 0.0
        %3892 = vmatpush1.msra.mxu0 0.0
        %3893 = vmatprep.subr.mxu0 0.0
        %3894 = vmatpush1.msra.mxu0 0.0
        %3895 = vmatprep.subr.mxu0 0.0
        %3896 = vmatpush1.msra.mxu0 0.0
        %3897 = vmatprep.mubr.f32.mxu0 0.0
        %3898 = vmatmul.mubr.f32.gmra.mrb[0].mxu0 %v3760
        %v3899 = vpop.f32.mrb[0].mxu0
        %v3900 = vadd.f32 0.0, %v3899
        %v3901 = vpop.f32.mrb[0].mxu0
        %3902 = vdwg.mxu0
        %v3903 = vadd.f32 %v3743, %v3829
        %v3904 = vadd.f32 %v3744, %v3831
        %v3905 = vadd.f32 %v3745, %v3900
        %s3906 = scalar_lea.vmem %s5, 32
        %v3907 = vld [vmem:[%s3906] sm:$0xff]
        %3908 = vrot.lane.b32.xlu0 %v3278, 109
        %v3909 = vpop.permute.xlu0 %3908
        %3910 = vrot.lane.b32.xlu0 %v3279, 109
        %v3911 = vpop.permute.xlu0 %3910
        %3912 = vrot.lane.b32.xlu0 %v3280, 109
        %v3913 = vpop.permute.xlu0 %3912
        %v3914 = vsel %vm945, %v3909, %v3911
        %v3915 = vsel %vm945, %v3911, %v3913
        %v3920 = vsel %vm326, %v3907, 0
        %3922 = vmatprep.subr.mxu0 %v3915
        %3923 = vmatpush1.msra.mxu0 %v3914
        %3924 = vmatprep.subr.mxu0 0.0
        %3925 = vmatpush1.msra.mxu0 0.0
        %3926 = vmatprep.subr.mxu0 0.0
        %3927 = vmatpush1.msra.mxu0 0.0
        %3928 = vmatprep.subr.mxu0 0.0
        %3929 = vmatpush1.msra.mxu0 0.0
        %3930 = vmatprep.subr.mxu0 0.0
        %3931 = vmatpush1.msra.mxu0 0.0
        %3932 = vmatprep.subr.mxu0 0.0
        %3933 = vmatpush1.msra.mxu0 0.0
        %3934 = vmatprep.subr.mxu0 0.0
        %3935 = vmatpush1.msra.mxu0 0.0
        %3936 = vmatprep.subr.mxu0 0.0
        %3937 = vmatpush1.msra.mxu0 0.0
        %3938 = vmatprep.subr.mxu0 0.0
        %3939 = vmatpush1.msra.mxu0 0.0
        %3940 = vmatprep.subr.mxu0 0.0
        %3941 = vmatpush1.msra.mxu0 0.0
        %3942 = vmatprep.subr.mxu0 0.0
        %3943 = vmatpush1.msra.mxu0 0.0
        %3944 = vmatprep.subr.mxu0 0.0
        %3945 = vmatpush1.msra.mxu0 0.0
        %3946 = vmatprep.subr.mxu0 0.0
        %3947 = vmatpush1.msra.mxu0 0.0
        %3948 = vmatprep.subr.mxu0 0.0
        %3949 = vmatpush1.msra.mxu0 0.0
        %3950 = vmatprep.subr.mxu0 0.0
        %3951 = vmatpush1.msra.mxu0 0.0
        %3952 = vmatprep.subr.mxu0 0.0
        %3953 = vmatpush1.msra.mxu0 0.0
        %3954 = vmatprep.subr.mxu0 0.0
        %3955 = vmatpush1.msra.mxu0 0.0
        %3956 = vmatprep.subr.mxu0 0.0
        %3957 = vmatpush1.msra.mxu0 0.0
        %3958 = vmatprep.subr.mxu0 0.0
        %3959 = vmatpush1.msra.mxu0 0.0
        %3960 = vmatprep.subr.mxu0 0.0
        %3961 = vmatpush1.msra.mxu0 0.0
        %3962 = vmatprep.subr.mxu0 0.0
        %3963 = vmatpush1.msra.mxu0 0.0
        %3964 = vmatprep.subr.mxu0 0.0
        %3965 = vmatpush1.msra.mxu0 0.0
        %3966 = vmatprep.subr.mxu0 0.0
        %3967 = vmatpush1.msra.mxu0 0.0
        %3968 = vmatprep.subr.mxu0 0.0
        %3969 = vmatpush1.msra.mxu0 0.0
        %3970 = vmatprep.subr.mxu0 0.0
        %3971 = vmatpush1.msra.mxu0 0.0
        %3972 = vmatprep.subr.mxu0 0.0
        %3973 = vmatpush1.msra.mxu0 0.0
        %3974 = vmatprep.subr.mxu0 0.0
        %3975 = vmatpush1.msra.mxu0 0.0
        %3976 = vmatprep.subr.mxu0 0.0
        %3977 = vmatpush1.msra.mxu0 0.0
        %3978 = vmatprep.subr.mxu0 0.0
        %3979 = vmatpush1.msra.mxu0 0.0
        %3980 = vmatprep.subr.mxu0 0.0
        %3981 = vmatpush1.msra.mxu0 0.0
        %3982 = vmatprep.subr.mxu0 0.0
        %3983 = vmatpush1.msra.mxu0 0.0
        %3984 = vmatprep.subr.mxu0 0.0
        %3985 = vmatpush1.msra.mxu0 0.0
        %3986 = vmatprep.mubr.f32.mxu0 0.0
        %3987 = vmatmul.mubr.f32.gmra.mrb[0].mxu0 %v3920
        %v3988 = vpop.f32.mrb[0].mxu0
        %v3989 = vadd.f32 0.0, %v3988
        %v3990 = vpop.f32.mrb[0].mxu0
        %v3991 = vadd.f32 0.0, %v3990
        %3992 = vdwg.mxu0
        %3993 = vmatprep.subr.mxu0 0.0
        %3994 = vmatpush1.msra.mxu0 %v3913
        %3995 = vmatprep.subr.mxu0 0.0
        %3996 = vmatpush1.msra.mxu0 0.0
        %3997 = vmatprep.subr.mxu0 0.0
        %3998 = vmatpush1.msra.mxu0 0.0
        %3999 = vmatprep.subr.mxu0 0.0
        %4000 = vmatpush1.msra.mxu0 0.0
        %4001 = vmatprep.subr.mxu0 0.0
        %4002 = vmatpush1.msra.mxu0 0.0
        %4003 = vmatprep.subr.mxu0 0.0
        %4004 = vmatpush1.msra.mxu0 0.0
        %4005 = vmatprep.subr.mxu0 0.0
        %4006 = vmatpush1.msra.mxu0 0.0
        %4007 = vmatprep.subr.mxu0 0.0
        %4008 = vmatpush1.msra.mxu0 0.0
        %4009 = vmatprep.subr.mxu0 0.0
        %4010 = vmatpush1.msra.mxu0 0.0
        %4011 = vmatprep.subr.mxu0 0.0
        %4012 = vmatpush1.msra.mxu0 0.0
        %4013 = vmatprep.subr.mxu0 0.0
        %4014 = vmatpush1.msra.mxu0 0.0
        %4015 = vmatprep.subr.mxu0 0.0
        %4016 = vmatpush1.msra.mxu0 0.0
        %4017 = vmatprep.subr.mxu0 0.0
        %4018 = vmatpush1.msra.mxu0 0.0
        %4019 = vmatprep.subr.mxu0 0.0
        %4020 = vmatpush1.msra.mxu0 0.0
        %4021 = vmatprep.subr.mxu0 0.0
        %4022 = vmatpush1.msra.mxu0 0.0
        %4023 = vmatprep.subr.mxu0 0.0
        %4024 = vmatpush1.msra.mxu0 0.0
        %4025 = vmatprep.subr.mxu0 0.0
        %4026 = vmatpush1.msra.mxu0 0.0
        %4027 = vmatprep.subr.mxu0 0.0
        %4028 = vmatpush1.msra.mxu0 0.0
        %4029 = vmatprep.subr.mxu0 0.0
        %4030 = vmatpush1.msra.mxu0 0.0
        %4031 = vmatprep.subr.mxu0 0.0
        %4032 = vmatpush1.msra.mxu0 0.0
        %4033 = vmatprep.subr.mxu0 0.0
        %4034 = vmatpush1.msra.mxu0 0.0
        %4035 = vmatprep.subr.mxu0 0.0
        %4036 = vmatpush1.msra.mxu0 0.0
        %4037 = vmatprep.subr.mxu0 0.0
        %4038 = vmatpush1.msra.mxu0 0.0
        %4039 = vmatprep.subr.mxu0 0.0
        %4040 = vmatpush1.msra.mxu0 0.0
        %4041 = vmatprep.subr.mxu0 0.0
        %4042 = vmatpush1.msra.mxu0 0.0
        %4043 = vmatprep.subr.mxu0 0.0
        %4044 = vmatpush1.msra.mxu0 0.0
        %4045 = vmatprep.subr.mxu0 0.0
        %4046 = vmatpush1.msra.mxu0 0.0
        %4047 = vmatprep.subr.mxu0 0.0
        %4048 = vmatpush1.msra.mxu0 0.0
        %4049 = vmatprep.subr.mxu0 0.0
        %4050 = vmatpush1.msra.mxu0 0.0
        %4051 = vmatprep.subr.mxu0 0.0
        %4052 = vmatpush1.msra.mxu0 0.0
        %4053 = vmatprep.subr.mxu0 0.0
        %4054 = vmatpush1.msra.mxu0 0.0
        %4055 = vmatprep.subr.mxu0 0.0
        %4056 = vmatpush1.msra.mxu0 0.0
        %4057 = vmatprep.mubr.f32.mxu0 0.0
        %4058 = vmatmul.mubr.f32.gmra.mrb[0].mxu0 %v3920
        %v4059 = vpop.f32.mrb[0].mxu0
        %v4060 = vadd.f32 0.0, %v4059
        %v4061 = vpop.f32.mrb[0].mxu0
        %4062 = vdwg.mxu0
        %v4063 = vadd.f32 %v3903, %v3989
        %v4064 = vadd.f32 %v3904, %v3991
        %v4065 = vadd.f32 %v3905, %v4060
        %s4066 = scalar_lea.vmem %s5, 40
        %v4067 = vld [vmem:[%s4066] sm:$0xff]
        %4068 = vrot.lane.b32.xlu0 %v3278, 108
        %v4069 = vpop.permute.xlu0 %4068
        %4070 = vrot.lane.b32.xlu0 %v3279, 108
        %v4071 = vpop.permute.xlu0 %4070
        %4072 = vrot.lane.b32.xlu0 %v3280, 108
        %v4073 = vpop.permute.xlu0 %4072
        %v4074 = vsel %vm1106, %v4069, %v4071
        %v4075 = vsel %vm1106, %v4071, %v4073
        %v4080 = vsel %vm326, %v4067, 0
        %4082 = vmatprep.subr.mxu0 %v4075
        %4083 = vmatpush1.msra.mxu0 %v4074
        %4084 = vmatprep.subr.mxu0 0.0
        %4085 = vmatpush1.msra.mxu0 0.0
        %4086 = vmatprep.subr.mxu0 0.0
        %4087 = vmatpush1.msra.mxu0 0.0
        %4088 = vmatprep.subr.mxu0 0.0
        %4089 = vmatpush1.msra.mxu0 0.0
        %4090 = vmatprep.subr.mxu0 0.0
        %4091 = vmatpush1.msra.mxu0 0.0
        %4092 = vmatprep.subr.mxu0 0.0
        %4093 = vmatpush1.msra.mxu0 0.0
        %4094 = vmatprep.subr.mxu0 0.0
        %4095 = vmatpush1.msra.mxu0 0.0
        %4096 = vmatprep.subr.mxu0 0.0
        %4097 = vmatpush1.msra.mxu0 0.0
        %4098 = vmatprep.subr.mxu0 0.0
        %4099 = vmatpush1.msra.mxu0 0.0
        %4100 = vmatprep.subr.mxu0 0.0
        %4101 = vmatpush1.msra.mxu0 0.0
        %4102 = vmatprep.subr.mxu0 0.0
        %4103 = vmatpush1.msra.mxu0 0.0
        %4104 = vmatprep.subr.mxu0 0.0
        %4105 = vmatpush1.msra.mxu0 0.0
        %4106 = vmatprep.subr.mxu0 0.0
        %4107 = vmatpush1.msra.mxu0 0.0
        %4108 = vmatprep.subr.mxu0 0.0
        %4109 = vmatpush1.msra.mxu0 0.0
        %4110 = vmatprep.subr.mxu0 0.0
        %4111 = vmatpush1.msra.mxu0 0.0
        %4112 = vmatprep.subr.mxu0 0.0
        %4113 = vmatpush1.msra.mxu0 0.0
        %4114 = vmatprep.subr.mxu0 0.0
        %4115 = vmatpush1.msra.mxu0 0.0
        %4116 = vmatprep.subr.mxu0 0.0
        %4117 = vmatpush1.msra.mxu0 0.0
        %4118 = vmatprep.subr.mxu0 0.0
        %4119 = vmatpush1.msra.mxu0 0.0
        %4120 = vmatprep.subr.mxu0 0.0
        %4121 = vmatpush1.msra.mxu0 0.0
        %4122 = vmatprep.subr.mxu0 0.0
        %4123 = vmatpush1.msra.mxu0 0.0
        %4124 = vmatprep.subr.mxu0 0.0
        %4125 = vmatpush1.msra.mxu0 0.0
        %4126 = vmatprep.subr.mxu0 0.0
        %4127 = vmatpush1.msra.mxu0 0.0
        %4128 = vmatprep.subr.mxu0 0.0
        %4129 = vmatpush1.msra.mxu0 0.0
        %4130 = vmatprep.subr.mxu0 0.0
        %4131 = vmatpush1.msra.mxu0 0.0
        %4132 = vmatprep.subr.mxu0 0.0
        %4133 = vmatpush1.msra.mxu0 0.0
        %4134 = vmatprep.subr.mxu0 0.0
        %4135 = vmatpush1.msra.mxu0 0.0
        %4136 = vmatprep.subr.mxu0 0.0
        %4137 = vmatpush1.msra.mxu0 0.0
        %4138 = vmatprep.subr.mxu0 0.0
        %4139 = vmatpush1.msra.mxu0 0.0
        %4140 = vmatprep.subr.mxu0 0.0
        %4141 = vmatpush1.msra.mxu0 0.0
        %4142 = vmatprep.subr.mxu0 0.0
        %4143 = vmatpush1.msra.mxu0 0.0
        %4144 = vmatprep.subr.mxu0 0.0
        %4145 = vmatpush1.msra.mxu0 0.0
        %4146 = vmatprep.mubr.f32.mxu0 0.0
        %4147 = vmatmul.mubr.f32.gmra.mrb[0].mxu0 %v4080
        %v4148 = vpop.f32.mrb[0].mxu0
        %v4149 = vadd.f32 0.0, %v4148
        %v4150 = vpop.f32.mrb[0].mxu0
        %v4151 = vadd.f32 0.0, %v4150
        %4152 = vdwg.mxu0
        %4153 = vmatprep.subr.mxu0 0.0
        %4154 = vmatpush1.msra.mxu0 %v4073
        %4155 = vmatprep.subr.mxu0 0.0
        %4156 = vmatpush1.msra.mxu0 0.0
        %4157 = vmatprep.subr.mxu0 0.0
        %4158 = vmatpush1.msra.mxu0 0.0
        %4159 = vmatprep.subr.mxu0 0.0
        %4160 = vmatpush1.msra.mxu0 0.0
        %4161 = vmatprep.subr.mxu0 0.0
        %4162 = vmatpush1.msra.mxu0 0.0
        %4163 = vmatprep.subr.mxu0 0.0
        %4164 = vmatpush1.msra.mxu0 0.0
        %4165 = vmatprep.subr.mxu0 0.0
        %4166 = vmatpush1.msra.mxu0 0.0
        %4167 = vmatprep.subr.mxu0 0.0
        %4168 = vmatpush1.msra.mxu0 0.0
        %4169 = vmatprep.subr.mxu0 0.0
        %4170 = vmatpush1.msra.mxu0 0.0
        %4171 = vmatprep.subr.mxu0 0.0
        %4172 = vmatpush1.msra.mxu0 0.0
        %4173 = vmatprep.subr.mxu0 0.0
        %4174 = vmatpush1.msra.mxu0 0.0
        %4175 = vmatprep.subr.mxu0 0.0
        %4176 = vmatpush1.msra.mxu0 0.0
        %4177 = vmatprep.subr.mxu0 0.0
        %4178 = vmatpush1.msra.mxu0 0.0
        %4179 = vmatprep.subr.mxu0 0.0
        %4180 = vmatpush1.msra.mxu0 0.0
        %4181 = vmatprep.subr.mxu0 0.0
        %4182 = vmatpush1.msra.mxu0 0.0
        %4183 = vmatprep.subr.mxu0 0.0
        %4184 = vmatpush1.msra.mxu0 0.0
        %4185 = vmatprep.subr.mxu0 0.0
        %4186 = vmatpush1.msra.mxu0 0.0
        %4187 = vmatprep.subr.mxu0 0.0
        %4188 = vmatpush1.msra.mxu0 0.0
        %4189 = vmatprep.subr.mxu0 0.0
        %4190 = vmatpush1.msra.mxu0 0.0
        %4191 = vmatprep.subr.mxu0 0.0
        %4192 = vmatpush1.msra.mxu0 0.0
        %4193 = vmatprep.subr.mxu0 0.0
        %4194 = vmatpush1.msra.mxu0 0.0
        %4195 = vmatprep.subr.mxu0 0.0
        %4196 = vmatpush1.msra.mxu0 0.0
        %4197 = vmatprep.subr.mxu0 0.0
        %4198 = vmatpush1.msra.mxu0 0.0
        %4199 = vmatprep.subr.mxu0 0.0
        %4200 = vmatpush1.msra.mxu0 0.0
        %4201 = vmatprep.subr.mxu0 0.0
        %4202 = vmatpush1.msra.mxu0 0.0
        %4203 = vmatprep.subr.mxu0 0.0
        %4204 = vmatpush1.msra.mxu0 0.0
        %4205 = vmatprep.subr.mxu0 0.0
        %4206 = vmatpush1.msra.mxu0 0.0
        %4207 = vmatprep.subr.mxu0 0.0
        %4208 = vmatpush1.msra.mxu0 0.0
        %4209 = vmatprep.subr.mxu0 0.0
        %4210 = vmatpush1.msra.mxu0 0.0
        %4211 = vmatprep.subr.mxu0 0.0
        %4212 = vmatpush1.msra.mxu0 0.0
        %4213 = vmatprep.subr.mxu0 0.0
        %4214 = vmatpush1.msra.mxu0 0.0
        %4215 = vmatprep.subr.mxu0 0.0
        %4216 = vmatpush1.msra.mxu0 0.0
        %4217 = vmatprep.mubr.f32.mxu0 0.0
        %4218 = vmatmul.mubr.f32.gmra.mrb[0].mxu0 %v4080
        %v4219 = vpop.f32.mrb[0].mxu0
        %v4220 = vadd.f32 0.0, %v4219
        %v4221 = vpop.f32.mrb[0].mxu0
        %4222 = vdwg.mxu0
        %v4223 = vadd.f32 %v4063, %v4149
        %v4224 = vadd.f32 %v4064, %v4151
        %v4225 = vadd.f32 %v4065, %v4220
        %s4226 = scalar_lea.vmem %s5, 48
        %v4227 = vld [vmem:[%s4226] sm:$0xff]
        %4228 = vrot.lane.b32.xlu0 %v3278, 92
        %v4229 = vpop.permute.xlu0 %4228
        %4230 = vrot.lane.b32.xlu0 %v3279, 92
        %v4231 = vpop.permute.xlu0 %4230
        %4232 = vrot.lane.b32.xlu0 %v3280, 92
        %v4233 = vpop.permute.xlu0 %4232
        %v4234 = vsel %vm1267, %v4229, %v4231
        %v4235 = vsel %vm1267, %v4231, %v4233
        %v4240 = vsel %vm326, %v4227, 0
        %4242 = vmatprep.subr.mxu0 %v4235
        %4243 = vmatpush1.msra.mxu0 %v4234
        %4244 = vmatprep.subr.mxu0 0.0
        %4245 = vmatpush1.msra.mxu0 0.0
        %4246 = vmatprep.subr.mxu0 0.0
        %4247 = vmatpush1.msra.mxu0 0.0
        %4248 = vmatprep.subr.mxu0 0.0
        %4249 = vmatpush1.msra.mxu0 0.0
        %4250 = vmatprep.subr.mxu0 0.0
        %4251 = vmatpush1.msra.mxu0 0.0
        %4252 = vmatprep.subr.mxu0 0.0
        %4253 = vmatpush1.msra.mxu0 0.0
        %4254 = vmatprep.subr.mxu0 0.0
        %4255 = vmatpush1.msra.mxu0 0.0
        %4256 = vmatprep.subr.mxu0 0.0
        %4257 = vmatpush1.msra.mxu0 0.0
        %4258 = vmatprep.subr.mxu0 0.0
        %4259 = vmatpush1.msra.mxu0 0.0
        %4260 = vmatprep.subr.mxu0 0.0
        %4261 = vmatpush1.msra.mxu0 0.0
        %4262 = vmatprep.subr.mxu0 0.0
        %4263 = vmatpush1.msra.mxu0 0.0
        %4264 = vmatprep.subr.mxu0 0.0
        %4265 = vmatpush1.msra.mxu0 0.0
        %4266 = vmatprep.subr.mxu0 0.0
        %4267 = vmatpush1.msra.mxu0 0.0
        %4268 = vmatprep.subr.mxu0 0.0
        %4269 = vmatpush1.msra.mxu0 0.0
        %4270 = vmatprep.subr.mxu0 0.0
        %4271 = vmatpush1.msra.mxu0 0.0
        %4272 = vmatprep.subr.mxu0 0.0
        %4273 = vmatpush1.msra.mxu0 0.0
        %4274 = vmatprep.subr.mxu0 0.0
        %4275 = vmatpush1.msra.mxu0 0.0
        %4276 = vmatprep.subr.mxu0 0.0
        %4277 = vmatpush1.msra.mxu0 0.0
        %4278 = vmatprep.subr.mxu0 0.0
        %4279 = vmatpush1.msra.mxu0 0.0
        %4280 = vmatprep.subr.mxu0 0.0
        %4281 = vmatpush1.msra.mxu0 0.0
        %4282 = vmatprep.subr.mxu0 0.0
        %4283 = vmatpush1.msra.mxu0 0.0
        %4284 = vmatprep.subr.mxu0 0.0
        %4285 = vmatpush1.msra.mxu0 0.0
        %4286 = vmatprep.subr.mxu0 0.0
        %4287 = vmatpush1.msra.mxu0 0.0
        %4288 = vmatprep.subr.mxu0 0.0
        %4289 = vmatpush1.msra.mxu0 0.0
        %4290 = vmatprep.subr.mxu0 0.0
        %4291 = vmatpush1.msra.mxu0 0.0
        %4292 = vmatprep.subr.mxu0 0.0
        %4293 = vmatpush1.msra.mxu0 0.0
        %4294 = vmatprep.subr.mxu0 0.0
        %4295 = vmatpush1.msra.mxu0 0.0
        %4296 = vmatprep.subr.mxu0 0.0
        %4297 = vmatpush1.msra.mxu0 0.0
        %4298 = vmatprep.subr.mxu0 0.0
        %4299 = vmatpush1.msra.mxu0 0.0
        %4300 = vmatprep.subr.mxu0 0.0
        %4301 = vmatpush1.msra.mxu0 0.0
        %4302 = vmatprep.subr.mxu0 0.0
        %4303 = vmatpush1.msra.mxu0 0.0
        %4304 = vmatprep.subr.mxu0 0.0
        %4305 = vmatpush1.msra.mxu0 0.0
        %4306 = vmatprep.mubr.f32.mxu0 0.0
        %4307 = vmatmul.mubr.f32.gmra.mrb[0].mxu0 %v4240
        %v4308 = vpop.f32.mrb[0].mxu0
        %v4309 = vadd.f32 0.0, %v4308
        %v4310 = vpop.f32.mrb[0].mxu0
        %v4311 = vadd.f32 0.0, %v4310
        %4312 = vdwg.mxu0
        %4313 = vmatprep.subr.mxu0 0.0
        %4314 = vmatpush1.msra.mxu0 %v4233
        %4315 = vmatprep.subr.mxu0 0.0
        %4316 = vmatpush1.msra.mxu0 0.0
        %4317 = vmatprep.subr.mxu0 0.0
        %4318 = vmatpush1.msra.mxu0 0.0
        %4319 = vmatprep.subr.mxu0 0.0
        %4320 = vmatpush1.msra.mxu0 0.0
        %4321 = vmatprep.subr.mxu0 0.0
        %4322 = vmatpush1.msra.mxu0 0.0
        %4323 = vmatprep.subr.mxu0 0.0
        %4324 = vmatpush1.msra.mxu0 0.0
        %4325 = vmatprep.subr.mxu0 0.0
        %4326 = vmatpush1.msra.mxu0 0.0
        %4327 = vmatprep.subr.mxu0 0.0
        %4328 = vmatpush1.msra.mxu0 0.0
        %4329 = vmatprep.subr.mxu0 0.0
        %4330 = vmatpush1.msra.mxu0 0.0
        %4331 = vmatprep.subr.mxu0 0.0
        %4332 = vmatpush1.msra.mxu0 0.0
        %4333 = vmatprep.subr.mxu0 0.0
        %4334 = vmatpush1.msra.mxu0 0.0
        %4335 = vmatprep.subr.mxu0 0.0
        %4336 = vmatpush1.msra.mxu0 0.0
        %4337 = vmatprep.subr.mxu0 0.0
        %4338 = vmatpush1.msra.mxu0 0.0
        %4339 = vmatprep.subr.mxu0 0.0
        %4340 = vmatpush1.msra.mxu0 0.0
        %4341 = vmatprep.subr.mxu0 0.0
        %4342 = vmatpush1.msra.mxu0 0.0
        %4343 = vmatprep.subr.mxu0 0.0
        %4344 = vmatpush1.msra.mxu0 0.0
        %4345 = vmatprep.subr.mxu0 0.0
        %4346 = vmatpush1.msra.mxu0 0.0
        %4347 = vmatprep.subr.mxu0 0.0
        %4348 = vmatpush1.msra.mxu0 0.0
        %4349 = vmatprep.subr.mxu0 0.0
        %4350 = vmatpush1.msra.mxu0 0.0
        %4351 = vmatprep.subr.mxu0 0.0
        %4352 = vmatpush1.msra.mxu0 0.0
        %4353 = vmatprep.subr.mxu0 0.0
        %4354 = vmatpush1.msra.mxu0 0.0
        %4355 = vmatprep.subr.mxu0 0.0
        %4356 = vmatpush1.msra.mxu0 0.0
        %4357 = vmatprep.subr.mxu0 0.0
        %4358 = vmatpush1.msra.mxu0 0.0
        %4359 = vmatprep.subr.mxu0 0.0
        %4360 = vmatpush1.msra.mxu0 0.0
        %4361 = vmatprep.subr.mxu0 0.0
        %4362 = vmatpush1.msra.mxu0 0.0
        %4363 = vmatprep.subr.mxu0 0.0
        %4364 = vmatpush1.msra.mxu0 0.0
        %4365 = vmatprep.subr.mxu0 0.0
        %4366 = vmatpush1.msra.mxu0 0.0
        %4367 = vmatprep.subr.mxu0 0.0
        %4368 = vmatpush1.msra.mxu0 0.0
        %4369 = vmatprep.subr.mxu0 0.0
        %4370 = vmatpush1.msra.mxu0 0.0
        %4371 = vmatprep.subr.mxu0 0.0
        %4372 = vmatpush1.msra.mxu0 0.0
        %4373 = vmatprep.subr.mxu0 0.0
        %4374 = vmatpush1.msra.mxu0 0.0
        %4375 = vmatprep.subr.mxu0 0.0
        %4376 = vmatpush1.msra.mxu0 0.0
        %4377 = vmatprep.mubr.f32.mxu0 0.0
        %4378 = vmatmul.mubr.f32.gmra.mrb[0].mxu0 %v4240
        %v4379 = vpop.f32.mrb[0].mxu0
        %v4380 = vadd.f32 0.0, %v4379
        %v4381 = vpop.f32.mrb[0].mxu0
        %4382 = vdwg.mxu0
        %v4383 = vadd.f32 %v4223, %v4309
        %v4384 = vadd.f32 %v4224, %v4311
        %v4385 = vadd.f32 %v4225, %v4380
        %s4386 = scalar_lea.vmem %s5, 56
        %v4387 = vld [vmem:[%s4386] sm:$0xff]
        %4388 = vrot.lane.b32.xlu0 %v3278, 91
        %v4389 = vpop.permute.xlu0 %4388
        %4390 = vrot.lane.b32.xlu0 %v3279, 91
        %v4391 = vpop.permute.xlu0 %4390
        %4392 = vrot.lane.b32.xlu0 %v3280, 91
        %v4393 = vpop.permute.xlu0 %4392
        %v4394 = vsel %vm1428, %v4389, %v4391
        %v4395 = vsel %vm1428, %v4391, %v4393
        %v4400 = vsel %vm326, %v4387, 0
        %4402 = vmatprep.subr.mxu0 %v4395
        %4403 = vmatpush1.msra.mxu0 %v4394
        %4404 = vmatprep.subr.mxu0 0.0
        %4405 = vmatpush1.msra.mxu0 0.0
        %4406 = vmatprep.subr.mxu0 0.0
        %4407 = vmatpush1.msra.mxu0 0.0
        %4408 = vmatprep.subr.mxu0 0.0
        %4409 = vmatpush1.msra.mxu0 0.0
        %4410 = vmatprep.subr.mxu0 0.0
        %4411 = vmatpush1.msra.mxu0 0.0
        %4412 = vmatprep.subr.mxu0 0.0
        %4413 = vmatpush1.msra.mxu0 0.0
        %4414 = vmatprep.subr.mxu0 0.0
        %4415 = vmatpush1.msra.mxu0 0.0
        %4416 = vmatprep.subr.mxu0 0.0
        %4417 = vmatpush1.msra.mxu0 0.0
        %4418 = vmatprep.subr.mxu0 0.0
        %4419 = vmatpush1.msra.mxu0 0.0
        %4420 = vmatprep.subr.mxu0 0.0
        %4421 = vmatpush1.msra.mxu0 0.0
        %4422 = vmatprep.subr.mxu0 0.0
        %4423 = vmatpush1.msra.mxu0 0.0
        %4424 = vmatprep.subr.mxu0 0.0
        %4425 = vmatpush1.msra.mxu0 0.0
        %4426 = vmatprep.subr.mxu0 0.0
        %4427 = vmatpush1.msra.mxu0 0.0
        %4428 = vmatprep.subr.mxu0 0.0
        %4429 = vmatpush1.msra.mxu0 0.0
        %4430 = vmatprep.subr.mxu0 0.0
        %4431 = vmatpush1.msra.mxu0 0.0
        %4432 = vmatprep.subr.mxu0 0.0
        %4433 = vmatpush1.msra.mxu0 0.0
        %4434 = vmatprep.subr.mxu0 0.0
        %4435 = vmatpush1.msra.mxu0 0.0
        %4436 = vmatprep.subr.mxu0 0.0
        %4437 = vmatpush1.msra.mxu0 0.0
        %4438 = vmatprep.subr.mxu0 0.0
        %4439 = vmatpush1.msra.mxu0 0.0
        %4440 = vmatprep.subr.mxu0 0.0
        %4441 = vmatpush1.msra.mxu0 0.0
        %4442 = vmatprep.subr.mxu0 0.0
        %4443 = vmatpush1.msra.mxu0 0.0
        %4444 = vmatprep.subr.mxu0 0.0
        %4445 = vmatpush1.msra.mxu0 0.0
        %4446 = vmatprep.subr.mxu0 0.0
        %4447 = vmatpush1.msra.mxu0 0.0
        %4448 = vmatprep.subr.mxu0 0.0
        %4449 = vmatpush1.msra.mxu0 0.0
        %4450 = vmatprep.subr.mxu0 0.0
        %4451 = vmatpush1.msra.mxu0 0.0
        %4452 = vmatprep.subr.mxu0 0.0
        %4453 = vmatpush1.msra.mxu0 0.0
        %4454 = vmatprep.subr.mxu0 0.0
        %4455 = vmatpush1.msra.mxu0 0.0
        %4456 = vmatprep.subr.mxu0 0.0
        %4457 = vmatpush1.msra.mxu0 0.0
        %4458 = vmatprep.subr.mxu0 0.0
        %4459 = vmatpush1.msra.mxu0 0.0
        %4460 = vmatprep.subr.mxu0 0.0
        %4461 = vmatpush1.msra.mxu0 0.0
        %4462 = vmatprep.subr.mxu0 0.0
        %4463 = vmatpush1.msra.mxu0 0.0
        %4464 = vmatprep.subr.mxu0 0.0
        %4465 = vmatpush1.msra.mxu0 0.0
        %4466 = vmatprep.mubr.f32.mxu0 0.0
        %4467 = vmatmul.mubr.f32.gmra.mrb[0].mxu0 %v4400
        %v4468 = vpop.f32.mrb[0].mxu0
        %v4469 = vadd.f32 0.0, %v4468
        %v4470 = vpop.f32.mrb[0].mxu0
        %v4471 = vadd.f32 0.0, %v4470
        %4472 = vdwg.mxu0
        %4473 = vmatprep.subr.mxu0 0.0
        %4474 = vmatpush1.msra.mxu0 %v4393
        %4475 = vmatprep.subr.mxu0 0.0
        %4476 = vmatpush1.msra.mxu0 0.0
        %4477 = vmatprep.subr.mxu0 0.0
        %4478 = vmatpush1.msra.mxu0 0.0
        %4479 = vmatprep.subr.mxu0 0.0
        %4480 = vmatpush1.msra.mxu0 0.0
        %4481 = vmatprep.subr.mxu0 0.0
        %4482 = vmatpush1.msra.mxu0 0.0
        %4483 = vmatprep.subr.mxu0 0.0
        %4484 = vmatpush1.msra.mxu0 0.0
        %4485 = vmatprep.subr.mxu0 0.0
        %4486 = vmatpush1.msra.mxu0 0.0
        %4487 = vmatprep.subr.mxu0 0.0
        %4488 = vmatpush1.msra.mxu0 0.0
        %4489 = vmatprep.subr.mxu0 0.0
        %4490 = vmatpush1.msra.mxu0 0.0
        %4491 = vmatprep.subr.mxu0 0.0
        %4492 = vmatpush1.msra.mxu0 0.0
        %4493 = vmatprep.subr.mxu0 0.0
        %4494 = vmatpush1.msra.mxu0 0.0
        %4495 = vmatprep.subr.mxu0 0.0
        %4496 = vmatpush1.msra.mxu0 0.0
        %4497 = vmatprep.subr.mxu0 0.0
        %4498 = vmatpush1.msra.mxu0 0.0
        %4499 = vmatprep.subr.mxu0 0.0
        %4500 = vmatpush1.msra.mxu0 0.0
        %4501 = vmatprep.subr.mxu0 0.0
        %4502 = vmatpush1.msra.mxu0 0.0
        %4503 = vmatprep.subr.mxu0 0.0
        %4504 = vmatpush1.msra.mxu0 0.0
        %4505 = vmatprep.subr.mxu0 0.0
        %4506 = vmatpush1.msra.mxu0 0.0
        %4507 = vmatprep.subr.mxu0 0.0
        %4508 = vmatpush1.msra.mxu0 0.0
        %4509 = vmatprep.subr.mxu0 0.0
        %4510 = vmatpush1.msra.mxu0 0.0
        %4511 = vmatprep.subr.mxu0 0.0
        %4512 = vmatpush1.msra.mxu0 0.0
        %4513 = vmatprep.subr.mxu0 0.0
        %4514 = vmatpush1.msra.mxu0 0.0
        %4515 = vmatprep.subr.mxu0 0.0
        %4516 = vmatpush1.msra.mxu0 0.0
        %4517 = vmatprep.subr.mxu0 0.0
        %4518 = vmatpush1.msra.mxu0 0.0
        %4519 = vmatprep.subr.mxu0 0.0
        %4520 = vmatpush1.msra.mxu0 0.0
        %4521 = vmatprep.subr.mxu0 0.0
        %4522 = vmatpush1.msra.mxu0 0.0
        %4523 = vmatprep.subr.mxu0 0.0
        %4524 = vmatpush1.msra.mxu0 0.0
        %4525 = vmatprep.subr.mxu0 0.0
        %4526 = vmatpush1.msra.mxu0 0.0
        %4527 = vmatprep.subr.mxu0 0.0
        %4528 = vmatpush1.msra.mxu0 0.0
        %4529 = vmatprep.subr.mxu0 0.0
        %4530 = vmatpush1.msra.mxu0 0.0
        %4531 = vmatprep.subr.mxu0 0.0
        %4532 = vmatpush1.msra.mxu0 0.0
        %4533 = vmatprep.subr.mxu0 0.0
        %4534 = vmatpush1.msra.mxu0 0.0
        %4535 = vmatprep.subr.mxu0 0.0
        %4536 = vmatpush1.msra.mxu0 0.0
        %4537 = vmatprep.mubr.f32.mxu0 0.0
        %4538 = vmatmul.mubr.f32.gmra.mrb[0].mxu0 %v4400
        %v4539 = vpop.f32.mrb[0].mxu0
        %v4540 = vadd.f32 0.0, %v4539
        %v4541 = vpop.f32.mrb[0].mxu0
        %4542 = vdwg.mxu0
        %v4543 = vadd.f32 %v4383, %v4469
        %v4544 = vadd.f32 %v4384, %v4471
        %v4545 = vadd.f32 %v4385, %v4540
        %s4546 = scalar_lea.vmem %s5, 64
        %v4547 = vld [vmem:[%s4546] sm:$0xff]
        %4548 = vrot.lane.b32.xlu0 %v3278, 90
        %v4549 = vpop.permute.xlu0 %4548
        %4550 = vrot.lane.b32.xlu0 %v3279, 90
        %v4551 = vpop.permute.xlu0 %4550
        %4552 = vrot.lane.b32.xlu0 %v3280, 90
        %v4553 = vpop.permute.xlu0 %4552
        %v4554 = vsel %vm1589, %v4549, %v4551
        %v4555 = vsel %vm1589, %v4551, %v4553
        %v4560 = vsel %vm326, %v4547, 0
        %4562 = vmatprep.subr.mxu0 %v4555
        %4563 = vmatpush1.msra.mxu0 %v4554
        %4564 = vmatprep.subr.mxu0 0.0
        %4565 = vmatpush1.msra.mxu0 0.0
        %4566 = vmatprep.subr.mxu0 0.0
        %4567 = vmatpush1.msra.mxu0 0.0
        %4568 = vmatprep.subr.mxu0 0.0
        %4569 = vmatpush1.msra.mxu0 0.0
        %4570 = vmatprep.subr.mxu0 0.0
        %4571 = vmatpush1.msra.mxu0 0.0
        %4572 = vmatprep.subr.mxu0 0.0
        %4573 = vmatpush1.msra.mxu0 0.0
        %4574 = vmatprep.subr.mxu0 0.0
        %4575 = vmatpush1.msra.mxu0 0.0
        %4576 = vmatprep.subr.mxu0 0.0
        %4577 = vmatpush1.msra.mxu0 0.0
        %4578 = vmatprep.subr.mxu0 0.0
        %4579 = vmatpush1.msra.mxu0 0.0
        %4580 = vmatprep.subr.mxu0 0.0
        %4581 = vmatpush1.msra.mxu0 0.0
        %4582 = vmatprep.subr.mxu0 0.0
        %4583 = vmatpush1.msra.mxu0 0.0
        %4584 = vmatprep.subr.mxu0 0.0
        %4585 = vmatpush1.msra.mxu0 0.0
        %4586 = vmatprep.subr.mxu0 0.0
        %4587 = vmatpush1.msra.mxu0 0.0
        %4588 = vmatprep.subr.mxu0 0.0
        %4589 = vmatpush1.msra.mxu0 0.0
        %4590 = vmatprep.subr.mxu0 0.0
        %4591 = vmatpush1.msra.mxu0 0.0
        %4592 = vmatprep.subr.mxu0 0.0
        %4593 = vmatpush1.msra.mxu0 0.0
        %4594 = vmatprep.subr.mxu0 0.0
        %4595 = vmatpush1.msra.mxu0 0.0
        %4596 = vmatprep.subr.mxu0 0.0
        %4597 = vmatpush1.msra.mxu0 0.0
        %4598 = vmatprep.subr.mxu0 0.0
        %4599 = vmatpush1.msra.mxu0 0.0
        %4600 = vmatprep.subr.mxu0 0.0
        %4601 = vmatpush1.msra.mxu0 0.0
        %4602 = vmatprep.subr.mxu0 0.0
        %4603 = vmatpush1.msra.mxu0 0.0
        %4604 = vmatprep.subr.mxu0 0.0
        %4605 = vmatpush1.msra.mxu0 0.0
        %4606 = vmatprep.subr.mxu0 0.0
        %4607 = vmatpush1.msra.mxu0 0.0
        %4608 = vmatprep.subr.mxu0 0.0
        %4609 = vmatpush1.msra.mxu0 0.0
        %4610 = vmatprep.subr.mxu0 0.0
        %4611 = vmatpush1.msra.mxu0 0.0
        %4612 = vmatprep.subr.mxu0 0.0
        %4613 = vmatpush1.msra.mxu0 0.0
        %4614 = vmatprep.subr.mxu0 0.0
        %4615 = vmatpush1.msra.mxu0 0.0
        %4616 = vmatprep.subr.mxu0 0.0
        %4617 = vmatpush1.msra.mxu0 0.0
        %4618 = vmatprep.subr.mxu0 0.0
        %4619 = vmatpush1.msra.mxu0 0.0
        %4620 = vmatprep.subr.mxu0 0.0
        %4621 = vmatpush1.msra.mxu0 0.0
        %4622 = vmatprep.subr.mxu0 0.0
        %4623 = vmatpush1.msra.mxu0 0.0
        %4624 = vmatprep.subr.mxu0 0.0
        %4625 = vmatpush1.msra.mxu0 0.0
        %4626 = vmatprep.mubr.f32.mxu0 0.0
        %4627 = vmatmul.mubr.f32.gmra.mrb[0].mxu0 %v4560
        %v4628 = vpop.f32.mrb[0].mxu0
        %v4629 = vadd.f32 0.0, %v4628
        %v4630 = vpop.f32.mrb[0].mxu0
        %v4631 = vadd.f32 0.0, %v4630
        %4632 = vdwg.mxu0
        %4633 = vmatprep.subr.mxu0 0.0
        %4634 = vmatpush1.msra.mxu0 %v4553
        %4635 = vmatprep.subr.mxu0 0.0
        %4636 = vmatpush1.msra.mxu0 0.0
        %4637 = vmatprep.subr.mxu0 0.0
        %4638 = vmatpush1.msra.mxu0 0.0
        %4639 = vmatprep.subr.mxu0 0.0
        %4640 = vmatpush1.msra.mxu0 0.0
        %4641 = vmatprep.subr.mxu0 0.0
        %4642 = vmatpush1.msra.mxu0 0.0
        %4643 = vmatprep.subr.mxu0 0.0
        %4644 = vmatpush1.msra.mxu0 0.0
        %4645 = vmatprep.subr.mxu0 0.0
        %4646 = vmatpush1.msra.mxu0 0.0
        %4647 = vmatprep.subr.mxu0 0.0
        %4648 = vmatpush1.msra.mxu0 0.0
        %4649 = vmatprep.subr.mxu0 0.0
        %4650 = vmatpush1.msra.mxu0 0.0
        %4651 = vmatprep.subr.mxu0 0.0
        %4652 = vmatpush1.msra.mxu0 0.0
        %4653 = vmatprep.subr.mxu0 0.0
        %4654 = vmatpush1.msra.mxu0 0.0
        %4655 = vmatprep.subr.mxu0 0.0
        %4656 = vmatpush1.msra.mxu0 0.0
        %4657 = vmatprep.subr.mxu0 0.0
        %4658 = vmatpush1.msra.mxu0 0.0
        %4659 = vmatprep.subr.mxu0 0.0
        %4660 = vmatpush1.msra.mxu0 0.0
        %4661 = vmatprep.subr.mxu0 0.0
        %4662 = vmatpush1.msra.mxu0 0.0
        %4663 = vmatprep.subr.mxu0 0.0
        %4664 = vmatpush1.msra.mxu0 0.0
        %4665 = vmatprep.subr.mxu0 0.0
        %4666 = vmatpush1.msra.mxu0 0.0
        %4667 = vmatprep.subr.mxu0 0.0
        %4668 = vmatpush1.msra.mxu0 0.0
        %4669 = vmatprep.subr.mxu0 0.0
        %4670 = vmatpush1.msra.mxu0 0.0
        %4671 = vmatprep.subr.mxu0 0.0
        %4672 = vmatpush1.msra.mxu0 0.0
        %4673 = vmatprep.subr.mxu0 0.0
        %4674 = vmatpush1.msra.mxu0 0.0
        %4675 = vmatprep.subr.mxu0 0.0
        %4676 = vmatpush1.msra.mxu0 0.0
        %4677 = vmatprep.subr.mxu0 0.0
        %4678 = vmatpush1.msra.mxu0 0.0
        %4679 = vmatprep.subr.mxu0 0.0
        %4680 = vmatpush1.msra.mxu0 0.0
        %4681 = vmatprep.subr.mxu0 0.0
        %4682 = vmatpush1.msra.mxu0 0.0
        %4683 = vmatprep.subr.mxu0 0.0
        %4684 = vmatpush1.msra.mxu0 0.0
        %4685 = vmatprep.subr.mxu0 0.0
        %4686 = vmatpush1.msra.mxu0 0.0
        %4687 = vmatprep.subr.mxu0 0.0
        %4688 = vmatpush1.msra.mxu0 0.0
        %4689 = vmatprep.subr.mxu0 0.0
        %4690 = vmatpush1.msra.mxu0 0.0
        %4691 = vmatprep.subr.mxu0 0.0
        %4692 = vmatpush1.msra.mxu0 0.0
        %4693 = vmatprep.subr.mxu0 0.0
        %4694 = vmatpush1.msra.mxu0 0.0
        %4695 = vmatprep.subr.mxu0 0.0
        %4696 = vmatpush1.msra.mxu0 0.0
        %4697 = vmatprep.mubr.f32.mxu0 0.0
        %4698 = vmatmul.mubr.f32.gmra.mrb[0].mxu0 %v4560
        %v4699 = vpop.f32.mrb[0].mxu0
        %v4700 = vadd.f32 0.0, %v4699
        %v4701 = vpop.f32.mrb[0].mxu0
        %4702 = vdwg.mxu0
        %v4703 = vadd.f32 %v4543, %v4629
        %v4704 = vadd.f32 %v4544, %v4631
        %v4705 = vadd.f32 %v4545, %v4700
        %v4706 = vld [vmem:[%s6] sm:$0xff]
        %4708 = vset.pattern.permute.xlu0 0
        %4709 = vperm.xlu0 %4708, %v4706
        %v4710 = vpop.permute.xlu0 %4709
        %v4712 = vadd.f32 %v4703, %v4710
        %v4713 = vadd.f32 %v4704, %v4710
        %v4714 = vadd.f32 %v4705, %v4710
        %v4715 = vld [vmem:[%s303] sm:$0xff]
        %v4716 = vld [vmem:[%s303 + $0x8] sm:$0xff]
        %v4717 = vld [vmem:[%s303 + $0x10] sm:$0xff]
        %4721 = vrot.lane.b32.xlu0 %v4715, 109
        %v4722 = vpop.permute.xlu0 %4721
        %4723 = vrot.lane.b32.xlu0 %v4716, 109
        %v4724 = vpop.permute.xlu0 %4723
        %4725 = vrot.lane.b32.xlu0 %v4717, 109
        %v4726 = vpop.permute.xlu0 %4725
        %v4727 = vsel %vm945, %v4722, %v4724
        %v4728 = vsel %vm945, %v4724, %v4726
        %v4732 = vadd.f32 %v4712, %v4727
        %v4733 = vadd.f32 %v4713, %v4728
        %v4734 = vadd.f32 %v4714, %v4726
        %v4735 = vmul.f32 %v4732, %v1782
        %v4736 = vmul.f32 %v4733, %v1786
        %v4737 = vmul.f32 %v4734, %v1790
        %4738 = vst [vmem:[%s298] sm:$0xff] %v4735
        %4739 = vst [vmem:[%s298 + $0x8] sm:$0xff] %v4736
        %vm4740 = vcmask 556032
        %4741 = vst.msk [vmem:[%s298 + $0x10] sm:$0xff] %vm4740, %v4737
        %s4742 = sand.u32 %s203, 1
        %s4743 = scalar_lea.sflag [#allocation4], %s4742
        %s4744 = sand.u32 %s203, 1
        %s4745 = smul.addr %s4744, 24
        %s4746 = scalar_lea.vmem [#allocation3], %s4745
        // Predicated region
        $region53: #{tpu_custom_call.1} parent=51 // pred_check
          %p4747 = pneg %p213
        $region54: #{tpu_custom_call.1} parent=51 // pred_check_branch
          %4749 = sbr.rel (%p4747) target = $region56
        $region55: #{tpu_custom_call.1} parent=51 // pred_region
          %s4751 = ssub.s32 384, 384
          %4752 = vsyncadd %s4743, %s4751
          %s4753 = smul.addr %s22, 3
          %s4754 = smul.addr %s4753, 128
          %s4755 = scalar_lea.hbm %s8, %s4754
          %s4757 = sshll.u32 %s4746, 4
          %s4758 = int_to_ptr.vmem [resolvable:$true] %s4757
          %4760 = dma.vmem_to_hbm [thread:$0]  %s4758, 384, %s4755, %s4743
        $region56: #{tpu_custom_call.1} parent=51 // pred_fallthru
          _
      $region52: #{tpu_custom_call.1} parent=5 // pred_fallthru
        _
      %p4761 = scmp.le.s32.totalorder 2, %s17
      // Predicated region
      $region57: #{tpu_custom_call.1} parent=5 // pred_check
        %p4762 = pneg %p4761
      $region58: #{tpu_custom_call.1} parent=5 // pred_check_branch
        %4764 = sbr.rel (%p4762) target = $region60
      $region59: #{tpu_custom_call.1} parent=5 // pred_region
        %s4765 = ssub.s32 %s17, 2
        // Predicated region
        $region61: #{tpu_custom_call.1} parent=59 // pred_check
          %p4766 = pneg %p219
        $region62: #{tpu_custom_call.1} parent=59 // pred_check_branch
          %4768 = sbr.rel (%p4766) target = $region64
        $region63: #{tpu_custom_call.1} parent=59 // pred_region
          %s4769 = sand.u32 %s204, 1
          %s4770 = scalar_lea.sflag [#allocation4], %s4769
          %s4771 = sand.u32 %s204, 1
          %s4772 = smul.addr %s4771, 24
          %s4773 = scalar_lea.vmem [#allocation3], %s4772
          %4774 = dma.done %s4770, 384
        $region64: #{tpu_custom_call.1} parent=59 // pred_fallthru
          _
      $region60: #{tpu_custom_call.1} parent=5 // pred_fallthru
        _
    $region6: #{tpu_custom_call.1} parent=1 // loop_footer
      %s21 = sadd.s32 1, %s17
    $region7: #{tpu_custom_call.1} parent=1 // loop_footer_branch
      %16 = sbr.rel target = $region3
    $region8: #{tpu_custom_call.1} parent=1 // loop_exit
      _
    %4775 = vsyncpa [#allocation4], 1
    %s4776 = scalar_lea.sflag [#allocation4], 1
    %4777 = vsyncpa %s4776, 1

</llo_original>
